<compile_context>
chip_gen: v7x
topology: tpu7x:2x2x1
jax: 0.10.0
libtpu: 0.0.40
codegen_flags: <defaults>
</compile_context>

<pallas_src>
import math

import numpy as np
import jax
import jax.numpy as jnp
from jax import lax
from jax.experimental import pallas as pl
from jax.experimental.pallas import tpu as pltpu

# ----------------------------- dimensions -----------------------------------
B = 2                 # batch
IMG = 32              # input image H = W
PATCH = 8             # patch size of the (tiny) ViT image encoder
GRID = IMG // PATCH   # 4  -> image-embedding spatial size
C = 32                # embedding dim (SAM's 256, scaled down)
HEADS = 2
HD = C // HEADS       # 16
PATCH_DIM = 3 * PATCH * PATCH     # 192
NUM_TOKENS = GRID * GRID          # 16 image tokens
NUM_MASK_TOKENS = 4               # 3 multimask + 1 single-mask token
NUM_PROMPT_TOKENS = 1 + NUM_MASK_TOKENS + 2   # iou + mask tokens + 2 corners
UP1 = C // 4                      # 8  channels after first upscale
UP2 = C // 8                      # 4  channels after second upscale
LOW_RES = 4 * GRID                # 16 -> low_res_masks are (B, 1, 16, 16)
MASK_PIX = LOW_RES * LOW_RES      # 256
ATTN_SCALE = 1.0 / math.sqrt(HD)
OUT_ROWS = NUM_MASK_TOKENS + 1    # 4 mask rows + 1 iou row

G1 = GRID                         # first upscale input grid (4x4 -> 8x8)
G2 = 2 * GRID                     # second upscale input grid (8x8 -> 16x16)
S1_ROWS_PER_TAP = G1 * G1         # 16
S1_COLS = (2 * G1) * (2 * G1)     # 64
S2_ROWS_PER_TAP = G2 * G2         # 64
S2_COLS = (2 * G2) * (2 * G2)     # 256

W_LANES = 256   # bf16 matrix slab lane width (s2T / padded iou head need 256)
V_LANES = 128   # f32 vector/bias slab lane width


# --------------------------- static slab layouts ------------------------------
def _layout(entries, lanes, align=8):
    """entries: [(name, rows, cols)] -> ({name: (row_off, rows, cols)}, total_rows)."""
    off, r = {}, 0
    for name, rows, cols in entries:
        assert cols <= lanes, (name, cols, lanes)
        off[name] = (r, rows, cols)
        r += ((rows + align - 1) // align) * align
    return off, r


W_ENTRIES = [
    # image encoder
    ("patch_w", PATCH_DIM, C), ("qkv_w", C, 3 * C), ("proj_w", C, C),
    ("fc1_w", C, 4 * C), ("fc2_w", 4 * C, C), ("neck_w", C, C),
    # decoder attention (q/k/v packed wide)
    ("sa_qkvw", C, 3 * C), ("sa_ow", C, C),
    ("c1_qkvw", C, 3 * C), ("c1_ow", C, C),
    ("c2_qkvw", C, 3 * C), ("c2_ow", C, C),
    ("cf_qkvw", C, 3 * C), ("cf_ow", C, C),
    # decoder MLP
    ("dmlp_w1", C, 2 * C), ("dmlp_w2", 2 * C, C),
    # transposed ConvTranspose2d weights (tap-major rows) + transposed scatters
    ("up1_wkT", 4 * UP1, C), ("up2_wkT", 4 * UP2, UP1),
    ("s1T", 4 * S1_ROWS_PER_TAP, S1_COLS),
    ("s2T", 4 * S2_ROWS_PER_TAP, S2_COLS),
    # hypernetwork + IoU head (iou_w2/b2 zero-padded to 256 lanes for a
    # lane-dense output row)
    ("hyp_w1", C, C), ("hyp_w2", C, C), ("hyp_w3", C, UP2),
    ("iou_w1", C, C), ("iou_w2p", C, S2_COLS), ("iou_b2p", 1, S2_COLS),
]

V_ENTRIES = [
    ("pos_embed", NUM_TOKENS, C), ("dense_pe", NUM_TOKENS, C),
    ("patch_b", 1, C), ("ln1_g", 1, C), ("ln1_b", 1, C),
    ("qkv_b", 1, 3 * C), ("proj_b", 1, C),
    ("ln2_g", 1, C), ("ln2_b", 1, C),
    ("fc1_b", 1, 4 * C), ("fc2_b", 1, C), ("neck_b", 1, C),
    ("no_mask", 1, C),
    ("sa_qkvb", 1, 3 * C), ("sa_ob", 1, C),
    ("c1_qkvb", 1, 3 * C), ("c1_ob", 1, C),
    ("c2_qkvb", 1, 3 * C), ("c2_ob", 1, C),
    ("cf_qkvb", 1, 3 * C), ("cf_ob", 1, C),
    ("dmlp_b1", 1, 2 * C), ("dmlp_b2", 1, C),
    ("dn_g", 5, C), ("dn_b", 5, C),
    ("up1_bT", UP1, 1), ("up2_bT", UP2, 1),
    ("hyp_b1", 1, C), ("hyp_b2", 1, C), ("hyp_b3", 1, UP2),
    ("iou_b1", 1, C),
]

W_OFF, W_ROWS = _layout(W_ENTRIES, W_LANES)
V_OFF, V_ROWS = _layout(V_ENTRIES, V_LANES)


# ----------------------------- fused kernel ----------------------------------
def _sam_fused_kernel(xp_ref, tok_ref, w_ref, v_ref, out_ref):
    f32 = jnp.float32
    bf16 = jnp.bfloat16

    def W(name):                       # bf16 matrix piece (logical shape)
        o, r, c = W_OFF[name]
        return w_ref[pl.ds(o, r), pl.ds(0, c)]

    def V(name):                       # f32 vector/bias piece (logical shape)
        o, r, c = V_OFF[name]
        return v_ref[pl.ds(o, r), pl.ds(0, c)]

    def mm(a, b):                      # bf16 operands, f32 accumulation
        return jnp.dot(a.astype(bf16), b.astype(bf16),
                       preferred_element_type=f32)

    def mm_t(a, b):                    # a @ b.T without materializing transpose
        return lax.dot_general(a.astype(bf16), b.astype(bf16),
                               (((1,), (1,)), ((), ())),
                               preferred_element_type=f32)

    def layer_norm(x, g, b):
        mu = jnp.mean(x, axis=-1, keepdims=True)
        var = jnp.mean(jnp.square(x - mu), axis=-1, keepdims=True)
        return (x - mu) * lax.rsqrt(var + 1e-5) * g + b

    def gelu(x):
        # TODO(synk): PyTorch nn.GELU() defaults to the exact erf form; the
        # tanh approximation is used here for robust Mosaic lowering.
        return jax.nn.gelu(x, approximate=True)

    def mha_proj(q, k, v, ow, ob):
        # multi-head attention fused with the output projection: per-head
        # contributions o_h @ ow[h*HD:(h+1)*HD] sum to merge_heads + proj.
        acc = None
        for h in range(HEADS):
            sl = slice(h * HD, (h + 1) * HD)
            s = mm_t(q[:, sl], k[:, sl]) * ATTN_SCALE
            s = s - jnp.max(s, axis=-1, keepdims=True)
            p = jnp.exp(s)
            p = p / jnp.sum(p, axis=-1, keepdims=True)     # exact softmax denom
            o = mm(p, v[:, sl])
            contrib = mm(o, ow[sl, :])
            acc = contrib if acc is None else acc + contrib
        return acc + ob

    def attn(mod, q_in, k_in, v_in):
        w = W(mod + "_qkvw")
        b = V(mod + "_qkvb")
        if q_in is k_in and k_in is v_in:        # self-attn: one wide matmul
            qkv = mm(q_in, w) + b
            q, k, v = qkv[:, :C], qkv[:, C:2 * C], qkv[:, 2 * C:]
        else:                                    # cross-attn: sliced weights
            q = mm(q_in, w[:, :C]) + b[:, :C]
            k = mm(k_in, w[:, C:2 * C]) + b[:, C:2 * C]
            v = mm(v_in, w[:, 2 * C:]) + b[:, 2 * C:]
        return mha_proj(q, k, v, W(mod + "_ow"), V(mod + "_ob"))

    def dnorm(x, i):
        go, _, gc = V_OFF["dn_g"]
        bo, _, _ = V_OFF["dn_b"]
        g = v_ref[pl.ds(go + i, 1), pl.ds(0, gc)]
        b = v_ref[pl.ds(bo + i, 1), pl.ds(0, gc)]
        return layer_norm(x, g, b)

    # ---------------- image encoder (tiny ViT) ----------------
    x = mm(xp_ref[...], W("patch_w")) + V("patch_b") + V("pos_embed")   # (16, C)
    h = layer_norm(x, V("ln1_g"), V("ln1_b"))
    qkv = mm(h, W("qkv_w")) + V("qkv_b")
    x = x + mha_proj(qkv[:, :C], qkv[:, C:2 * C], qkv[:, 2 * C:],
                     W("proj_w"), V("proj_b"))
    h = layer_norm(x, V("ln2_g"), V("ln2_b"))
    h = gelu(mm(h, W("fc1_w")) + V("fc1_b"))
    x = x + mm(h, W("fc2_w")) + V("fc2_b")
    feat = mm(x, W("neck_w")) + V("neck_b")                             # (16, C)

    # ---------------- mask decoder: two-way transformer ----------------
    src = feat + V("no_mask")        # dense "no mask" prompt embedding
    pos = V("dense_pe")              # (16, C) dense positional encoding
    tok0 = tok_ref[...]              # (7, C): [iou, 4 mask tokens, 2 corners]

    q = tok0
    q = dnorm(q + attn("sa", q, q, q), 0)                     # skip_first_layer_pe
    q = dnorm(q + attn("c1", q + tok0, src + pos, src), 1)    # token -> image
    hmlp = jnp.maximum(mm(q, W("dmlp_w1")) + V("dmlp_b1"), 0.0)
    q = dnorm(q + mm(hmlp, W("dmlp_w2")) + V("dmlp_b2"), 2)
    src = dnorm(src + attn("c2", src + pos, q + tok0, q), 3)  # image -> token
    q = dnorm(q + attn("cf", q + tok0, src + pos, src), 4)    # final token -> image

    iou_tok = q[0:1, :]                        # (1, C)
    mask_toks = q[1:1 + NUM_MASK_TOKENS, :]    # (4, C)

    # ---------------- upscale (channel-major: spatial on the lane axis) -------
    # ConvTranspose2d(k=2,s=2) per tap: (W_k^T x^T) then a cheap (cout, g^2) @
    # S_k^T (g^2, (2g)^2) scatter matmul places the tap's pixels.
    s1o, _, s1c = W_OFF["s1T"]
    s2o, _, s2c = W_OFF["s2T"]

    y1 = mm_t(W("up1_wkT"), src)                               # (4*UP1, 16)
    acc = None
    for k in range(4):
        sk = w_ref[pl.ds(s1o + k * S1_ROWS_PER_TAP, S1_ROWS_PER_TAP), pl.ds(0, s1c)]
        z = mm(y1[k * UP1:(k + 1) * UP1, :], sk)
        acc = z if acc is None else acc + z
    u1 = gelu(acc + V("up1_bT"))                               # (UP1, 64)

    y2 = mm(W("up2_wkT"), u1)                                  # (4*UP2, 64)
    acc = None
    for k in range(4):
        sk = w_ref[pl.ds(s2o + k * S2_ROWS_PER_TAP, S2_ROWS_PER_TAP), pl.ds(0, s2c)]
        z = mm(y2[k * UP2:(k + 1) * UP2, :], sk)
        acc = z if acc is None else acc + z
    u2 = gelu(acc + V("up2_bT"))                               # (UP2, 256)

    # ---------------- hypernetwork mask head + IoU head ----------------
    # TODO(synk): real SAM has one hypernetwork MLP per mask token; a shared
    # deterministic MLP is used here (same stand-in as the reference).
    hyp = jnp.maximum(mm(mask_toks, W("hyp_w1")) + V("hyp_b1"), 0.0)
    hyp = jnp.maximum(mm(hyp, W("hyp_w2")) + V("hyp_b2"), 0.0)
    hyp = mm(hyp, W("hyp_w3")) + V("hyp_b3")                   # (4, UP2)
    masks = mm(hyp, u2)                                        # (4, 256) lane-dense

    iou_h = jnp.maximum(mm(iou_tok, W("iou_w1")) + V("iou_b1"), 0.0)
    iou_row = mm(iou_h, W("iou_w2p")) + W("iou_b2p").astype(f32)   # (1, 256)

    out_ref[pl.ds(0, NUM_MASK_TOKENS), :] = masks
    out_ref[pl.ds(NUM_MASK_TOKENS, 1), :] = iou_row


def _sam_pallas(xp, tokens, wslab, vslab):
    bs = xp.shape[0]
    return pl.pallas_call(
        _sam_fused_kernel,
        grid=(bs,),
        in_specs=[
            pl.BlockSpec((None, NUM_TOKENS, PATCH_DIM), lambda i: (i, 0, 0)),
            pl.BlockSpec((None, NUM_PROMPT_TOKENS, C), lambda i: (i, 0, 0)),
            pl.BlockSpec((W_ROWS, W_LANES), lambda i: (0, 0)),   # bf16 weight slab
            pl.BlockSpec((V_ROWS, V_LANES), lambda i: (0, 0)),   # f32 bias slab
        ],
        out_specs=pl.BlockSpec((None, OUT_ROWS, MASK_PIX), lambda i: (i, 0, 0)),
        out_shape=jax.ShapeDtypeStruct((bs, OUT_ROWS, MASK_PIX), jnp.float32),
        compiler_params=pltpu.CompilerParams(
            dimension_semantics=("parallel",)),
    )(xp, tokens, wslab, vslab)


# ------------------------------ wrapper glue ----------------------------------
def _pe_encoding(coords01, gauss):
    """Random-Fourier positional encoding of coords in [0,1]; (...,2) -> (...,C)."""
    c = 2.0 * coords01 - 1.0
    c = c @ gauss
    c = 2.0 * jnp.pi * c
    return jnp.concatenate([jnp.sin(c), jnp.cos(c)], axis=-1)


def _dense_pe(gauss):
    ys = (jnp.arange(GRID, dtype=jnp.float32) + 0.5) / GRID
    xs = (jnp.arange(GRID, dtype=jnp.float32) + 0.5) / GRID
    gy, gx = jnp.meshgrid(ys, xs, indexing="ij")
    coords = jnp.stack([gx, gy], axis=-1)                      # x first
    return _pe_encoding(coords, gauss).reshape(NUM_TOKENS, C)  # (16, C)


def _scatter_T(g):
    """Transposed 0/1 scatter: rows = tap-major input pixels, cols = output pixels."""
    s = np.zeros((4, g * g, (2 * g) * (2 * g)), np.float32)
    for gy in range(g):
        for gx in range(g):
            pidx = gy * g + gx
            for dy in range(2):
                for dx in range(2):
                    k = dy * 2 + dx
                    o = (2 * gy + dy) * (2 * g) + (2 * gx + dx)
                    s[k, pidx, o] = 1.0
    return s.reshape(4 * g * g, (2 * g) * (2 * g))


def _fill_slab(entries, off, rows, lanes, vals):
    slab = np.zeros((rows, lanes), np.float32)
    for name, r, c in entries:
        o, rr, cc = off[name]
        slab[o:o + rr, :cc] = np.asarray(vals[name], np.float32).reshape(rr, cc)
    return slab


def pack_params(p):
    """One-time packing of all parameters into two VMEM slabs plus wrapper arrays."""
    f = lambda a: np.asarray(a, np.float32)

    wvals = {
        "patch_w": f(p["patch_w"]), "qkv_w": f(p["qkv_w"]), "proj_w": f(p["proj_w"]),
        "fc1_w": f(p["fc1_w"]), "fc2_w": f(p["fc2_w"]), "neck_w": f(p["neck_w"]),
        "dmlp_w1": f(p["dmlp_w1"]), "dmlp_w2": f(p["dmlp_w2"]),
        "hyp_w1": f(p["hyp_w1"]), "hyp_w2": f(p["hyp_w2"]), "hyp_w3": f(p["hyp_w3"]),
        "iou_w1": f(p["iou_w1"]),
    }
    for m in ("sa", "c1", "c2", "cf"):
        wvals[f"{m}_qkvw"] = np.concatenate(
            [f(p[f"{m}_qw"]), f(p[f"{m}_kw"]), f(p[f"{m}_vw"])], axis=1)
        wvals[f"{m}_ow"] = f(p[f"{m}_ow"])
    # ConvTranspose2d weights re-packed tap-major rows: row k*cout + cout, col cin.
    wvals["up1_wkT"] = f(p["up1_w"]).reshape(C, UP1, 4).transpose(2, 1, 0).reshape(4 * UP1, C)
    wvals["up2_wkT"] = f(p["up2_w"]).reshape(UP1, UP2, 4).transpose(2, 1, 0).reshape(4 * UP2, UP1)
    wvals["s1T"] = _scatter_T(G1)
    wvals["s2T"] = _scatter_T(G2)
    iou_w2p = np.zeros((C, S2_COLS), np.float32)
    iou_w2p[:, :NUM_MASK_TOKENS] = f(p["iou_w2"])
    iou_b2p = np.zeros((1, S2_COLS), np.float32)
    iou_b2p[0, :NUM_MASK_TOKENS] = f(p["iou_b2"])
    wvals["iou_w2p"] = iou_w2p
    wvals["iou_b2p"] = iou_b2p

    vvals = {
        "pos_embed": f(p["pos_embed"][0]),
        "dense_pe": np.asarray(_dense_pe(jnp.asarray(p["pe_gauss"], jnp.float32))),
        "patch_b": f(p["patch_b"]), "ln1_g": f(p["ln1_g"]), "ln1_b": f(p["ln1_b"]),
        "qkv_b": f(p["qkv_b"]), "proj_b": f(p["proj_b"]),
        "ln2_g": f(p["ln2_g"]), "ln2_b": f(p["ln2_b"]),
        "fc1_b": f(p["fc1_b"]), "fc2_b": f(p["fc2_b"]), "neck_b": f(p["neck_b"]),
        "no_mask": f(p["no_mask_emb"]),
        "dmlp_b1": f(p["dmlp_b1"]), "dmlp_b2": f(p["dmlp_b2"]),
        "dn_g": np.stack([f(p[f"{n}_g"]) for n in ("dn1", "dn2", "dn3", "dn4", "dnf")]),
        "dn_b": np.stack([f(p[f"{n}_b"]) for n in ("dn1", "dn2", "dn3", "dn4", "dnf")]),
        "up1_bT": f(p["up1_b"]).reshape(UP1, 1),
        "up2_bT": f(p["up2_b"]).reshape(UP2, 1),
        "hyp_b1": f(p["hyp_b1"]), "hyp_b2": f(p["hyp_b2"]), "hyp_b3": f(p["hyp_b3"]),
        "iou_b1": f(p["iou_b1"]),
    }
    for m in ("sa", "c1", "c2", "cf"):
        vvals[f"{m}_qkvb"] = np.concatenate(
            [f(p[f"{m}_qb"]), f(p[f"{m}_kb"]), f(p[f"{m}_vb"])], axis=0).reshape(1, 3 * C)
        vvals[f"{m}_ob"] = f(p[f"{m}_ob"]).reshape(1, C)

    wslab = _fill_slab(W_ENTRIES, W_OFF, W_ROWS, W_LANES, wvals)
    vslab = _fill_slab(V_ENTRIES, V_OFF, V_ROWS, V_LANES, vvals)

    return {
        "wslab": jnp.asarray(wslab, jnp.bfloat16),   # bf16 matmul operands
        "vslab": jnp.asarray(vslab, jnp.float32),    # f32 biases / LN params / PE
        "pe_gauss": jnp.asarray(p["pe_gauss"], jnp.float32),
        "point_emb": jnp.asarray(p["point_emb"], jnp.float32),
        "out_tokens": jnp.concatenate(
            [jnp.asarray(p["iou_token"], jnp.float32),
             jnp.asarray(p["mask_tokens"], jnp.float32)], axis=0),
    }


def sam_with_bbox_forward(pk, image, bbox):
    bs = image.shape[0]
    # patchify (B, 3, 32, 32) -> (B, 16, 192); token order = (gy, gx) row-major
    xp = image.reshape(bs, 3, GRID, PATCH, GRID, PATCH)
    xp = xp.transpose(0, 2, 4, 1, 3, 5).reshape(bs, NUM_TOKENS, PATCH_DIM)
    # prompt encoder (boxes only, points=None, masks=None)
    coords = (bbox.reshape(bs, 2, 2) + 0.5) / jnp.float32(IMG)
    corner = _pe_encoding(coords, pk["pe_gauss"])                 # (B, 2, C)
    corner = corner + jnp.stack([pk["point_emb"][2], pk["point_emb"][3]])[None]
    tokens = jnp.concatenate(
        [jnp.broadcast_to(pk["out_tokens"][None], (bs, 1 + NUM_MASK_TOKENS, C)),
         corner], axis=1)                                         # (B, 7, C)
    out = _sam_pallas(xp, tokens, pk["wslab"], pk["vslab"])       # (B, 5, 256)
    # multimask_output=False -> mask slice [0:1]; row 4 holds iou_predictions.
    return out[:, 0:1, :].reshape(bs, 1, LOW_RES, LOW_RES)


# ------------------------------ parameters -----------------------------------
def init_params(key):
    keys = iter(jax.random.split(key, 128))

    def nrm(shape, scale=0.05):
        return jax.random.normal(next(keys), shape, jnp.float32) * scale

    p = {}
    # image encoder
    p["patch_w"] = nrm((PATCH_DIM, C)); p["patch_b"] = jnp.zeros((C,), jnp.float32)
    p["pos_embed"] = nrm((1, NUM_TOKENS, C))
    p["ln1_g"] = jnp.ones((C,), jnp.float32); p["ln1_b"] = jnp.zeros((C,), jnp.float32)
    p["qkv_w"] = nrm((C, 3 * C)); p["qkv_b"] = jnp.zeros((3 * C,), jnp.float32)
    p["proj_w"] = nrm((C, C)); p["proj_b"] = jnp.zeros((C,), jnp.float32)
    p["ln2_g"] = jnp.ones((C,), jnp.float32); p["ln2_b"] = jnp.zeros((C,), jnp.float32)
    p["fc1_w"] = nrm((C, 4 * C)); p["fc1_b"] = jnp.zeros((4 * C,), jnp.float32)
    p["fc2_w"] = nrm((4 * C, C)); p["fc2_b"] = jnp.zeros((C,), jnp.float32)
    p["neck_w"] = nrm((C, C)); p["neck_b"] = jnp.zeros((C,), jnp.float32)
    # prompt encoder
    p["pe_gauss"] = nrm((2, C // 2), scale=1.0)
    p["point_emb"] = nrm((4, C))
    p["no_mask_emb"] = nrm((1, C))
    # mask decoder tokens
    p["iou_token"] = nrm((1, C))
    p["mask_tokens"] = nrm((NUM_MASK_TOKENS, C))
    # decoder attention modules
    for name in ("sa", "c1", "c2", "cf"):
        for proj in ("q", "k", "v", "o"):
            p[f"{name}_{proj}w"] = nrm((C, C))
            p[f"{name}_{proj}b"] = jnp.zeros((C,), jnp.float32)
    for name in ("dn1", "dn2", "dn3", "dn4", "dnf"):
        p[f"{name}_g"] = jnp.ones((C,), jnp.float32)
        p[f"{name}_b"] = jnp.zeros((C,), jnp.float32)
    p["dmlp_w1"] = nrm((C, 2 * C)); p["dmlp_b1"] = jnp.zeros((2 * C,), jnp.float32)
    p["dmlp_w2"] = nrm((2 * C, C)); p["dmlp_b2"] = jnp.zeros((C,), jnp.float32)
    # output upscaling (ConvTranspose2d k=2 s=2 weights flattened to matmuls)
    p["up1_w"] = nrm((C, UP1 * 4)); p["up1_b"] = jnp.zeros((UP1,), jnp.float32)
    p["up2_w"] = nrm((UP1, UP2 * 4)); p["up2_b"] = jnp.zeros((UP2,), jnp.float32)
    # hypernetwork MLP + IoU head
    p["hyp_w1"] = nrm((C, C)); p["hyp_b1"] = jnp.zeros((C,), jnp.float32)
    p["hyp_w2"] = nrm((C, C)); p["hyp_b2"] = jnp.zeros((C,), jnp.float32)
    p["hyp_w3"] = nrm((C, UP2)); p["hyp_b3"] = jnp.zeros((UP2,), jnp.float32)
    p["iou_w1"] = nrm((C, C)); p["iou_b1"] = jnp.zeros((C,), jnp.float32)
    p["iou_w2"] = nrm((C, NUM_MASK_TOKENS))
    p["iou_b2"] = jnp.zeros((NUM_MASK_TOKENS,), jnp.float32)
    return p


# --------------------------------- main ---------------------------------------
if __name__ == "__main__":
    key = jax.random.PRNGKey(0)
    k_img, k_par = jax.random.split(key)
    image = jax.random.normal(k_img, (B, 3, IMG, IMG), jnp.float32)
    bbox = jnp.array([[4.0, 4.0, 20.0, 24.0],
                      [2.0, 6.0, 28.0, 30.0]], jnp.float32)       # (B, 4)
    params = pack_params(init_params(k_par))

    fwd = jax.jit(sam_with_bbox_forward)
    low_res_masks = fwd(params, image, bbox)
    jax.block_until_ready(low_res_masks)

    assert low_res_masks.shape == (B, 1, LOW_RES, LOW_RES), low_res_masks.shape
    assert bool(jnp.all(jnp.isfinite(low_res_masks)))
    print("KERNEL_OK")
</pallas_src>

<mosaic_0001>
module attributes {stable_mosaic.version = 11 : i64} {
  func.func @_sam_fused_kernel(%arg0: i32, %arg1: memref<1x16x192xf32, #tpu.memory_space<vmem>>, %arg2: memref<1x7x32xf32, #tpu.memory_space<vmem>>, %arg3: memref<1336x256xbf16, #tpu.memory_space<vmem>>, %arg4: memref<264x128xf32, #tpu.memory_space<vmem>>, %arg5: memref<1x5x256xf32, #tpu.memory_space<vmem>>) attributes {dimension_semantics = [#tpu.dimension_semantics<parallel>], iteration_bounds = array<i64: 2>, scalar_prefetch = 0 : i64, scratch_operands = 0 : i64, tpu.core_type = #tpu.core_type<tc>, window_params = [{transform_indices = @transform_0, window_bounds = array<i64: 1, 16, 192>}, {transform_indices = @transform_1, window_bounds = array<i64: 1, 7, 32>}, {pipeline_mode = #tpu.pipeline_mode<synchronous>, transform_indices = @transform_2, window_bounds = array<i64: 1336, 256>}, {pipeline_mode = #tpu.pipeline_mode<synchronous>, transform_indices = @transform_3, window_bounds = array<i64: 264, 128>}, {transform_indices = @transform_4, window_bounds = array<i64: 1, 5, 256>}]} {
    %c0 = arith.constant 0 : index
    %c0_0 = arith.constant 0 : index
    %c0_1 = arith.constant 0 : index
    %0 = vector.load %arg1[%c0, %c0_0, %c0_1] : memref<1x16x192xf32, #tpu.memory_space<vmem>>, vector<1x16x192xf32>
    %1 = vector.shape_cast %0 : vector<1x16x192xf32> to vector<16x192xf32>
    %c0_2 = arith.constant 0 : index
    %c0_3 = arith.constant 0 : index
    %2 = vector.load %arg3[%c0_2, %c0_3] : memref<1336x256xbf16, #tpu.memory_space<vmem>>, vector<192x32xbf16>
    %3 = arith.truncf %1 : vector<16x192xf32> to vector<16x192xbf16>
    %cst = arith.constant dense<0.000000e+00> : vector<16x32xf32>
    %4 = tpu.matmul %3, %2, %cst {dimension_numbers = #tpu.dot_dimension_numbers<[1], [0], [0], [1], [0, 0, 1, 1], [], []>} : vector<16x192xbf16>, vector<192x32xbf16>, vector<16x32xf32> -> vector<16x32xf32>
    %c32 = arith.constant 32 : index
    %c0_4 = arith.constant 0 : index
    %5 = vector.load %arg4[%c32, %c0_4] : memref<264x128xf32, #tpu.memory_space<vmem>>, vector<1x32xf32>
    %6 = vector.broadcast %5 : vector<1x32xf32> to vector<16x32xf32>
    %7 = arith.addf %4, %6 : vector<16x32xf32>
    %c0_5 = arith.constant 0 : index
    %c0_6 = arith.constant 0 : index
    %8 = vector.load %arg4[%c0_5, %c0_6] : memref<264x128xf32, #tpu.memory_space<vmem>>, vector<16x32xf32>
    %9 = arith.addf %7, %8 : vector<16x32xf32>
    %c40 = arith.constant 40 : index
    %c0_7 = arith.constant 0 : index
    %10 = vector.load %arg4[%c40, %c0_7] : memref<264x128xf32, #tpu.memory_space<vmem>>, vector<1x32xf32>
    %c48 = arith.constant 48 : index
    %c0_8 = arith.constant 0 : index
    %11 = vector.load %arg4[%c48, %c0_8] : memref<264x128xf32, #tpu.memory_space<vmem>>, vector<1x32xf32>
    %cst_9 = arith.constant dense<0.000000e+00> : vector<16xf32>
    %12 = vector.multi_reduction <add>, %9, %cst_9 [1] : vector<16x32xf32> to vector<16xf32>
    %13 = vector.shape_cast %12 : vector<16xf32> to vector<16x1xf32>
    %cst_10 = arith.constant 3.200000e+01 : f32
    %14 = vector.broadcast %cst_10 : f32 to vector<16x1xf32>
    %15 = arith.divf %13, %14 : vector<16x1xf32>
    %16 = vector.broadcast %15 : vector<16x1xf32> to vector<16x32xf32>
    %17 = arith.subf %9, %16 : vector<16x32xf32>
    %18 = arith.mulf %17, %17 : vector<16x32xf32>
    %cst_11 = arith.constant dense<0.000000e+00> : vector<16xf32>
    %19 = vector.multi_reduction <add>, %18, %cst_11 [1] : vector<16x32xf32> to vector<16xf32>
    %20 = vector.shape_cast %19 : vector<16xf32> to vector<16x1xf32>
    %cst_12 = arith.constant 3.200000e+01 : f32
    %21 = vector.broadcast %cst_12 : f32 to vector<16x1xf32>
    %22 = arith.divf %20, %21 : vector<16x1xf32>
    %23 = vector.broadcast %15 : vector<16x1xf32> to vector<16x32xf32>
    %24 = arith.subf %9, %23 : vector<16x32xf32>
    %cst_13 = arith.constant 9.99999974E-6 : f32
    %25 = vector.broadcast %cst_13 : f32 to vector<16x1xf32>
    %26 = arith.addf %22, %25 : vector<16x1xf32>
    %27 = math.rsqrt %26 : vector<16x1xf32>
    %28 = vector.broadcast %27 : vector<16x1xf32> to vector<16x32xf32>
    %29 = arith.mulf %24, %28 : vector<16x32xf32>
    %30 = vector.broadcast %10 : vector<1x32xf32> to vector<16x32xf32>
    %31 = arith.mulf %29, %30 : vector<16x32xf32>
    %32 = vector.broadcast %11 : vector<1x32xf32> to vector<16x32xf32>
    %33 = arith.addf %31, %32 : vector<16x32xf32>
    %c192 = arith.constant 192 : index
    %c0_14 = arith.constant 0 : index
    %34 = vector.load %arg3[%c192, %c0_14] : memref<1336x256xbf16, #tpu.memory_space<vmem>>, vector<32x96xbf16>
    %35 = arith.truncf %33 : vector<16x32xf32> to vector<16x32xbf16>
    %cst_15 = arith.constant dense<0.000000e+00> : vector<16x96xf32>
    %36 = tpu.matmul %35, %34, %cst_15 {dimension_numbers = #tpu.dot_dimension_numbers<[1], [0], [0], [1], [0, 0, 1, 1], [], []>} : vector<16x32xbf16>, vector<32x96xbf16>, vector<16x96xf32> -> vector<16x96xf32>
    %c56 = arith.constant 56 : index
    %c0_16 = arith.constant 0 : index
    %37 = vector.load %arg4[%c56, %c0_16] : memref<264x128xf32, #tpu.memory_space<vmem>>, vector<1x96xf32>
    %38 = vector.broadcast %37 : vector<1x96xf32> to vector<16x96xf32>
    %39 = arith.addf %36, %38 : vector<16x96xf32>
    %40 = vector.extract_strided_slice %39 {offsets = [0, 0], sizes = [16, 32], strides = [1, 1]} : vector<16x96xf32> to vector<16x32xf32>
    %41 = vector.extract_strided_slice %39 {offsets = [0, 32], sizes = [16, 32], strides = [1, 1]} : vector<16x96xf32> to vector<16x32xf32>
    %42 = vector.extract_strided_slice %39 {offsets = [0, 64], sizes = [16, 32], strides = [1, 1]} : vector<16x96xf32> to vector<16x32xf32>
    %c224 = arith.constant 224 : index
    %c0_17 = arith.constant 0 : index
    %43 = vector.load %arg3[%c224, %c0_17] : memref<1336x256xbf16, #tpu.memory_space<vmem>>, vector<32x32xbf16>
    %c64 = arith.constant 64 : index
    %c0_18 = arith.constant 0 : index
    %44 = vector.load %arg4[%c64, %c0_18] : memref<264x128xf32, #tpu.memory_space<vmem>>, vector<1x32xf32>
    %45 = vector.extract_strided_slice %40 {offsets = [0, 0], sizes = [16, 16], strides = [1, 1]} : vector<16x32xf32> to vector<16x16xf32>
    %46 = vector.extract_strided_slice %41 {offsets = [0, 0], sizes = [16, 16], strides = [1, 1]} : vector<16x32xf32> to vector<16x16xf32>
    %47 = arith.truncf %45 : vector<16x16xf32> to vector<16x16xbf16>
    %48 = arith.truncf %46 : vector<16x16xf32> to vector<16x16xbf16>
    %cst_19 = arith.constant dense<0.000000e+00> : vector<16x16xf32>
    %49 = tpu.matmul %47, %48, %cst_19 {dimension_numbers = #tpu.dot_dimension_numbers<[1], [1], [0], [0], [0, 0, 1, 0], [], []>} : vector<16x16xbf16>, vector<16x16xbf16>, vector<16x16xf32> -> vector<16x16xf32>
    %cst_20 = arith.constant 2.500000e-01 : f32
    %50 = vector.broadcast %cst_20 : f32 to vector<16x16xf32>
    %51 = arith.mulf %49, %50 : vector<16x16xf32>
    %cst_21 = arith.constant dense<0xFF800000> : vector<16xf32>
    %52 = vector.multi_reduction <maximumf>, %51, %cst_21 [1] : vector<16x16xf32> to vector<16xf32>
    %53 = vector.shape_cast %52 : vector<16xf32> to vector<16x1xf32>
    %54 = vector.broadcast %53 : vector<16x1xf32> to vector<16x16xf32>
    %55 = arith.subf %51, %54 : vector<16x16xf32>
    %56 = math.exp %55 : vector<16x16xf32>
    %cst_22 = arith.constant dense<0.000000e+00> : vector<16xf32>
    %57 = vector.multi_reduction <add>, %56, %cst_22 [1] : vector<16x16xf32> to vector<16xf32>
    %58 = vector.shape_cast %57 : vector<16xf32> to vector<16x1xf32>
    %59 = vector.broadcast %58 : vector<16x1xf32> to vector<16x16xf32>
    %60 = arith.divf %56, %59 : vector<16x16xf32>
    %61 = vector.extract_strided_slice %42 {offsets = [0, 0], sizes = [16, 16], strides = [1, 1]} : vector<16x32xf32> to vector<16x16xf32>
    %62 = arith.truncf %60 : vector<16x16xf32> to vector<16x16xbf16>
    %63 = arith.truncf %61 : vector<16x16xf32> to vector<16x16xbf16>
    %cst_23 = arith.constant dense<0.000000e+00> : vector<16x16xf32>
    %64 = tpu.matmul %62, %63, %cst_23 {dimension_numbers = #tpu.dot_dimension_numbers<[1], [0], [0], [1], [0, 0, 1, 1], [], []>} : vector<16x16xbf16>, vector<16x16xbf16>, vector<16x16xf32> -> vector<16x16xf32>
    %65 = vector.extract_strided_slice %43 {offsets = [0, 0], sizes = [16, 32], strides = [1, 1]} : vector<32x32xbf16> to vector<16x32xbf16>
    %66 = arith.truncf %64 : vector<16x16xf32> to vector<16x16xbf16>
    %cst_24 = arith.constant dense<0.000000e+00> : vector<16x32xf32>
    %67 = tpu.matmul %66, %65, %cst_24 {dimension_numbers = #tpu.dot_dimension_numbers<[1], [0], [0], [1], [0, 0, 1, 1], [], []>} : vector<16x16xbf16>, vector<16x32xbf16>, vector<16x32xf32> -> vector<16x32xf32>
    %68 = vector.extract_strided_slice %40 {offsets = [0, 16], sizes = [16, 16], strides = [1, 1]} : vector<16x32xf32> to vector<16x16xf32>
    %69 = vector.extract_strided_slice %41 {offsets = [0, 16], sizes = [16, 16], strides = [1, 1]} : vector<16x32xf32> to vector<16x16xf32>
    %70 = arith.truncf %68 : vector<16x16xf32> to vector<16x16xbf16>
    %71 = arith.truncf %69 : vector<16x16xf32> to vector<16x16xbf16>
    %cst_25 = arith.constant dense<0.000000e+00> : vector<16x16xf32>
    %72 = tpu.matmul %70, %71, %cst_25 {dimension_numbers = #tpu.dot_dimension_numbers<[1], [1], [0], [0], [0, 0, 1, 0], [], []>} : vector<16x16xbf16>, vector<16x16xbf16>, vector<16x16xf32> -> vector<16x16xf32>
    %cst_26 = arith.constant 2.500000e-01 : f32
    %73 = vector.broadcast %cst_26 : f32 to vector<16x16xf32>
    %74 = arith.mulf %72, %73 : vector<16x16xf32>
    %cst_27 = arith.constant dense<0xFF800000> : vector<16xf32>
    %75 = vector.multi_reduction <maximumf>, %74, %cst_27 [1] : vector<16x16xf32> to vector<16xf32>
    %76 = vector.shape_cast %75 : vector<16xf32> to vector<16x1xf32>
    %77 = vector.broadcast %76 : vector<16x1xf32> to vector<16x16xf32>
    %78 = arith.subf %74, %77 : vector<16x16xf32>
    %79 = math.exp %78 : vector<16x16xf32>
    %cst_28 = arith.constant dense<0.000000e+00> : vector<16xf32>
    %80 = vector.multi_reduction <add>, %79, %cst_28 [1] : vector<16x16xf32> to vector<16xf32>
    %81 = vector.shape_cast %80 : vector<16xf32> to vector<16x1xf32>
    %82 = vector.broadcast %81 : vector<16x1xf32> to vector<16x16xf32>
    %83 = arith.divf %79, %82 : vector<16x16xf32>
    %84 = vector.extract_strided_slice %42 {offsets = [0, 16], sizes = [16, 16], strides = [1, 1]} : vector<16x32xf32> to vector<16x16xf32>
    %85 = arith.truncf %83 : vector<16x16xf32> to vector<16x16xbf16>
    %86 = arith.truncf %84 : vector<16x16xf32> to vector<16x16xbf16>
    %cst_29 = arith.constant dense<0.000000e+00> : vector<16x16xf32>
    %87 = tpu.matmul %85, %86, %cst_29 {dimension_numbers = #tpu.dot_dimension_numbers<[1], [0], [0], [1], [0, 0, 1, 1], [], []>} : vector<16x16xbf16>, vector<16x16xbf16>, vector<16x16xf32> -> vector<16x16xf32>
    %88 = vector.extract_strided_slice %43 {offsets = [16, 0], sizes = [16, 32], strides = [1, 1]} : vector<32x32xbf16> to vector<16x32xbf16>
    %89 = arith.truncf %87 : vector<16x16xf32> to vector<16x16xbf16>
    %cst_30 = arith.constant dense<0.000000e+00> : vector<16x32xf32>
    %90 = tpu.matmul %89, %88, %cst_30 {dimension_numbers = #tpu.dot_dimension_numbers<[1], [0], [0], [1], [0, 0, 1, 1], [], []>} : vector<16x16xbf16>, vector<16x32xbf16>, vector<16x32xf32> -> vector<16x32xf32>
    %91 = arith.addf %67, %90 : vector<16x32xf32>
    %92 = vector.broadcast %44 : vector<1x32xf32> to vector<16x32xf32>
    %93 = arith.addf %91, %92 : vector<16x32xf32>
    %94 = arith.addf %9, %93 : vector<16x32xf32>
    %c72 = arith.constant 72 : index
    %c0_31 = arith.constant 0 : index
    %95 = vector.load %arg4[%c72, %c0_31] : memref<264x128xf32, #tpu.memory_space<vmem>>, vector<1x32xf32>
    %c80 = arith.constant 80 : index
    %c0_32 = arith.constant 0 : index
    %96 = vector.load %arg4[%c80, %c0_32] : memref<264x128xf32, #tpu.memory_space<vmem>>, vector<1x32xf32>
    %cst_33 = arith.constant dense<0.000000e+00> : vector<16xf32>
    %97 = vector.multi_reduction <add>, %94, %cst_33 [1] : vector<16x32xf32> to vector<16xf32>
    %98 = vector.shape_cast %97 : vector<16xf32> to vector<16x1xf32>
    %cst_34 = arith.constant 3.200000e+01 : f32
    %99 = vector.broadcast %cst_34 : f32 to vector<16x1xf32>
    %100 = arith.divf %98, %99 : vector<16x1xf32>
    %101 = vector.broadcast %100 : vector<16x1xf32> to vector<16x32xf32>
    %102 = arith.subf %94, %101 : vector<16x32xf32>
    %103 = arith.mulf %102, %102 : vector<16x32xf32>
    %cst_35 = arith.constant dense<0.000000e+00> : vector<16xf32>
    %104 = vector.multi_reduction <add>, %103, %cst_35 [1] : vector<16x32xf32> to vector<16xf32>
    %105 = vector.shape_cast %104 : vector<16xf32> to vector<16x1xf32>
    %cst_36 = arith.constant 3.200000e+01 : f32
    %106 = vector.broadcast %cst_36 : f32 to vector<16x1xf32>
    %107 = arith.divf %105, %106 : vector<16x1xf32>
    %108 = vector.broadcast %100 : vector<16x1xf32> to vector<16x32xf32>
    %109 = arith.subf %94, %108 : vector<16x32xf32>
    %cst_37 = arith.constant 9.99999974E-6 : f32
    %110 = vector.broadcast %cst_37 : f32 to vector<16x1xf32>
    %111 = arith.addf %107, %110 : vector<16x1xf32>
    %112 = math.rsqrt %111 : vector<16x1xf32>
    %113 = vector.broadcast %112 : vector<16x1xf32> to vector<16x32xf32>
    %114 = arith.mulf %109, %113 : vector<16x32xf32>
    %115 = vector.broadcast %95 : vector<1x32xf32> to vector<16x32xf32>
    %116 = arith.mulf %114, %115 : vector<16x32xf32>
    %117 = vector.broadcast %96 : vector<1x32xf32> to vector<16x32xf32>
    %118 = arith.addf %116, %117 : vector<16x32xf32>
    %c256 = arith.constant 256 : index
    %c0_38 = arith.constant 0 : index
    %119 = vector.load %arg3[%c256, %c0_38] : memref<1336x256xbf16, #tpu.memory_space<vmem>>, vector<32x128xbf16>
    %120 = arith.truncf %118 : vector<16x32xf32> to vector<16x32xbf16>
    %cst_39 = arith.constant dense<0.000000e+00> : vector<16x128xf32>
    %121 = tpu.matmul %120, %119, %cst_39 {dimension_numbers = #tpu.dot_dimension_numbers<[1], [0], [0], [1], [0, 0, 1, 1], [], []>} : vector<16x32xbf16>, vector<32x128xbf16>, vector<16x128xf32> -> vector<16x128xf32>
    %c88 = arith.constant 88 : index
    %c0_40 = arith.constant 0 : index
    %122 = vector.load %arg4[%c88, %c0_40] : memref<264x128xf32, #tpu.memory_space<vmem>>, vector<1x128xf32>
    %123 = vector.broadcast %122 : vector<1x128xf32> to vector<16x128xf32>
    %124 = arith.addf %121, %123 : vector<16x128xf32>
    %125 = arith.mulf %124, %124 : vector<16x128xf32>
    %126 = arith.mulf %124, %125 : vector<16x128xf32>
    %cst_41 = arith.constant 4.471500e-02 : f32
    %127 = vector.broadcast %cst_41 : f32 to vector<16x128xf32>
    %128 = arith.mulf %127, %126 : vector<16x128xf32>
    %129 = arith.addf %124, %128 : vector<16x128xf32>
    %cst_42 = arith.constant 0.797884583 : f32
    %130 = vector.broadcast %cst_42 : f32 to vector<16x128xf32>
    %131 = arith.mulf %130, %129 : vector<16x128xf32>
    %132 = math.tanh %131 : vector<16x128xf32>
    %cst_43 = arith.constant 1.000000e+00 : f32
    %133 = vector.broadcast %cst_43 : f32 to vector<16x128xf32>
    %134 = arith.addf %133, %132 : vector<16x128xf32>
    %cst_44 = arith.constant 5.000000e-01 : f32
    %135 = vector.broadcast %cst_44 : f32 to vector<16x128xf32>
    %136 = arith.mulf %135, %134 : vector<16x128xf32>
    %137 = arith.mulf %124, %136 : vector<16x128xf32>
    %c288 = arith.constant 288 : index
    %c0_45 = arith.constant 0 : index
    %138 = vector.load %arg3[%c288, %c0_45] : memref<1336x256xbf16, #tpu.memory_space<vmem>>, vector<128x32xbf16>
    %139 = arith.truncf %137 : vector<16x128xf32> to vector<16x128xbf16>
    %cst_46 = arith.constant dense<0.000000e+00> : vector<16x32xf32>
    %140 = tpu.matmul %139, %138, %cst_46 {dimension_numbers = #tpu.dot_dimension_numbers<[1], [0], [0], [1], [0, 0, 1, 1], [], []>} : vector<16x128xbf16>, vector<128x32xbf16>, vector<16x32xf32> -> vector<16x32xf32>
    %141 = arith.addf %94, %140 : vector<16x32xf32>
    %c96 = arith.constant 96 : index
    %c0_47 = arith.constant 0 : index
    %142 = vector.load %arg4[%c96, %c0_47] : memref<264x128xf32, #tpu.memory_space<vmem>>, vector<1x32xf32>
    %143 = vector.broadcast %142 : vector<1x32xf32> to vector<16x32xf32>
    %144 = arith.addf %141, %143 : vector<16x32xf32>
    %c416 = arith.constant 416 : index
    %c0_48 = arith.constant 0 : index
    %145 = vector.load %arg3[%c416, %c0_48] : memref<1336x256xbf16, #tpu.memory_space<vmem>>, vector<32x32xbf16>
    %146 = arith.truncf %144 : vector<16x32xf32> to vector<16x32xbf16>
    %cst_49 = arith.constant dense<0.000000e+00> : vector<16x32xf32>
    %147 = tpu.matmul %146, %145, %cst_49 {dimension_numbers = #tpu.dot_dimension_numbers<[1], [0], [0], [1], [0, 0, 1, 1], [], []>} : vector<16x32xbf16>, vector<32x32xbf16>, vector<16x32xf32> -> vector<16x32xf32>
    %c104 = arith.constant 104 : index
    %c0_50 = arith.constant 0 : index
    %148 = vector.load %arg4[%c104, %c0_50] : memref<264x128xf32, #tpu.memory_space<vmem>>, vector<1x32xf32>
    %149 = vector.broadcast %148 : vector<1x32xf32> to vector<16x32xf32>
    %150 = arith.addf %147, %149 : vector<16x32xf32>
    %c112 = arith.constant 112 : index
    %c0_51 = arith.constant 0 : index
    %151 = vector.load %arg4[%c112, %c0_51] : memref<264x128xf32, #tpu.memory_space<vmem>>, vector<1x32xf32>
    %152 = vector.broadcast %151 : vector<1x32xf32> to vector<16x32xf32>
    %153 = arith.addf %150, %152 : vector<16x32xf32>
    %c16 = arith.constant 16 : index
    %c0_52 = arith.constant 0 : index
    %154 = vector.load %arg4[%c16, %c0_52] : memref<264x128xf32, #tpu.memory_space<vmem>>, vector<16x32xf32>
    %c0_53 = arith.constant 0 : index
    %c0_54 = arith.constant 0 : index
    %c0_55 = arith.constant 0 : index
    %155 = vector.load %arg2[%c0_53, %c0_54, %c0_55] : memref<1x7x32xf32, #tpu.memory_space<vmem>>, vector<1x7x32xf32>
    %156 = vector.shape_cast %155 : vector<1x7x32xf32> to vector<7x32xf32>
    %c448 = arith.constant 448 : index
    %c0_56 = arith.constant 0 : index
    %157 = vector.load %arg3[%c448, %c0_56] : memref<1336x256xbf16, #tpu.memory_space<vmem>>, vector<32x96xbf16>
    %c120 = arith.constant 120 : index
    %c0_57 = arith.constant 0 : index
    %158 = vector.load %arg4[%c120, %c0_57] : memref<264x128xf32, #tpu.memory_space<vmem>>, vector<1x96xf32>
    %159 = arith.truncf %156 : vector<7x32xf32> to vector<7x32xbf16>
    %cst_58 = arith.constant dense<0.000000e+00> : vector<7x96xf32>
    %160 = tpu.matmul %159, %157, %cst_58 {dimension_numbers = #tpu.dot_dimension_numbers<[1], [0], [0], [1], [0, 0, 1, 1], [], []>} : vector<7x32xbf16>, vector<32x96xbf16>, vector<7x96xf32> -> vector<7x96xf32>
    %161 = vector.broadcast %158 : vector<1x96xf32> to vector<7x96xf32>
    %162 = arith.addf %160, %161 : vector<7x96xf32>
    %163 = vector.extract_strided_slice %162 {offsets = [0, 0], sizes = [7, 32], strides = [1, 1]} : vector<7x96xf32> to vector<7x32xf32>
    %164 = vector.extract_strided_slice %162 {offsets = [0, 32], sizes = [7, 32], strides = [1, 1]} : vector<7x96xf32> to vector<7x32xf32>
    %165 = vector.extract_strided_slice %162 {offsets = [0, 64], sizes = [7, 32], strides = [1, 1]} : vector<7x96xf32> to vector<7x32xf32>
    %c480 = arith.constant 480 : index
    %c0_59 = arith.constant 0 : index
    %166 = vector.load %arg3[%c480, %c0_59] : memref<1336x256xbf16, #tpu.memory_space<vmem>>, vector<32x32xbf16>
    %c128 = arith.constant 128 : index
    %c0_60 = arith.constant 0 : index
    %167 = vector.load %arg4[%c128, %c0_60] : memref<264x128xf32, #tpu.memory_space<vmem>>, vector<1x32xf32>
    %168 = vector.extract_strided_slice %163 {offsets = [0, 0], sizes = [7, 16], strides = [1, 1]} : vector<7x32xf32> to vector<7x16xf32>
    %169 = vector.extract_strided_slice %164 {offsets = [0, 0], sizes = [7, 16], strides = [1, 1]} : vector<7x32xf32> to vector<7x16xf32>
    %170 = arith.truncf %168 : vector<7x16xf32> to vector<7x16xbf16>
    %171 = arith.truncf %169 : vector<7x16xf32> to vector<7x16xbf16>
    %cst_61 = arith.constant dense<0.000000e+00> : vector<7x7xf32>
    %172 = tpu.matmul %170, %171, %cst_61 {dimension_numbers = #tpu.dot_dimension_numbers<[1], [1], [0], [0], [0, 0, 1, 0], [], []>} : vector<7x16xbf16>, vector<7x16xbf16>, vector<7x7xf32> -> vector<7x7xf32>
    %cst_62 = arith.constant 2.500000e-01 : f32
    %173 = vector.broadcast %cst_62 : f32 to vector<7x7xf32>
    %174 = arith.mulf %172, %173 : vector<7x7xf32>
    %cst_63 = arith.constant dense<0xFF800000> : vector<7xf32>
    %175 = vector.multi_reduction <maximumf>, %174, %cst_63 [1] : vector<7x7xf32> to vector<7xf32>
    %176 = vector.shape_cast %175 : vector<7xf32> to vector<7x1xf32>
    %177 = vector.broadcast %176 : vector<7x1xf32> to vector<7x7xf32>
    %178 = arith.subf %174, %177 : vector<7x7xf32>
    %179 = math.exp %178 : vector<7x7xf32>
    %cst_64 = arith.constant dense<0.000000e+00> : vector<7xf32>
    %180 = vector.multi_reduction <add>, %179, %cst_64 [1] : vector<7x7xf32> to vector<7xf32>
    %181 = vector.shape_cast %180 : vector<7xf32> to vector<7x1xf32>
    %182 = vector.broadcast %181 : vector<7x1xf32> to vector<7x7xf32>
    %183 = arith.divf %179, %182 : vector<7x7xf32>
    %184 = vector.extract_strided_slice %165 {offsets = [0, 0], sizes = [7, 16], strides = [1, 1]} : vector<7x32xf32> to vector<7x16xf32>
    %185 = arith.truncf %183 : vector<7x7xf32> to vector<7x7xbf16>
    %186 = arith.truncf %184 : vector<7x16xf32> to vector<7x16xbf16>
    %cst_65 = arith.constant dense<0.000000e+00> : vector<7x16xf32>
    %187 = tpu.matmul %185, %186, %cst_65 {dimension_numbers = #tpu.dot_dimension_numbers<[1], [0], [0], [1], [0, 0, 1, 1], [], []>} : vector<7x7xbf16>, vector<7x16xbf16>, vector<7x16xf32> -> vector<7x16xf32>
    %188 = vector.extract_strided_slice %166 {offsets = [0, 0], sizes = [16, 32], strides = [1, 1]} : vector<32x32xbf16> to vector<16x32xbf16>
    %189 = arith.truncf %187 : vector<7x16xf32> to vector<7x16xbf16>
    %cst_66 = arith.constant dense<0.000000e+00> : vector<7x32xf32>
    %190 = tpu.matmul %189, %188, %cst_66 {dimension_numbers = #tpu.dot_dimension_numbers<[1], [0], [0], [1], [0, 0, 1, 1], [], []>} : vector<7x16xbf16>, vector<16x32xbf16>, vector<7x32xf32> -> vector<7x32xf32>
    %191 = vector.extract_strided_slice %163 {offsets = [0, 16], sizes = [7, 16], strides = [1, 1]} : vector<7x32xf32> to vector<7x16xf32>
    %192 = vector.extract_strided_slice %164 {offsets = [0, 16], sizes = [7, 16], strides = [1, 1]} : vector<7x32xf32> to vector<7x16xf32>
    %193 = arith.truncf %191 : vector<7x16xf32> to vector<7x16xbf16>
    %194 = arith.truncf %192 : vector<7x16xf32> to vector<7x16xbf16>
    %cst_67 = arith.constant dense<0.000000e+00> : vector<7x7xf32>
    %195 = tpu.matmul %193, %194, %cst_67 {dimension_numbers = #tpu.dot_dimension_numbers<[1], [1], [0], [0], [0, 0, 1, 0], [], []>} : vector<7x16xbf16>, vector<7x16xbf16>, vector<7x7xf32> -> vector<7x7xf32>
    %cst_68 = arith.constant 2.500000e-01 : f32
    %196 = vector.broadcast %cst_68 : f32 to vector<7x7xf32>
    %197 = arith.mulf %195, %196 : vector<7x7xf32>
    %cst_69 = arith.constant dense<0xFF800000> : vector<7xf32>
    %198 = vector.multi_reduction <maximumf>, %197, %cst_69 [1] : vector<7x7xf32> to vector<7xf32>
    %199 = vector.shape_cast %198 : vector<7xf32> to vector<7x1xf32>
    %200 = vector.broadcast %199 : vector<7x1xf32> to vector<7x7xf32>
    %201 = arith.subf %197, %200 : vector<7x7xf32>
    %202 = math.exp %201 : vector<7x7xf32>
    %cst_70 = arith.constant dense<0.000000e+00> : vector<7xf32>
    %203 = vector.multi_reduction <add>, %202, %cst_70 [1] : vector<7x7xf32> to vector<7xf32>
    %204 = vector.shape_cast %203 : vector<7xf32> to vector<7x1xf32>
    %205 = vector.broadcast %204 : vector<7x1xf32> to vector<7x7xf32>
    %206 = arith.divf %202, %205 : vector<7x7xf32>
    %207 = vector.extract_strided_slice %165 {offsets = [0, 16], sizes = [7, 16], strides = [1, 1]} : vector<7x32xf32> to vector<7x16xf32>
    %208 = arith.truncf %206 : vector<7x7xf32> to vector<7x7xbf16>
    %209 = arith.truncf %207 : vector<7x16xf32> to vector<7x16xbf16>
    %cst_71 = arith.constant dense<0.000000e+00> : vector<7x16xf32>
    %210 = tpu.matmul %208, %209, %cst_71 {dimension_numbers = #tpu.dot_dimension_numbers<[1], [0], [0], [1], [0, 0, 1, 1], [], []>} : vector<7x7xbf16>, vector<7x16xbf16>, vector<7x16xf32> -> vector<7x16xf32>
    %211 = vector.extract_strided_slice %166 {offsets = [16, 0], sizes = [16, 32], strides = [1, 1]} : vector<32x32xbf16> to vector<16x32xbf16>
    %212 = arith.truncf %210 : vector<7x16xf32> to vector<7x16xbf16>
    %cst_72 = arith.constant dense<0.000000e+00> : vector<7x32xf32>
    %213 = tpu.matmul %212, %211, %cst_72 {dimension_numbers = #tpu.dot_dimension_numbers<[1], [0], [0], [1], [0, 0, 1, 1], [], []>} : vector<7x16xbf16>, vector<16x32xbf16>, vector<7x32xf32> -> vector<7x32xf32>
    %214 = arith.addf %190, %213 : vector<7x32xf32>
    %215 = vector.broadcast %167 : vector<1x32xf32> to vector<7x32xf32>
    %216 = arith.addf %214, %215 : vector<7x32xf32>
    %217 = arith.addf %156, %216 : vector<7x32xf32>
    %c200 = arith.constant 200 : index
    %c0_73 = arith.constant 0 : index
    %218 = vector.load %arg4[%c200, %c0_73] : memref<264x128xf32, #tpu.memory_space<vmem>>, vector<1x32xf32>
    %c208 = arith.constant 208 : index
    %c0_74 = arith.constant 0 : index
    %219 = vector.load %arg4[%c208, %c0_74] : memref<264x128xf32, #tpu.memory_space<vmem>>, vector<1x32xf32>
    %cst_75 = arith.constant dense<0.000000e+00> : vector<7xf32>
    %220 = vector.multi_reduction <add>, %217, %cst_75 [1] : vector<7x32xf32> to vector<7xf32>
    %221 = vector.shape_cast %220 : vector<7xf32> to vector<7x1xf32>
    %cst_76 = arith.constant 3.200000e+01 : f32
    %222 = vector.broadcast %cst_76 : f32 to vector<7x1xf32>
    %223 = arith.divf %221, %222 : vector<7x1xf32>
    %224 = vector.broadcast %223 : vector<7x1xf32> to vector<7x32xf32>
    %225 = arith.subf %217, %224 : vector<7x32xf32>
    %226 = arith.mulf %225, %225 : vector<7x32xf32>
    %cst_77 = arith.constant dense<0.000000e+00> : vector<7xf32>
    %227 = vector.multi_reduction <add>, %226, %cst_77 [1] : vector<7x32xf32> to vector<7xf32>
    %228 = vector.shape_cast %227 : vector<7xf32> to vector<7x1xf32>
    %cst_78 = arith.constant 3.200000e+01 : f32
    %229 = vector.broadcast %cst_78 : f32 to vector<7x1xf32>
    %230 = arith.divf %228, %229 : vector<7x1xf32>
    %231 = vector.broadcast %223 : vector<7x1xf32> to vector<7x32xf32>
    %232 = arith.subf %217, %231 : vector<7x32xf32>
    %cst_79 = arith.constant 9.99999974E-6 : f32
    %233 = vector.broadcast %cst_79 : f32 to vector<7x1xf32>
    %234 = arith.addf %230, %233 : vector<7x1xf32>
    %235 = math.rsqrt %234 : vector<7x1xf32>
    %236 = vector.broadcast %235 : vector<7x1xf32> to vector<7x32xf32>
    %237 = arith.mulf %232, %236 : vector<7x32xf32>
    %238 = vector.broadcast %218 : vector<1x32xf32> to vector<7x32xf32>
    %239 = arith.mulf %237, %238 : vector<7x32xf32>
    %240 = vector.broadcast %219 : vector<1x32xf32> to vector<7x32xf32>
    %241 = arith.addf %239, %240 : vector<7x32xf32>
    %242 = arith.addf %241, %156 : vector<7x32xf32>
    %243 = arith.addf %153, %154 : vector<16x32xf32>
    %c512 = arith.constant 512 : index
    %c0_80 = arith.constant 0 : index
    %244 = vector.load %arg3[%c512, %c0_80] : memref<1336x256xbf16, #tpu.memory_space<vmem>>, vector<32x96xbf16>
    %c136 = arith.constant 136 : index
    %c0_81 = arith.constant 0 : index
    %245 = vector.load %arg4[%c136, %c0_81] : memref<264x128xf32, #tpu.memory_space<vmem>>, vector<1x96xf32>
    %246 = vector.extract_strided_slice %244 {offsets = [0, 0], sizes = [32, 32], strides = [1, 1]} : vector<32x96xbf16> to vector<32x32xbf16>
    %247 = arith.truncf %242 : vector<7x32xf32> to vector<7x32xbf16>
    %cst_82 = arith.constant dense<0.000000e+00> : vector<7x32xf32>
    %248 = tpu.matmul %247, %246, %cst_82 {dimension_numbers = #tpu.dot_dimension_numbers<[1], [0], [0], [1], [0, 0, 1, 1], [], []>} : vector<7x32xbf16>, vector<32x32xbf16>, vector<7x32xf32> -> vector<7x32xf32>
    %249 = vector.extract_strided_slice %245 {offsets = [0, 0], sizes = [1, 32], strides = [1, 1]} : vector<1x96xf32> to vector<1x32xf32>
    %250 = vector.broadcast %249 : vector<1x32xf32> to vector<7x32xf32>
    %251 = arith.addf %248, %250 : vector<7x32xf32>
    %252 = vector.extract_strided_slice %244 {offsets = [0, 32], sizes = [32, 32], strides = [1, 1]} : vector<32x96xbf16> to vector<32x32xbf16>
    %253 = arith.truncf %243 : vector<16x32xf32> to vector<16x32xbf16>
    %cst_83 = arith.constant dense<0.000000e+00> : vector<16x32xf32>
    %254 = tpu.matmul %253, %252, %cst_83 {dimension_numbers = #tpu.dot_dimension_numbers<[1], [0], [0], [1], [0, 0, 1, 1], [], []>} : vector<16x32xbf16>, vector<32x32xbf16>, vector<16x32xf32> -> vector<16x32xf32>
    %255 = vector.extract_strided_slice %245 {offsets = [0, 32], sizes = [1, 32], strides = [1, 1]} : vector<1x96xf32> to vector<1x32xf32>
    %256 = vector.broadcast %255 : vector<1x32xf32> to vector<16x32xf32>
    %257 = arith.addf %254, %256 : vector<16x32xf32>
    %258 = vector.extract_strided_slice %244 {offsets = [0, 64], sizes = [32, 32], strides = [1, 1]} : vector<32x96xbf16> to vector<32x32xbf16>
    %259 = arith.truncf %153 : vector<16x32xf32> to vector<16x32xbf16>
    %cst_84 = arith.constant dense<0.000000e+00> : vector<16x32xf32>
    %260 = tpu.matmul %259, %258, %cst_84 {dimension_numbers = #tpu.dot_dimension_numbers<[1], [0], [0], [1], [0, 0, 1, 1], [], []>} : vector<16x32xbf16>, vector<32x32xbf16>, vector<16x32xf32> -> vector<16x32xf32>
    %261 = vector.extract_strided_slice %245 {offsets = [0, 64], sizes = [1, 32], strides = [1, 1]} : vector<1x96xf32> to vector<1x32xf32>
    %262 = vector.broadcast %261 : vector<1x32xf32> to vector<16x32xf32>
    %263 = arith.addf %260, %262 : vector<16x32xf32>
    %c544 = arith.constant 544 : index
    %c0_85 = arith.constant 0 : index
    %264 = vector.load %arg3[%c544, %c0_85] : memref<1336x256xbf16, #tpu.memory_space<vmem>>, vector<32x32xbf16>
    %c144 = arith.constant 144 : index
    %c0_86 = arith.constant 0 : index
    %265 = vector.load %arg4[%c144, %c0_86] : memref<264x128xf32, #tpu.memory_space<vmem>>, vector<1x32xf32>
    %266 = vector.extract_strided_slice %251 {offsets = [0, 0], sizes = [7, 16], strides = [1, 1]} : vector<7x32xf32> to vector<7x16xf32>
    %267 = vector.extract_strided_slice %257 {offsets = [0, 0], sizes = [16, 16], strides = [1, 1]} : vector<16x32xf32> to vector<16x16xf32>
    %268 = arith.truncf %266 : vector<7x16xf32> to vector<7x16xbf16>
    %269 = arith.truncf %267 : vector<16x16xf32> to vector<16x16xbf16>
    %cst_87 = arith.constant dense<0.000000e+00> : vector<7x16xf32>
    %270 = tpu.matmul %268, %269, %cst_87 {dimension_numbers = #tpu.dot_dimension_numbers<[1], [1], [0], [0], [0, 0, 1, 0], [], []>} : vector<7x16xbf16>, vector<16x16xbf16>, vector<7x16xf32> -> vector<7x16xf32>
    %cst_88 = arith.constant 2.500000e-01 : f32
    %271 = vector.broadcast %cst_88 : f32 to vector<7x16xf32>
    %272 = arith.mulf %270, %271 : vector<7x16xf32>
    %cst_89 = arith.constant dense<0xFF800000> : vector<7xf32>
    %273 = vector.multi_reduction <maximumf>, %272, %cst_89 [1] : vector<7x16xf32> to vector<7xf32>
    %274 = vector.shape_cast %273 : vector<7xf32> to vector<7x1xf32>
    %275 = vector.broadcast %274 : vector<7x1xf32> to vector<7x16xf32>
    %276 = arith.subf %272, %275 : vector<7x16xf32>
    %277 = math.exp %276 : vector<7x16xf32>
    %cst_90 = arith.constant dense<0.000000e+00> : vector<7xf32>
    %278 = vector.multi_reduction <add>, %277, %cst_90 [1] : vector<7x16xf32> to vector<7xf32>
    %279 = vector.shape_cast %278 : vector<7xf32> to vector<7x1xf32>
    %280 = vector.broadcast %279 : vector<7x1xf32> to vector<7x16xf32>
    %281 = arith.divf %277, %280 : vector<7x16xf32>
    %282 = vector.extract_strided_slice %263 {offsets = [0, 0], sizes = [16, 16], strides = [1, 1]} : vector<16x32xf32> to vector<16x16xf32>
    %283 = arith.truncf %281 : vector<7x16xf32> to vector<7x16xbf16>
    %284 = arith.truncf %282 : vector<16x16xf32> to vector<16x16xbf16>
    %cst_91 = arith.constant dense<0.000000e+00> : vector<7x16xf32>
    %285 = tpu.matmul %283, %284, %cst_91 {dimension_numbers = #tpu.dot_dimension_numbers<[1], [0], [0], [1], [0, 0, 1, 1], [], []>} : vector<7x16xbf16>, vector<16x16xbf16>, vector<7x16xf32> -> vector<7x16xf32>
    %286 = vector.extract_strided_slice %264 {offsets = [0, 0], sizes = [16, 32], strides = [1, 1]} : vector<32x32xbf16> to vector<16x32xbf16>
    %287 = arith.truncf %285 : vector<7x16xf32> to vector<7x16xbf16>
    %cst_92 = arith.constant dense<0.000000e+00> : vector<7x32xf32>
    %288 = tpu.matmul %287, %286, %cst_92 {dimension_numbers = #tpu.dot_dimension_numbers<[1], [0], [0], [1], [0, 0, 1, 1], [], []>} : vector<7x16xbf16>, vector<16x32xbf16>, vector<7x32xf32> -> vector<7x32xf32>
    %289 = vector.extract_strided_slice %251 {offsets = [0, 16], sizes = [7, 16], strides = [1, 1]} : vector<7x32xf32> to vector<7x16xf32>
    %290 = vector.extract_strided_slice %257 {offsets = [0, 16], sizes = [16, 16], strides = [1, 1]} : vector<16x32xf32> to vector<16x16xf32>
    %291 = arith.truncf %289 : vector<7x16xf32> to vector<7x16xbf16>
    %292 = arith.truncf %290 : vector<16x16xf32> to vector<16x16xbf16>
    %cst_93 = arith.constant dense<0.000000e+00> : vector<7x16xf32>
    %293 = tpu.matmul %291, %292, %cst_93 {dimension_numbers = #tpu.dot_dimension_numbers<[1], [1], [0], [0], [0, 0, 1, 0], [], []>} : vector<7x16xbf16>, vector<16x16xbf16>, vector<7x16xf32> -> vector<7x16xf32>
    %cst_94 = arith.constant 2.500000e-01 : f32
    %294 = vector.broadcast %cst_94 : f32 to vector<7x16xf32>
    %295 = arith.mulf %293, %294 : vector<7x16xf32>
    %cst_95 = arith.constant dense<0xFF800000> : vector<7xf32>
    %296 = vector.multi_reduction <maximumf>, %295, %cst_95 [1] : vector<7x16xf32> to vector<7xf32>
    %297 = vector.shape_cast %296 : vector<7xf32> to vector<7x1xf32>
    %298 = vector.broadcast %297 : vector<7x1xf32> to vector<7x16xf32>
    %299 = arith.subf %295, %298 : vector<7x16xf32>
    %300 = math.exp %299 : vector<7x16xf32>
    %cst_96 = arith.constant dense<0.000000e+00> : vector<7xf32>
    %301 = vector.multi_reduction <add>, %300, %cst_96 [1] : vector<7x16xf32> to vector<7xf32>
    %302 = vector.shape_cast %301 : vector<7xf32> to vector<7x1xf32>
    %303 = vector.broadcast %302 : vector<7x1xf32> to vector<7x16xf32>
    %304 = arith.divf %300, %303 : vector<7x16xf32>
    %305 = vector.extract_strided_slice %263 {offsets = [0, 16], sizes = [16, 16], strides = [1, 1]} : vector<16x32xf32> to vector<16x16xf32>
    %306 = arith.truncf %304 : vector<7x16xf32> to vector<7x16xbf16>
    %307 = arith.truncf %305 : vector<16x16xf32> to vector<16x16xbf16>
    %cst_97 = arith.constant dense<0.000000e+00> : vector<7x16xf32>
    %308 = tpu.matmul %306, %307, %cst_97 {dimension_numbers = #tpu.dot_dimension_numbers<[1], [0], [0], [1], [0, 0, 1, 1], [], []>} : vector<7x16xbf16>, vector<16x16xbf16>, vector<7x16xf32> -> vector<7x16xf32>
    %309 = vector.extract_strided_slice %264 {offsets = [16, 0], sizes = [16, 32], strides = [1, 1]} : vector<32x32xbf16> to vector<16x32xbf16>
    %310 = arith.truncf %308 : vector<7x16xf32> to vector<7x16xbf16>
    %cst_98 = arith.constant dense<0.000000e+00> : vector<7x32xf32>
    %311 = tpu.matmul %310, %309, %cst_98 {dimension_numbers = #tpu.dot_dimension_numbers<[1], [0], [0], [1], [0, 0, 1, 1], [], []>} : vector<7x16xbf16>, vector<16x32xbf16>, vector<7x32xf32> -> vector<7x32xf32>
    %312 = arith.addf %288, %311 : vector<7x32xf32>
    %313 = vector.broadcast %265 : vector<1x32xf32> to vector<7x32xf32>
    %314 = arith.addf %312, %313 : vector<7x32xf32>
    %315 = arith.addf %241, %314 : vector<7x32xf32>
    %c201 = arith.constant 201 : index
    %c0_99 = arith.constant 0 : index
    %316 = vector.load %arg4[%c201, %c0_99] : memref<264x128xf32, #tpu.memory_space<vmem>>, vector<1x32xf32>
    %c209 = arith.constant 209 : index
    %c0_100 = arith.constant 0 : index
    %317 = vector.load %arg4[%c209, %c0_100] : memref<264x128xf32, #tpu.memory_space<vmem>>, vector<1x32xf32>
    %cst_101 = arith.constant dense<0.000000e+00> : vector<7xf32>
    %318 = vector.multi_reduction <add>, %315, %cst_101 [1] : vector<7x32xf32> to vector<7xf32>
    %319 = vector.shape_cast %318 : vector<7xf32> to vector<7x1xf32>
    %cst_102 = arith.constant 3.200000e+01 : f32
    %320 = vector.broadcast %cst_102 : f32 to vector<7x1xf32>
    %321 = arith.divf %319, %320 : vector<7x1xf32>
    %322 = vector.broadcast %321 : vector<7x1xf32> to vector<7x32xf32>
    %323 = arith.subf %315, %322 : vector<7x32xf32>
    %324 = arith.mulf %323, %323 : vector<7x32xf32>
    %cst_103 = arith.constant dense<0.000000e+00> : vector<7xf32>
    %325 = vector.multi_reduction <add>, %324, %cst_103 [1] : vector<7x32xf32> to vector<7xf32>
    %326 = vector.shape_cast %325 : vector<7xf32> to vector<7x1xf32>
    %cst_104 = arith.constant 3.200000e+01 : f32
    %327 = vector.broadcast %cst_104 : f32 to vector<7x1xf32>
    %328 = arith.divf %326, %327 : vector<7x1xf32>
    %329 = vector.broadcast %321 : vector<7x1xf32> to vector<7x32xf32>
    %330 = arith.subf %315, %329 : vector<7x32xf32>
    %cst_105 = arith.constant 9.99999974E-6 : f32
    %331 = vector.broadcast %cst_105 : f32 to vector<7x1xf32>
    %332 = arith.addf %328, %331 : vector<7x1xf32>
    %333 = math.rsqrt %332 : vector<7x1xf32>
    %334 = vector.broadcast %333 : vector<7x1xf32> to vector<7x32xf32>
    %335 = arith.mulf %330, %334 : vector<7x32xf32>
    %336 = vector.broadcast %316 : vector<1x32xf32> to vector<7x32xf32>
    %337 = arith.mulf %335, %336 : vector<7x32xf32>
    %338 = vector.broadcast %317 : vector<1x32xf32> to vector<7x32xf32>
    %339 = arith.addf %337, %338 : vector<7x32xf32>
    %c704 = arith.constant 704 : index
    %c0_106 = arith.constant 0 : index
    %340 = vector.load %arg3[%c704, %c0_106] : memref<1336x256xbf16, #tpu.memory_space<vmem>>, vector<32x64xbf16>
    %341 = arith.truncf %339 : vector<7x32xf32> to vector<7x32xbf16>
    %cst_107 = arith.constant dense<0.000000e+00> : vector<7x64xf32>
    %342 = tpu.matmul %341, %340, %cst_107 {dimension_numbers = #tpu.dot_dimension_numbers<[1], [0], [0], [1], [0, 0, 1, 1], [], []>} : vector<7x32xbf16>, vector<32x64xbf16>, vector<7x64xf32> -> vector<7x64xf32>
    %c184 = arith.constant 184 : index
    %c0_108 = arith.constant 0 : index
    %343 = vector.load %arg4[%c184, %c0_108] : memref<264x128xf32, #tpu.memory_space<vmem>>, vector<1x64xf32>
    %344 = vector.broadcast %343 : vector<1x64xf32> to vector<7x64xf32>
    %345 = arith.addf %342, %344 : vector<7x64xf32>
    %cst_109 = arith.constant 0.000000e+00 : f32
    %346 = vector.broadcast %cst_109 : f32 to vector<7x64xf32>
    %347 = arith.maximumf %345, %346 : vector<7x64xf32>
    %c736 = arith.constant 736 : index
    %c0_110 = arith.constant 0 : index
    %348 = vector.load %arg3[%c736, %c0_110] : memref<1336x256xbf16, #tpu.memory_space<vmem>>, vector<64x32xbf16>
    %349 = arith.truncf %347 : vector<7x64xf32> to vector<7x64xbf16>
    %cst_111 = arith.constant dense<0.000000e+00> : vector<7x32xf32>
    %350 = tpu.matmul %349, %348, %cst_111 {dimension_numbers = #tpu.dot_dimension_numbers<[1], [0], [0], [1], [0, 0, 1, 1], [], []>} : vector<7x64xbf16>, vector<64x32xbf16>, vector<7x32xf32> -> vector<7x32xf32>
    %351 = arith.addf %339, %350 : vector<7x32xf32>
    %c192_112 = arith.constant 192 : index
    %c0_113 = arith.constant 0 : index
    %352 = vector.load %arg4[%c192_112, %c0_113] : memref<264x128xf32, #tpu.memory_space<vmem>>, vector<1x32xf32>
    %353 = vector.broadcast %352 : vector<1x32xf32> to vector<7x32xf32>
    %354 = arith.addf %351, %353 : vector<7x32xf32>
    %c202 = arith.constant 202 : index
    %c0_114 = arith.constant 0 : index
    %355 = vector.load %arg4[%c202, %c0_114] : memref<264x128xf32, #tpu.memory_space<vmem>>, vector<1x32xf32>
    %c210 = arith.constant 210 : index
    %c0_115 = arith.constant 0 : index
    %356 = vector.load %arg4[%c210, %c0_115] : memref<264x128xf32, #tpu.memory_space<vmem>>, vector<1x32xf32>
    %cst_116 = arith.constant dense<0.000000e+00> : vector<7xf32>
    %357 = vector.multi_reduction <add>, %354, %cst_116 [1] : vector<7x32xf32> to vector<7xf32>
    %358 = vector.shape_cast %357 : vector<7xf32> to vector<7x1xf32>
    %cst_117 = arith.constant 3.200000e+01 : f32
    %359 = vector.broadcast %cst_117 : f32 to vector<7x1xf32>
    %360 = arith.divf %358, %359 : vector<7x1xf32>
    %361 = vector.broadcast %360 : vector<7x1xf32> to vector<7x32xf32>
    %362 = arith.subf %354, %361 : vector<7x32xf32>
    %363 = arith.mulf %362, %362 : vector<7x32xf32>
    %cst_118 = arith.constant dense<0.000000e+00> : vector<7xf32>
    %364 = vector.multi_reduction <add>, %363, %cst_118 [1] : vector<7x32xf32> to vector<7xf32>
    %365 = vector.shape_cast %364 : vector<7xf32> to vector<7x1xf32>
    %cst_119 = arith.constant 3.200000e+01 : f32
    %366 = vector.broadcast %cst_119 : f32 to vector<7x1xf32>
    %367 = arith.divf %365, %366 : vector<7x1xf32>
    %368 = vector.broadcast %360 : vector<7x1xf32> to vector<7x32xf32>
    %369 = arith.subf %354, %368 : vector<7x32xf32>
    %cst_120 = arith.constant 9.99999974E-6 : f32
    %370 = vector.broadcast %cst_120 : f32 to vector<7x1xf32>
    %371 = arith.addf %367, %370 : vector<7x1xf32>
    %372 = math.rsqrt %371 : vector<7x1xf32>
    %373 = vector.broadcast %372 : vector<7x1xf32> to vector<7x32xf32>
    %374 = arith.mulf %369, %373 : vector<7x32xf32>
    %375 = vector.broadcast %355 : vector<1x32xf32> to vector<7x32xf32>
    %376 = arith.mulf %374, %375 : vector<7x32xf32>
    %377 = vector.broadcast %356 : vector<1x32xf32> to vector<7x32xf32>
    %378 = arith.addf %376, %377 : vector<7x32xf32>
    %379 = arith.addf %153, %154 : vector<16x32xf32>
    %380 = arith.addf %378, %156 : vector<7x32xf32>
    %c576 = arith.constant 576 : index
    %c0_121 = arith.constant 0 : index
    %381 = vector.load %arg3[%c576, %c0_121] : memref<1336x256xbf16, #tpu.memory_space<vmem>>, vector<32x96xbf16>
    %c152 = arith.constant 152 : index
    %c0_122 = arith.constant 0 : index
    %382 = vector.load %arg4[%c152, %c0_122] : memref<264x128xf32, #tpu.memory_space<vmem>>, vector<1x96xf32>
    %383 = vector.extract_strided_slice %381 {offsets = [0, 0], sizes = [32, 32], strides = [1, 1]} : vector<32x96xbf16> to vector<32x32xbf16>
    %384 = arith.truncf %379 : vector<16x32xf32> to vector<16x32xbf16>
    %cst_123 = arith.constant dense<0.000000e+00> : vector<16x32xf32>
    %385 = tpu.matmul %384, %383, %cst_123 {dimension_numbers = #tpu.dot_dimension_numbers<[1], [0], [0], [1], [0, 0, 1, 1], [], []>} : vector<16x32xbf16>, vector<32x32xbf16>, vector<16x32xf32> -> vector<16x32xf32>
    %386 = vector.extract_strided_slice %382 {offsets = [0, 0], sizes = [1, 32], strides = [1, 1]} : vector<1x96xf32> to vector<1x32xf32>
    %387 = vector.broadcast %386 : vector<1x32xf32> to vector<16x32xf32>
    %388 = arith.addf %385, %387 : vector<16x32xf32>
    %389 = vector.extract_strided_slice %381 {offsets = [0, 32], sizes = [32, 32], strides = [1, 1]} : vector<32x96xbf16> to vector<32x32xbf16>
    %390 = arith.truncf %380 : vector<7x32xf32> to vector<7x32xbf16>
    %cst_124 = arith.constant dense<0.000000e+00> : vector<7x32xf32>
    %391 = tpu.matmul %390, %389, %cst_124 {dimension_numbers = #tpu.dot_dimension_numbers<[1], [0], [0], [1], [0, 0, 1, 1], [], []>} : vector<7x32xbf16>, vector<32x32xbf16>, vector<7x32xf32> -> vector<7x32xf32>
    %392 = vector.extract_strided_slice %382 {offsets = [0, 32], sizes = [1, 32], strides = [1, 1]} : vector<1x96xf32> to vector<1x32xf32>
    %393 = vector.broadcast %392 : vector<1x32xf32> to vector<7x32xf32>
    %394 = arith.addf %391, %393 : vector<7x32xf32>
    %395 = vector.extract_strided_slice %381 {offsets = [0, 64], sizes = [32, 32], strides = [1, 1]} : vector<32x96xbf16> to vector<32x32xbf16>
    %396 = arith.truncf %378 : vector<7x32xf32> to vector<7x32xbf16>
    %cst_125 = arith.constant dense<0.000000e+00> : vector<7x32xf32>
    %397 = tpu.matmul %396, %395, %cst_125 {dimension_numbers = #tpu.dot_dimension_numbers<[1], [0], [0], [1], [0, 0, 1, 1], [], []>} : vector<7x32xbf16>, vector<32x32xbf16>, vector<7x32xf32> -> vector<7x32xf32>
    %398 = vector.extract_strided_slice %382 {offsets = [0, 64], sizes = [1, 32], strides = [1, 1]} : vector<1x96xf32> to vector<1x32xf32>
    %399 = vector.broadcast %398 : vector<1x32xf32> to vector<7x32xf32>
    %400 = arith.addf %397, %399 : vector<7x32xf32>
    %c608 = arith.constant 608 : index
    %c0_126 = arith.constant 0 : index
    %401 = vector.load %arg3[%c608, %c0_126] : memref<1336x256xbf16, #tpu.memory_space<vmem>>, vector<32x32xbf16>
    %c160 = arith.constant 160 : index
    %c0_127 = arith.constant 0 : index
    %402 = vector.load %arg4[%c160, %c0_127] : memref<264x128xf32, #tpu.memory_space<vmem>>, vector<1x32xf32>
    %403 = vector.extract_strided_slice %388 {offsets = [0, 0], sizes = [16, 16], strides = [1, 1]} : vector<16x32xf32> to vector<16x16xf32>
    %404 = vector.extract_strided_slice %394 {offsets = [0, 0], sizes = [7, 16], strides = [1, 1]} : vector<7x32xf32> to vector<7x16xf32>
    %405 = arith.truncf %403 : vector<16x16xf32> to vector<16x16xbf16>
    %406 = arith.truncf %404 : vector<7x16xf32> to vector<7x16xbf16>
    %cst_128 = arith.constant dense<0.000000e+00> : vector<16x7xf32>
    %407 = tpu.matmul %405, %406, %cst_128 {dimension_numbers = #tpu.dot_dimension_numbers<[1], [1], [0], [0], [0, 0, 1, 0], [], []>} : vector<16x16xbf16>, vector<7x16xbf16>, vector<16x7xf32> -> vector<16x7xf32>
    %cst_129 = arith.constant 2.500000e-01 : f32
    %408 = vector.broadcast %cst_129 : f32 to vector<16x7xf32>
    %409 = arith.mulf %407, %408 : vector<16x7xf32>
    %cst_130 = arith.constant dense<0xFF800000> : vector<16xf32>
    %410 = vector.multi_reduction <maximumf>, %409, %cst_130 [1] : vector<16x7xf32> to vector<16xf32>
    %411 = vector.shape_cast %410 : vector<16xf32> to vector<16x1xf32>
    %412 = vector.broadcast %411 : vector<16x1xf32> to vector<16x7xf32>
    %413 = arith.subf %409, %412 : vector<16x7xf32>
    %414 = math.exp %413 : vector<16x7xf32>
    %cst_131 = arith.constant dense<0.000000e+00> : vector<16xf32>
    %415 = vector.multi_reduction <add>, %414, %cst_131 [1] : vector<16x7xf32> to vector<16xf32>
    %416 = vector.shape_cast %415 : vector<16xf32> to vector<16x1xf32>
    %417 = vector.broadcast %416 : vector<16x1xf32> to vector<16x7xf32>
    %418 = arith.divf %414, %417 : vector<16x7xf32>
    %419 = vector.extract_strided_slice %400 {offsets = [0, 0], sizes = [7, 16], strides = [1, 1]} : vector<7x32xf32> to vector<7x16xf32>
    %420 = arith.truncf %418 : vector<16x7xf32> to vector<16x7xbf16>
    %421 = arith.truncf %419 : vector<7x16xf32> to vector<7x16xbf16>
    %cst_132 = arith.constant dense<0.000000e+00> : vector<16x16xf32>
    %422 = tpu.matmul %420, %421, %cst_132 {dimension_numbers = #tpu.dot_dimension_numbers<[1], [0], [0], [1], [0, 0, 1, 1], [], []>} : vector<16x7xbf16>, vector<7x16xbf16>, vector<16x16xf32> -> vector<16x16xf32>
    %423 = vector.extract_strided_slice %401 {offsets = [0, 0], sizes = [16, 32], strides = [1, 1]} : vector<32x32xbf16> to vector<16x32xbf16>
    %424 = arith.truncf %422 : vector<16x16xf32> to vector<16x16xbf16>
    %cst_133 = arith.constant dense<0.000000e+00> : vector<16x32xf32>
    %425 = tpu.matmul %424, %423, %cst_133 {dimension_numbers = #tpu.dot_dimension_numbers<[1], [0], [0], [1], [0, 0, 1, 1], [], []>} : vector<16x16xbf16>, vector<16x32xbf16>, vector<16x32xf32> -> vector<16x32xf32>
    %426 = vector.extract_strided_slice %388 {offsets = [0, 16], sizes = [16, 16], strides = [1, 1]} : vector<16x32xf32> to vector<16x16xf32>
    %427 = vector.extract_strided_slice %394 {offsets = [0, 16], sizes = [7, 16], strides = [1, 1]} : vector<7x32xf32> to vector<7x16xf32>
    %428 = arith.truncf %426 : vector<16x16xf32> to vector<16x16xbf16>
    %429 = arith.truncf %427 : vector<7x16xf32> to vector<7x16xbf16>
    %cst_134 = arith.constant dense<0.000000e+00> : vector<16x7xf32>
    %430 = tpu.matmul %428, %429, %cst_134 {dimension_numbers = #tpu.dot_dimension_numbers<[1], [1], [0], [0], [0, 0, 1, 0], [], []>} : vector<16x16xbf16>, vector<7x16xbf16>, vector<16x7xf32> -> vector<16x7xf32>
    %cst_135 = arith.constant 2.500000e-01 : f32
    %431 = vector.broadcast %cst_135 : f32 to vector<16x7xf32>
    %432 = arith.mulf %430, %431 : vector<16x7xf32>
    %cst_136 = arith.constant dense<0xFF800000> : vector<16xf32>
    %433 = vector.multi_reduction <maximumf>, %432, %cst_136 [1] : vector<16x7xf32> to vector<16xf32>
    %434 = vector.shape_cast %433 : vector<16xf32> to vector<16x1xf32>
    %435 = vector.broadcast %434 : vector<16x1xf32> to vector<16x7xf32>
    %436 = arith.subf %432, %435 : vector<16x7xf32>
    %437 = math.exp %436 : vector<16x7xf32>
    %cst_137 = arith.constant dense<0.000000e+00> : vector<16xf32>
    %438 = vector.multi_reduction <add>, %437, %cst_137 [1] : vector<16x7xf32> to vector<16xf32>
    %439 = vector.shape_cast %438 : vector<16xf32> to vector<16x1xf32>
    %440 = vector.broadcast %439 : vector<16x1xf32> to vector<16x7xf32>
    %441 = arith.divf %437, %440 : vector<16x7xf32>
    %442 = vector.extract_strided_slice %400 {offsets = [0, 16], sizes = [7, 16], strides = [1, 1]} : vector<7x32xf32> to vector<7x16xf32>
    %443 = arith.truncf %441 : vector<16x7xf32> to vector<16x7xbf16>
    %444 = arith.truncf %442 : vector<7x16xf32> to vector<7x16xbf16>
    %cst_138 = arith.constant dense<0.000000e+00> : vector<16x16xf32>
    %445 = tpu.matmul %443, %444, %cst_138 {dimension_numbers = #tpu.dot_dimension_numbers<[1], [0], [0], [1], [0, 0, 1, 1], [], []>} : vector<16x7xbf16>, vector<7x16xbf16>, vector<16x16xf32> -> vector<16x16xf32>
    %446 = vector.extract_strided_slice %401 {offsets = [16, 0], sizes = [16, 32], strides = [1, 1]} : vector<32x32xbf16> to vector<16x32xbf16>
    %447 = arith.truncf %445 : vector<16x16xf32> to vector<16x16xbf16>
    %cst_139 = arith.constant dense<0.000000e+00> : vector<16x32xf32>
    %448 = tpu.matmul %447, %446, %cst_139 {dimension_numbers = #tpu.dot_dimension_numbers<[1], [0], [0], [1], [0, 0, 1, 1], [], []>} : vector<16x16xbf16>, vector<16x32xbf16>, vector<16x32xf32> -> vector<16x32xf32>
    %449 = arith.addf %425, %448 : vector<16x32xf32>
    %450 = vector.broadcast %402 : vector<1x32xf32> to vector<16x32xf32>
    %451 = arith.addf %449, %450 : vector<16x32xf32>
    %452 = arith.addf %153, %451 : vector<16x32xf32>
    %c203 = arith.constant 203 : index
    %c0_140 = arith.constant 0 : index
    %453 = vector.load %arg4[%c203, %c0_140] : memref<264x128xf32, #tpu.memory_space<vmem>>, vector<1x32xf32>
    %c211 = arith.constant 211 : index
    %c0_141 = arith.constant 0 : index
    %454 = vector.load %arg4[%c211, %c0_141] : memref<264x128xf32, #tpu.memory_space<vmem>>, vector<1x32xf32>
    %cst_142 = arith.constant dense<0.000000e+00> : vector<16xf32>
    %455 = vector.multi_reduction <add>, %452, %cst_142 [1] : vector<16x32xf32> to vector<16xf32>
    %456 = vector.shape_cast %455 : vector<16xf32> to vector<16x1xf32>
    %cst_143 = arith.constant 3.200000e+01 : f32
    %457 = vector.broadcast %cst_143 : f32 to vector<16x1xf32>
    %458 = arith.divf %456, %457 : vector<16x1xf32>
    %459 = vector.broadcast %458 : vector<16x1xf32> to vector<16x32xf32>
    %460 = arith.subf %452, %459 : vector<16x32xf32>
    %461 = arith.mulf %460, %460 : vector<16x32xf32>
    %cst_144 = arith.constant dense<0.000000e+00> : vector<16xf32>
    %462 = vector.multi_reduction <add>, %461, %cst_144 [1] : vector<16x32xf32> to vector<16xf32>
    %463 = vector.shape_cast %462 : vector<16xf32> to vector<16x1xf32>
    %cst_145 = arith.constant 3.200000e+01 : f32
    %464 = vector.broadcast %cst_145 : f32 to vector<16x1xf32>
    %465 = arith.divf %463, %464 : vector<16x1xf32>
    %466 = vector.broadcast %458 : vector<16x1xf32> to vector<16x32xf32>
    %467 = arith.subf %452, %466 : vector<16x32xf32>
    %cst_146 = arith.constant 9.99999974E-6 : f32
    %468 = vector.broadcast %cst_146 : f32 to vector<16x1xf32>
    %469 = arith.addf %465, %468 : vector<16x1xf32>
    %470 = math.rsqrt %469 : vector<16x1xf32>
    %471 = vector.broadcast %470 : vector<16x1xf32> to vector<16x32xf32>
    %472 = arith.mulf %467, %471 : vector<16x32xf32>
    %473 = vector.broadcast %453 : vector<1x32xf32> to vector<16x32xf32>
    %474 = arith.mulf %472, %473 : vector<16x32xf32>
    %475 = vector.broadcast %454 : vector<1x32xf32> to vector<16x32xf32>
    %476 = arith.addf %474, %475 : vector<16x32xf32>
    %477 = arith.addf %378, %156 : vector<7x32xf32>
    %478 = arith.addf %476, %154 : vector<16x32xf32>
    %c640 = arith.constant 640 : index
    %c0_147 = arith.constant 0 : index
    %479 = vector.load %arg3[%c640, %c0_147] : memref<1336x256xbf16, #tpu.memory_space<vmem>>, vector<32x96xbf16>
    %c168 = arith.constant 168 : index
    %c0_148 = arith.constant 0 : index
    %480 = vector.load %arg4[%c168, %c0_148] : memref<264x128xf32, #tpu.memory_space<vmem>>, vector<1x96xf32>
    %481 = vector.extract_strided_slice %479 {offsets = [0, 0], sizes = [32, 32], strides = [1, 1]} : vector<32x96xbf16> to vector<32x32xbf16>
    %482 = arith.truncf %477 : vector<7x32xf32> to vector<7x32xbf16>
    %cst_149 = arith.constant dense<0.000000e+00> : vector<7x32xf32>
    %483 = tpu.matmul %482, %481, %cst_149 {dimension_numbers = #tpu.dot_dimension_numbers<[1], [0], [0], [1], [0, 0, 1, 1], [], []>} : vector<7x32xbf16>, vector<32x32xbf16>, vector<7x32xf32> -> vector<7x32xf32>
    %484 = vector.extract_strided_slice %480 {offsets = [0, 0], sizes = [1, 32], strides = [1, 1]} : vector<1x96xf32> to vector<1x32xf32>
    %485 = vector.broadcast %484 : vector<1x32xf32> to vector<7x32xf32>
    %486 = arith.addf %483, %485 : vector<7x32xf32>
    %487 = vector.extract_strided_slice %479 {offsets = [0, 32], sizes = [32, 32], strides = [1, 1]} : vector<32x96xbf16> to vector<32x32xbf16>
    %488 = arith.truncf %478 : vector<16x32xf32> to vector<16x32xbf16>
    %cst_150 = arith.constant dense<0.000000e+00> : vector<16x32xf32>
    %489 = tpu.matmul %488, %487, %cst_150 {dimension_numbers = #tpu.dot_dimension_numbers<[1], [0], [0], [1], [0, 0, 1, 1], [], []>} : vector<16x32xbf16>, vector<32x32xbf16>, vector<16x32xf32> -> vector<16x32xf32>
    %490 = vector.extract_strided_slice %480 {offsets = [0, 32], sizes = [1, 32], strides = [1, 1]} : vector<1x96xf32> to vector<1x32xf32>
    %491 = vector.broadcast %490 : vector<1x32xf32> to vector<16x32xf32>
    %492 = arith.addf %489, %491 : vector<16x32xf32>
    %493 = vector.extract_strided_slice %479 {offsets = [0, 64], sizes = [32, 32], strides = [1, 1]} : vector<32x96xbf16> to vector<32x32xbf16>
    %494 = arith.truncf %476 : vector<16x32xf32> to vector<16x32xbf16>
    %cst_151 = arith.constant dense<0.000000e+00> : vector<16x32xf32>
    %495 = tpu.matmul %494, %493, %cst_151 {dimension_numbers = #tpu.dot_dimension_numbers<[1], [0], [0], [1], [0, 0, 1, 1], [], []>} : vector<16x32xbf16>, vector<32x32xbf16>, vector<16x32xf32> -> vector<16x32xf32>
    %496 = vector.extract_strided_slice %480 {offsets = [0, 64], sizes = [1, 32], strides = [1, 1]} : vector<1x96xf32> to vector<1x32xf32>
    %497 = vector.broadcast %496 : vector<1x32xf32> to vector<16x32xf32>
    %498 = arith.addf %495, %497 : vector<16x32xf32>
    %c672 = arith.constant 672 : index
    %c0_152 = arith.constant 0 : index
    %499 = vector.load %arg3[%c672, %c0_152] : memref<1336x256xbf16, #tpu.memory_space<vmem>>, vector<32x32xbf16>
    %c176 = arith.constant 176 : index
    %c0_153 = arith.constant 0 : index
    %500 = vector.load %arg4[%c176, %c0_153] : memref<264x128xf32, #tpu.memory_space<vmem>>, vector<1x32xf32>
    %501 = vector.extract_strided_slice %486 {offsets = [0, 0], sizes = [7, 16], strides = [1, 1]} : vector<7x32xf32> to vector<7x16xf32>
    %502 = vector.extract_strided_slice %492 {offsets = [0, 0], sizes = [16, 16], strides = [1, 1]} : vector<16x32xf32> to vector<16x16xf32>
    %503 = arith.truncf %501 : vector<7x16xf32> to vector<7x16xbf16>
    %504 = arith.truncf %502 : vector<16x16xf32> to vector<16x16xbf16>
    %cst_154 = arith.constant dense<0.000000e+00> : vector<7x16xf32>
    %505 = tpu.matmul %503, %504, %cst_154 {dimension_numbers = #tpu.dot_dimension_numbers<[1], [1], [0], [0], [0, 0, 1, 0], [], []>} : vector<7x16xbf16>, vector<16x16xbf16>, vector<7x16xf32> -> vector<7x16xf32>
    %cst_155 = arith.constant 2.500000e-01 : f32
    %506 = vector.broadcast %cst_155 : f32 to vector<7x16xf32>
    %507 = arith.mulf %505, %506 : vector<7x16xf32>
    %cst_156 = arith.constant dense<0xFF800000> : vector<7xf32>
    %508 = vector.multi_reduction <maximumf>, %507, %cst_156 [1] : vector<7x16xf32> to vector<7xf32>
    %509 = vector.shape_cast %508 : vector<7xf32> to vector<7x1xf32>
    %510 = vector.broadcast %509 : vector<7x1xf32> to vector<7x16xf32>
    %511 = arith.subf %507, %510 : vector<7x16xf32>
    %512 = math.exp %511 : vector<7x16xf32>
    %cst_157 = arith.constant dense<0.000000e+00> : vector<7xf32>
    %513 = vector.multi_reduction <add>, %512, %cst_157 [1] : vector<7x16xf32> to vector<7xf32>
    %514 = vector.shape_cast %513 : vector<7xf32> to vector<7x1xf32>
    %515 = vector.broadcast %514 : vector<7x1xf32> to vector<7x16xf32>
    %516 = arith.divf %512, %515 : vector<7x16xf32>
    %517 = vector.extract_strided_slice %498 {offsets = [0, 0], sizes = [16, 16], strides = [1, 1]} : vector<16x32xf32> to vector<16x16xf32>
    %518 = arith.truncf %516 : vector<7x16xf32> to vector<7x16xbf16>
    %519 = arith.truncf %517 : vector<16x16xf32> to vector<16x16xbf16>
    %cst_158 = arith.constant dense<0.000000e+00> : vector<7x16xf32>
    %520 = tpu.matmul %518, %519, %cst_158 {dimension_numbers = #tpu.dot_dimension_numbers<[1], [0], [0], [1], [0, 0, 1, 1], [], []>} : vector<7x16xbf16>, vector<16x16xbf16>, vector<7x16xf32> -> vector<7x16xf32>
    %521 = vector.extract_strided_slice %499 {offsets = [0, 0], sizes = [16, 32], strides = [1, 1]} : vector<32x32xbf16> to vector<16x32xbf16>
    %522 = arith.truncf %520 : vector<7x16xf32> to vector<7x16xbf16>
    %cst_159 = arith.constant dense<0.000000e+00> : vector<7x32xf32>
    %523 = tpu.matmul %522, %521, %cst_159 {dimension_numbers = #tpu.dot_dimension_numbers<[1], [0], [0], [1], [0, 0, 1, 1], [], []>} : vector<7x16xbf16>, vector<16x32xbf16>, vector<7x32xf32> -> vector<7x32xf32>
    %524 = vector.extract_strided_slice %486 {offsets = [0, 16], sizes = [7, 16], strides = [1, 1]} : vector<7x32xf32> to vector<7x16xf32>
    %525 = vector.extract_strided_slice %492 {offsets = [0, 16], sizes = [16, 16], strides = [1, 1]} : vector<16x32xf32> to vector<16x16xf32>
    %526 = arith.truncf %524 : vector<7x16xf32> to vector<7x16xbf16>
    %527 = arith.truncf %525 : vector<16x16xf32> to vector<16x16xbf16>
    %cst_160 = arith.constant dense<0.000000e+00> : vector<7x16xf32>
    %528 = tpu.matmul %526, %527, %cst_160 {dimension_numbers = #tpu.dot_dimension_numbers<[1], [1], [0], [0], [0, 0, 1, 0], [], []>} : vector<7x16xbf16>, vector<16x16xbf16>, vector<7x16xf32> -> vector<7x16xf32>
    %cst_161 = arith.constant 2.500000e-01 : f32
    %529 = vector.broadcast %cst_161 : f32 to vector<7x16xf32>
    %530 = arith.mulf %528, %529 : vector<7x16xf32>
    %cst_162 = arith.constant dense<0xFF800000> : vector<7xf32>
    %531 = vector.multi_reduction <maximumf>, %530, %cst_162 [1] : vector<7x16xf32> to vector<7xf32>
    %532 = vector.shape_cast %531 : vector<7xf32> to vector<7x1xf32>
    %533 = vector.broadcast %532 : vector<7x1xf32> to vector<7x16xf32>
    %534 = arith.subf %530, %533 : vector<7x16xf32>
    %535 = math.exp %534 : vector<7x16xf32>
    %cst_163 = arith.constant dense<0.000000e+00> : vector<7xf32>
    %536 = vector.multi_reduction <add>, %535, %cst_163 [1] : vector<7x16xf32> to vector<7xf32>
    %537 = vector.shape_cast %536 : vector<7xf32> to vector<7x1xf32>
    %538 = vector.broadcast %537 : vector<7x1xf32> to vector<7x16xf32>
    %539 = arith.divf %535, %538 : vector<7x16xf32>
    %540 = vector.extract_strided_slice %498 {offsets = [0, 16], sizes = [16, 16], strides = [1, 1]} : vector<16x32xf32> to vector<16x16xf32>
    %541 = arith.truncf %539 : vector<7x16xf32> to vector<7x16xbf16>
    %542 = arith.truncf %540 : vector<16x16xf32> to vector<16x16xbf16>
    %cst_164 = arith.constant dense<0.000000e+00> : vector<7x16xf32>
    %543 = tpu.matmul %541, %542, %cst_164 {dimension_numbers = #tpu.dot_dimension_numbers<[1], [0], [0], [1], [0, 0, 1, 1], [], []>} : vector<7x16xbf16>, vector<16x16xbf16>, vector<7x16xf32> -> vector<7x16xf32>
    %544 = vector.extract_strided_slice %499 {offsets = [16, 0], sizes = [16, 32], strides = [1, 1]} : vector<32x32xbf16> to vector<16x32xbf16>
    %545 = arith.truncf %543 : vector<7x16xf32> to vector<7x16xbf16>
    %cst_165 = arith.constant dense<0.000000e+00> : vector<7x32xf32>
    %546 = tpu.matmul %545, %544, %cst_165 {dimension_numbers = #tpu.dot_dimension_numbers<[1], [0], [0], [1], [0, 0, 1, 1], [], []>} : vector<7x16xbf16>, vector<16x32xbf16>, vector<7x32xf32> -> vector<7x32xf32>
    %547 = arith.addf %523, %546 : vector<7x32xf32>
    %548 = vector.broadcast %500 : vector<1x32xf32> to vector<7x32xf32>
    %549 = arith.addf %547, %548 : vector<7x32xf32>
    %550 = arith.addf %378, %549 : vector<7x32xf32>
    %c204 = arith.constant 204 : index
    %c0_166 = arith.constant 0 : index
    %551 = vector.load %arg4[%c204, %c0_166] : memref<264x128xf32, #tpu.memory_space<vmem>>, vector<1x32xf32>
    %c212 = arith.constant 212 : index
    %c0_167 = arith.constant 0 : index
    %552 = vector.load %arg4[%c212, %c0_167] : memref<264x128xf32, #tpu.memory_space<vmem>>, vector<1x32xf32>
    %cst_168 = arith.constant dense<0.000000e+00> : vector<7xf32>
    %553 = vector.multi_reduction <add>, %550, %cst_168 [1] : vector<7x32xf32> to vector<7xf32>
    %554 = vector.shape_cast %553 : vector<7xf32> to vector<7x1xf32>
    %cst_169 = arith.constant 3.200000e+01 : f32
    %555 = vector.broadcast %cst_169 : f32 to vector<7x1xf32>
    %556 = arith.divf %554, %555 : vector<7x1xf32>
    %557 = vector.broadcast %556 : vector<7x1xf32> to vector<7x32xf32>
    %558 = arith.subf %550, %557 : vector<7x32xf32>
    %559 = arith.mulf %558, %558 : vector<7x32xf32>
    %cst_170 = arith.constant dense<0.000000e+00> : vector<7xf32>
    %560 = vector.multi_reduction <add>, %559, %cst_170 [1] : vector<7x32xf32> to vector<7xf32>
    %561 = vector.shape_cast %560 : vector<7xf32> to vector<7x1xf32>
    %cst_171 = arith.constant 3.200000e+01 : f32
    %562 = vector.broadcast %cst_171 : f32 to vector<7x1xf32>
    %563 = arith.divf %561, %562 : vector<7x1xf32>
    %564 = vector.broadcast %556 : vector<7x1xf32> to vector<7x32xf32>
    %565 = arith.subf %550, %564 : vector<7x32xf32>
    %cst_172 = arith.constant 9.99999974E-6 : f32
    %566 = vector.broadcast %cst_172 : f32 to vector<7x1xf32>
    %567 = arith.addf %563, %566 : vector<7x1xf32>
    %568 = math.rsqrt %567 : vector<7x1xf32>
    %569 = vector.broadcast %568 : vector<7x1xf32> to vector<7x32xf32>
    %570 = arith.mulf %565, %569 : vector<7x32xf32>
    %571 = vector.broadcast %551 : vector<1x32xf32> to vector<7x32xf32>
    %572 = arith.mulf %570, %571 : vector<7x32xf32>
    %573 = vector.broadcast %552 : vector<1x32xf32> to vector<7x32xf32>
    %574 = arith.addf %572, %573 : vector<7x32xf32>
    %575 = vector.extract_strided_slice %574 {offsets = [0, 0], sizes = [1, 32], strides = [1, 1]} : vector<7x32xf32> to vector<1x32xf32>
    %576 = vector.extract_strided_slice %574 {offsets = [1, 0], sizes = [4, 32], strides = [1, 1]} : vector<7x32xf32> to vector<4x32xf32>
    %c800 = arith.constant 800 : index
    %c0_173 = arith.constant 0 : index
    %577 = vector.load %arg3[%c800, %c0_173] : memref<1336x256xbf16, #tpu.memory_space<vmem>>, vector<32x32xbf16>
    %578 = arith.truncf %476 : vector<16x32xf32> to vector<16x32xbf16>
    %cst_174 = arith.constant dense<0.000000e+00> : vector<32x16xf32>
    %579 = tpu.matmul %577, %578, %cst_174 {dimension_numbers = #tpu.dot_dimension_numbers<[1], [1], [0], [0], [0, 0, 1, 0], [], []>} : vector<32x32xbf16>, vector<16x32xbf16>, vector<32x16xf32> -> vector<32x16xf32>
    %c848 = arith.constant 848 : index
    %c0_175 = arith.constant 0 : index
    %580 = vector.load %arg3[%c848, %c0_175] : memref<1336x256xbf16, #tpu.memory_space<vmem>>, vector<16x64xbf16>
    %581 = vector.extract_strided_slice %579 {offsets = [0, 0], sizes = [8, 16], strides = [1, 1]} : vector<32x16xf32> to vector<8x16xf32>
    %582 = arith.truncf %581 : vector<8x16xf32> to vector<8x16xbf16>
    %cst_176 = arith.constant dense<0.000000e+00> : vector<8x64xf32>
    %583 = tpu.matmul %582, %580, %cst_176 {dimension_numbers = #tpu.dot_dimension_numbers<[1], [0], [0], [1], [0, 0, 1, 1], [], []>} : vector<8x16xbf16>, vector<16x64xbf16>, vector<8x64xf32> -> vector<8x64xf32>
    %c864 = arith.constant 864 : index
    %c0_177 = arith.constant 0 : index
    %584 = vector.load %arg3[%c864, %c0_177] : memref<1336x256xbf16, #tpu.memory_space<vmem>>, vector<16x64xbf16>
    %585 = vector.extract_strided_slice %579 {offsets = [8, 0], sizes = [8, 16], strides = [1, 1]} : vector<32x16xf32> to vector<8x16xf32>
    %586 = arith.truncf %585 : vector<8x16xf32> to vector<8x16xbf16>
    %cst_178 = arith.constant dense<0.000000e+00> : vector<8x64xf32>
    %587 = tpu.matmul %586, %584, %cst_178 {dimension_numbers = #tpu.dot_dimension_numbers<[1], [0], [0], [1], [0, 0, 1, 1], [], []>} : vector<8x16xbf16>, vector<16x64xbf16>, vector<8x64xf32> -> vector<8x64xf32>
    %588 = arith.addf %583, %587 : vector<8x64xf32>
    %c880 = arith.constant 880 : index
    %c0_179 = arith.constant 0 : index
    %589 = vector.load %arg3[%c880, %c0_179] : memref<1336x256xbf16, #tpu.memory_space<vmem>>, vector<16x64xbf16>
    %590 = vector.extract_strided_slice %579 {offsets = [16, 0], sizes = [8, 16], strides = [1, 1]} : vector<32x16xf32> to vector<8x16xf32>
    %591 = arith.truncf %590 : vector<8x16xf32> to vector<8x16xbf16>
    %cst_180 = arith.constant dense<0.000000e+00> : vector<8x64xf32>
    %592 = tpu.matmul %591, %589, %cst_180 {dimension_numbers = #tpu.dot_dimension_numbers<[1], [0], [0], [1], [0, 0, 1, 1], [], []>} : vector<8x16xbf16>, vector<16x64xbf16>, vector<8x64xf32> -> vector<8x64xf32>
    %593 = arith.addf %588, %592 : vector<8x64xf32>
    %c896 = arith.constant 896 : index
    %c0_181 = arith.constant 0 : index
    %594 = vector.load %arg3[%c896, %c0_181] : memref<1336x256xbf16, #tpu.memory_space<vmem>>, vector<16x64xbf16>
    %595 = vector.extract_strided_slice %579 {offsets = [24, 0], sizes = [8, 16], strides = [1, 1]} : vector<32x16xf32> to vector<8x16xf32>
    %596 = arith.truncf %595 : vector<8x16xf32> to vector<8x16xbf16>
    %cst_182 = arith.constant dense<0.000000e+00> : vector<8x64xf32>
    %597 = tpu.matmul %596, %594, %cst_182 {dimension_numbers = #tpu.dot_dimension_numbers<[1], [0], [0], [1], [0, 0, 1, 1], [], []>} : vector<8x16xbf16>, vector<16x64xbf16>, vector<8x64xf32> -> vector<8x64xf32>
    %598 = arith.addf %593, %597 : vector<8x64xf32>
    %c216 = arith.constant 216 : index
    %c0_183 = arith.constant 0 : index
    %599 = vector.load %arg4[%c216, %c0_183] : memref<264x128xf32, #tpu.memory_space<vmem>>, vector<8x1xf32>
    %600 = vector.broadcast %599 : vector<8x1xf32> to vector<8x64xf32>
    %601 = arith.addf %598, %600 : vector<8x64xf32>
    %602 = arith.mulf %601, %601 : vector<8x64xf32>
    %603 = arith.mulf %601, %602 : vector<8x64xf32>
    %cst_184 = arith.constant 4.471500e-02 : f32
    %604 = vector.broadcast %cst_184 : f32 to vector<8x64xf32>
    %605 = arith.mulf %604, %603 : vector<8x64xf32>
    %606 = arith.addf %601, %605 : vector<8x64xf32>
    %cst_185 = arith.constant 0.797884583 : f32
    %607 = vector.broadcast %cst_185 : f32 to vector<8x64xf32>
    %608 = arith.mulf %607, %606 : vector<8x64xf32>
    %609 = math.tanh %608 : vector<8x64xf32>
    %cst_186 = arith.constant 1.000000e+00 : f32
    %610 = vector.broadcast %cst_186 : f32 to vector<8x64xf32>
    %611 = arith.addf %610, %609 : vector<8x64xf32>
    %cst_187 = arith.constant 5.000000e-01 : f32
    %612 = vector.broadcast %cst_187 : f32 to vector<8x64xf32>
    %613 = arith.mulf %612, %611 : vector<8x64xf32>
    %614 = arith.mulf %601, %613 : vector<8x64xf32>
    %c832 = arith.constant 832 : index
    %c0_188 = arith.constant 0 : index
    %615 = vector.load %arg3[%c832, %c0_188] : memref<1336x256xbf16, #tpu.memory_space<vmem>>, vector<16x8xbf16>
    %616 = arith.truncf %614 : vector<8x64xf32> to vector<8x64xbf16>
    %cst_189 = arith.constant dense<0.000000e+00> : vector<16x64xf32>
    %617 = tpu.matmul %615, %616, %cst_189 {dimension_numbers = #tpu.dot_dimension_numbers<[1], [0], [0], [1], [0, 0, 1, 1], [], []>} : vector<16x8xbf16>, vector<8x64xbf16>, vector<16x64xf32> -> vector<16x64xf32>
    %c912 = arith.constant 912 : index
    %c0_190 = arith.constant 0 : index
    %618 = vector.load %arg3[%c912, %c0_190] : memref<1336x256xbf16, #tpu.memory_space<vmem>>, vector<64x256xbf16>
    %619 = vector.extract_strided_slice %617 {offsets = [0, 0], sizes = [4, 64], strides = [1, 1]} : vector<16x64xf32> to vector<4x64xf32>
    %620 = arith.truncf %619 : vector<4x64xf32> to vector<4x64xbf16>
    %cst_191 = arith.constant dense<0.000000e+00> : vector<4x256xf32>
    %621 = tpu.matmul %620, %618, %cst_191 {dimension_numbers = #tpu.dot_dimension_numbers<[1], [0], [0], [1], [0, 0, 1, 1], [], []>} : vector<4x64xbf16>, vector<64x256xbf16>, vector<4x256xf32> -> vector<4x256xf32>
    %c976 = arith.constant 976 : index
    %c0_192 = arith.constant 0 : index
    %622 = vector.load %arg3[%c976, %c0_192] : memref<1336x256xbf16, #tpu.memory_space<vmem>>, vector<64x256xbf16>
    %623 = vector.extract_strided_slice %617 {offsets = [4, 0], sizes = [4, 64], strides = [1, 1]} : vector<16x64xf32> to vector<4x64xf32>
    %624 = arith.truncf %623 : vector<4x64xf32> to vector<4x64xbf16>
    %cst_193 = arith.constant dense<0.000000e+00> : vector<4x256xf32>
    %625 = tpu.matmul %624, %622, %cst_193 {dimension_numbers = #tpu.dot_dimension_numbers<[1], [0], [0], [1], [0, 0, 1, 1], [], []>} : vector<4x64xbf16>, vector<64x256xbf16>, vector<4x256xf32> -> vector<4x256xf32>
    %626 = arith.addf %621, %625 : vector<4x256xf32>
    %c1040 = arith.constant 1040 : index
    %c0_194 = arith.constant 0 : index
    %627 = vector.load %arg3[%c1040, %c0_194] : memref<1336x256xbf16, #tpu.memory_space<vmem>>, vector<64x256xbf16>
    %628 = vector.extract_strided_slice %617 {offsets = [8, 0], sizes = [4, 64], strides = [1, 1]} : vector<16x64xf32> to vector<4x64xf32>
    %629 = arith.truncf %628 : vector<4x64xf32> to vector<4x64xbf16>
    %cst_195 = arith.constant dense<0.000000e+00> : vector<4x256xf32>
    %630 = tpu.matmul %629, %627, %cst_195 {dimension_numbers = #tpu.dot_dimension_numbers<[1], [0], [0], [1], [0, 0, 1, 1], [], []>} : vector<4x64xbf16>, vector<64x256xbf16>, vector<4x256xf32> -> vector<4x256xf32>
    %631 = arith.addf %626, %630 : vector<4x256xf32>
    %c1104 = arith.constant 1104 : index
    %c0_196 = arith.constant 0 : index
    %632 = vector.load %arg3[%c1104, %c0_196] : memref<1336x256xbf16, #tpu.memory_space<vmem>>, vector<64x256xbf16>
    %633 = vector.extract_strided_slice %617 {offsets = [12, 0], sizes = [4, 64], strides = [1, 1]} : vector<16x64xf32> to vector<4x64xf32>
    %634 = arith.truncf %633 : vector<4x64xf32> to vector<4x64xbf16>
    %cst_197 = arith.constant dense<0.000000e+00> : vector<4x256xf32>
    %635 = tpu.matmul %634, %632, %cst_197 {dimension_numbers = #tpu.dot_dimension_numbers<[1], [0], [0], [1], [0, 0, 1, 1], [], []>} : vector<4x64xbf16>, vector<64x256xbf16>, vector<4x256xf32> -> vector<4x256xf32>
    %636 = arith.addf %631, %635 : vector<4x256xf32>
    %c224_198 = arith.constant 224 : index
    %c0_199 = arith.constant 0 : index
    %637 = vector.load %arg4[%c224_198, %c0_199] : memref<264x128xf32, #tpu.memory_space<vmem>>, vector<4x1xf32>
    %638 = vector.broadcast %637 : vector<4x1xf32> to vector<4x256xf32>
    %639 = arith.addf %636, %638 : vector<4x256xf32>
    %640 = arith.mulf %639, %639 : vector<4x256xf32>
    %641 = arith.mulf %639, %640 : vector<4x256xf32>
    %cst_200 = arith.constant 4.471500e-02 : f32
    %642 = vector.broadcast %cst_200 : f32 to vector<4x256xf32>
    %643 = arith.mulf %642, %641 : vector<4x256xf32>
    %644 = arith.addf %639, %643 : vector<4x256xf32>
    %cst_201 = arith.constant 0.797884583 : f32
    %645 = vector.broadcast %cst_201 : f32 to vector<4x256xf32>
    %646 = arith.mulf %645, %644 : vector<4x256xf32>
    %647 = math.tanh %646 : vector<4x256xf32>
    %cst_202 = arith.constant 1.000000e+00 : f32
    %648 = vector.broadcast %cst_202 : f32 to vector<4x256xf32>
    %649 = arith.addf %648, %647 : vector<4x256xf32>
    %cst_203 = arith.constant 5.000000e-01 : f32
    %650 = vector.broadcast %cst_203 : f32 to vector<4x256xf32>
    %651 = arith.mulf %650, %649 : vector<4x256xf32>
    %652 = arith.mulf %639, %651 : vector<4x256xf32>
    %c1168 = arith.constant 1168 : index
    %c0_204 = arith.constant 0 : index
    %653 = vector.load %arg3[%c1168, %c0_204] : memref<1336x256xbf16, #tpu.memory_space<vmem>>, vector<32x32xbf16>
    %654 = arith.truncf %576 : vector<4x32xf32> to vector<4x32xbf16>
    %cst_205 = arith.constant dense<0.000000e+00> : vector<4x32xf32>
    %655 = tpu.matmul %654, %653, %cst_205 {dimension_numbers = #tpu.dot_dimension_numbers<[1], [0], [0], [1], [0, 0, 1, 1], [], []>} : vector<4x32xbf16>, vector<32x32xbf16>, vector<4x32xf32> -> vector<4x32xf32>
    %c232 = arith.constant 232 : index
    %c0_206 = arith.constant 0 : index
    %656 = vector.load %arg4[%c232, %c0_206] : memref<264x128xf32, #tpu.memory_space<vmem>>, vector<1x32xf32>
    %657 = vector.broadcast %656 : vector<1x32xf32> to vector<4x32xf32>
    %658 = arith.addf %655, %657 : vector<4x32xf32>
    %cst_207 = arith.constant 0.000000e+00 : f32
    %659 = vector.broadcast %cst_207 : f32 to vector<4x32xf32>
    %660 = arith.maximumf %658, %659 : vector<4x32xf32>
    %c1200 = arith.constant 1200 : index
    %c0_208 = arith.constant 0 : index
    %661 = vector.load %arg3[%c1200, %c0_208] : memref<1336x256xbf16, #tpu.memory_space<vmem>>, vector<32x32xbf16>
    %662 = arith.truncf %660 : vector<4x32xf32> to vector<4x32xbf16>
    %cst_209 = arith.constant dense<0.000000e+00> : vector<4x32xf32>
    %663 = tpu.matmul %662, %661, %cst_209 {dimension_numbers = #tpu.dot_dimension_numbers<[1], [0], [0], [1], [0, 0, 1, 1], [], []>} : vector<4x32xbf16>, vector<32x32xbf16>, vector<4x32xf32> -> vector<4x32xf32>
    %c240 = arith.constant 240 : index
    %c0_210 = arith.constant 0 : index
    %664 = vector.load %arg4[%c240, %c0_210] : memref<264x128xf32, #tpu.memory_space<vmem>>, vector<1x32xf32>
    %665 = vector.broadcast %664 : vector<1x32xf32> to vector<4x32xf32>
    %666 = arith.addf %663, %665 : vector<4x32xf32>
    %cst_211 = arith.constant 0.000000e+00 : f32
    %667 = vector.broadcast %cst_211 : f32 to vector<4x32xf32>
    %668 = arith.maximumf %666, %667 : vector<4x32xf32>
    %c1232 = arith.constant 1232 : index
    %c0_212 = arith.constant 0 : index
    %669 = vector.load %arg3[%c1232, %c0_212] : memref<1336x256xbf16, #tpu.memory_space<vmem>>, vector<32x4xbf16>
    %670 = arith.truncf %668 : vector<4x32xf32> to vector<4x32xbf16>
    %cst_213 = arith.constant dense<0.000000e+00> : vector<4x4xf32>
    %671 = tpu.matmul %670, %669, %cst_213 {dimension_numbers = #tpu.dot_dimension_numbers<[1], [0], [0], [1], [0, 0, 1, 1], [], []>} : vector<4x32xbf16>, vector<32x4xbf16>, vector<4x4xf32> -> vector<4x4xf32>
    %c248 = arith.constant 248 : index
    %c0_214 = arith.constant 0 : index
    %672 = vector.load %arg4[%c248, %c0_214] : memref<264x128xf32, #tpu.memory_space<vmem>>, vector<1x4xf32>
    %673 = vector.broadcast %672 : vector<1x4xf32> to vector<4x4xf32>
    %674 = arith.addf %671, %673 : vector<4x4xf32>
    %675 = arith.truncf %674 : vector<4x4xf32> to vector<4x4xbf16>
    %676 = arith.truncf %652 : vector<4x256xf32> to vector<4x256xbf16>
    %cst_215 = arith.constant dense<0.000000e+00> : vector<4x256xf32>
    %677 = tpu.matmul %675, %676, %cst_215 {dimension_numbers = #tpu.dot_dimension_numbers<[1], [0], [0], [1], [0, 0, 1, 1], [], []>} : vector<4x4xbf16>, vector<4x256xbf16>, vector<4x256xf32> -> vector<4x256xf32>
    %c1264 = arith.constant 1264 : index
    %c0_216 = arith.constant 0 : index
    %678 = vector.load %arg3[%c1264, %c0_216] : memref<1336x256xbf16, #tpu.memory_space<vmem>>, vector<32x32xbf16>
    %679 = arith.truncf %575 : vector<1x32xf32> to vector<1x32xbf16>
    %cst_217 = arith.constant dense<0.000000e+00> : vector<1x32xf32>
    %680 = tpu.matmul %679, %678, %cst_217 {dimension_numbers = #tpu.dot_dimension_numbers<[1], [0], [0], [1], [0, 0, 1, 1], [], []>} : vector<1x32xbf16>, vector<32x32xbf16>, vector<1x32xf32> -> vector<1x32xf32>
    %c256_218 = arith.constant 256 : index
    %c0_219 = arith.constant 0 : index
    %681 = vector.load %arg4[%c256_218, %c0_219] : memref<264x128xf32, #tpu.memory_space<vmem>>, vector<1x32xf32>
    %682 = arith.addf %680, %681 : vector<1x32xf32>
    %cst_220 = arith.constant 0.000000e+00 : f32
    %683 = vector.broadcast %cst_220 : f32 to vector<1x32xf32>
    %684 = arith.maximumf %682, %683 : vector<1x32xf32>
    %c1296 = arith.constant 1296 : index
    %c0_221 = arith.constant 0 : index
    %685 = vector.load %arg3[%c1296, %c0_221] : memref<1336x256xbf16, #tpu.memory_space<vmem>>, vector<32x256xbf16>
    %686 = arith.truncf %684 : vector<1x32xf32> to vector<1x32xbf16>
    %cst_222 = arith.constant dense<0.000000e+00> : vector<1x256xf32>
    %687 = tpu.matmul %686, %685, %cst_222 {dimension_numbers = #tpu.dot_dimension_numbers<[1], [0], [0], [1], [0, 0, 1, 1], [], []>} : vector<1x32xbf16>, vector<32x256xbf16>, vector<1x256xf32> -> vector<1x256xf32>
    %c1328 = arith.constant 1328 : index
    %c0_223 = arith.constant 0 : index
    %688 = vector.load %arg3[%c1328, %c0_223] : memref<1336x256xbf16, #tpu.memory_space<vmem>>, vector<1x256xbf16>
    %689 = arith.extf %688 : vector<1x256xbf16> to vector<1x256xf32>
    %690 = arith.addf %687, %689 : vector<1x256xf32>
    %c0_224 = arith.constant 0 : index
    %c0_225 = arith.constant 0 : index
    %c0_226 = arith.constant 0 : index
    %691 = vector.load %arg5[%c0_224, %c0_225, %c0_226] : memref<1x5x256xf32, #tpu.memory_space<vmem>>, vector<1x4x256xf32>
    %692 = vector.shape_cast %691 : vector<1x4x256xf32> to vector<4x256xf32>
    %693 = vector.shape_cast %677 : vector<4x256xf32> to vector<1x4x256xf32>
    tpu.vector_store %arg5[%c0_224, %c0_225, %c0_226], %693 {strides = array<i32>} : memref<1x5x256xf32, #tpu.memory_space<vmem>>, vector<1x4x256xf32>,
    %c0_227 = arith.constant 0 : index
    %c4 = arith.constant 4 : index
    %c0_228 = arith.constant 0 : index
    %694 = vector.load %arg5[%c0_227, %c4, %c0_228] : memref<1x5x256xf32, #tpu.memory_space<vmem>>, vector<1x1x256xf32>
    %695 = vector.shape_cast %694 : vector<1x1x256xf32> to vector<1x256xf32>
    %696 = vector.shape_cast %690 : vector<1x256xf32> to vector<1x1x256xf32>
    tpu.vector_store %arg5[%c0_227, %c4, %c0_228], %696 {strides = array<i32>} : memref<1x5x256xf32, #tpu.memory_space<vmem>>, vector<1x1x256xf32>,
    return
  }
  func.func @transform_0(%arg0: i32) -> (i32, i32, i32) {
    %c0_i32 = arith.constant 0 : i32
    %c0_i32_0 = arith.constant 0 : i32
    %c0_i32_1 = arith.constant 0 : i32
    return %arg0, %c0_i32, %c0_i32_0 : i32, i32, i32
  }
  func.func @transform_1(%arg0: i32) -> (i32, i32, i32) {
    %c0_i32 = arith.constant 0 : i32
    %c0_i32_0 = arith.constant 0 : i32
    %c0_i32_1 = arith.constant 0 : i32
    return %arg0, %c0_i32, %c0_i32_0 : i32, i32, i32
  }
  func.func @transform_2(%arg0: i32) -> (i32, i32) {
    %c0_i32 = arith.constant 0 : i32
    %c0_i32_0 = arith.constant 0 : i32
    %c0_i32_1 = arith.constant 0 : i32
    return %c0_i32, %c0_i32_0 : i32, i32
  }
  func.func @transform_3(%arg0: i32) -> (i32, i32) {
    %c0_i32 = arith.constant 0 : i32
    %c0_i32_0 = arith.constant 0 : i32
    %c0_i32_1 = arith.constant 0 : i32
    return %c0_i32, %c0_i32_0 : i32, i32
  }
  func.func @transform_4(%arg0: i32) -> (i32, i32, i32) {
    %c0_i32 = arith.constant 0 : i32
    %c0_i32_0 = arith.constant 0 : i32
    %c0_i32_1 = arith.constant 0 : i32
    return %arg0, %c0_i32, %c0_i32_0 : i32, i32, i32
  }
}

</mosaic_0001>

<llo_original>
// kernel: sam_with_bbox_forward.1
$region0: #{sam_with_bbox_forward.1}
  #allocation0 [shape = 'u32[]', space=smem, size = 0x4, offset = 0x4, fixed_abs, tag = 'smem constant byte address 0x4 - core index']
  #allocation1 [shape = 'u32[144,128]{1,0:T(1,128)}', space=vmem, size = 0x12000, scoped, tag = 'internal scratch']
  %s0 = inlined_call_operand.vmem [shape: f32[2,16,192], index: 0, kind: input, shape index: {}]
  %s1 = inlined_call_operand.vmem [shape: f32[2,7,32], index: 1, kind: input, shape index: {}]
  %s2 = inlined_call_operand.vmem [shape: bf16[1336,256], index: 2, kind: input, shape index: {}]
  %s3 = inlined_call_operand.vmem [shape: f32[264,128], index: 3, kind: input, shape index: {}]
  %s4 = inlined_call_operand.vmem [shape: f32[2,5,256], index: 4, kind: output, shape index: {}]
  %s5 = sld [smem:[#allocation0]]
  $region49: #{sam_with_bbox_forward.1} parent=0
    _
  %s7 = ssub.s32 1, %s5
  %s8 = scalar_select 0, %s7, %s5
  loop: start=0, step=1, limit=4
  $region2: #{sam_with_bbox_forward.1} parent=0 // loop_pre_header
    _
  $region3: #{sam_with_bbox_forward.1} parent=0 // loop_header
    %s10 = sphi 0, %s14
    %p11 = scmp.ge.s32.totalorder %s10, 4
    %s20 = sphi 0, %s22
    %s23 = sphi 0, %s20
    %s24 = sphi 0, %s23
    %s40 = sphi 0, %s24
    %s46 = sphi 0, %s48
    %s49 = sphi 0, %s46
    %s50 = sphi 0, %s49
    %s66 = sphi 0, %s50
    %s70 = sphi 0, %s70
    %s72 = sphi 0, %s70
    %s73 = sphi 0, %s72
    %s87 = sphi 0, %s73
    %s91 = sphi 0, %s91
    %s93 = sphi 0, %s91
    %s94 = sphi 0, %s93
    %s108 = sphi 0, %s94
    %s114 = sphi 0, %s116
    %s117 = sphi 0, %s114
    %s118 = sphi 0, %s117
    %s134 = sphi 0, %s118
  $region4: #{sam_with_bbox_forward.1} parent=0 // loop_header_branch
    %13 = sbr.rel (%p11) target = $region8
  $region5: #{sam_with_bbox_forward.1} parent=0 // loop_body
    %s15 = ssub.s32 %s10, 1
    %s16 = ssub.s32 %s10, 2
    %s17 = sadd.s32 %s10, 1
    %s18 = ssub.s32 %s10, %s17
    %p19 = scmp.eq.s32.totalorder %s18, 0
    %s21 = sadd.s32 %s20, 1
    %s22 = scalar_select %p19, %s20, %s21
    %p25 = pneg %p19
    %p26 = scmp.eq.s32.totalorder %s10, 1
    %p27 = por %p25, %p26
    %p28 = scmp.ne.s32.totalorder %s20, %s23
    %p29 = scmp.eq.s32.totalorder %s10, 0
    %p30 = por %p28, %p29
    %p31 = scmp.ne.s32.totalorder %s20, %s23
    %p32 = scmp.eq.s32.totalorder %s15, 1
    %p33 = por %p31, %p32
    %p34 = scmp.ne.s32.totalorder %s23, %s24
    %p35 = scmp.eq.s32.totalorder %s15, 0
    %p36 = por %p34, %p35
    %p37 = scmp.ne.s32.totalorder %s23, %s24
    %p38 = scmp.eq.s32.totalorder %s16, 1
    %p39 = por %p37, %p38
    %p41 = scmp.ne.s32.totalorder %s24, %s40
    %p42 = scmp.eq.s32.totalorder %s16, 0
    %p43 = por %p41, %p42
    %s44 = ssub.s32 %s10, %s17
    %p45 = scmp.eq.s32.totalorder %s44, 0
    %s47 = sadd.s32 %s46, 1
    %s48 = scalar_select %p45, %s46, %s47
    %p51 = pneg %p45
    %p52 = scmp.eq.s32.totalorder %s10, 1
    %p53 = por %p51, %p52
    %p54 = scmp.ne.s32.totalorder %s46, %s49
    %p55 = scmp.eq.s32.totalorder %s10, 0
    %p56 = por %p54, %p55
    %p57 = scmp.ne.s32.totalorder %s46, %s49
    %p58 = scmp.eq.s32.totalorder %s15, 1
    %p59 = por %p57, %p58
    %p60 = scmp.ne.s32.totalorder %s49, %s50
    %p61 = scmp.eq.s32.totalorder %s15, 0
    %p62 = por %p60, %p61
    %p63 = scmp.ne.s32.totalorder %s49, %s50
    %p64 = scmp.eq.s32.totalorder %s16, 1
    %p65 = por %p63, %p64
    %p67 = scmp.ne.s32.totalorder %s50, %s66
    %p68 = scmp.eq.s32.totalorder %s16, 0
    %p69 = por %p67, %p68
    %s71 = sadd.s32 %s70, 1
    %p74 = scmp.eq.s32.totalorder %s10, 1
    %p75 = scmp.ne.s32.totalorder %s70, %s72
    %p76 = scmp.eq.s32.totalorder %s10, 0
    %p77 = por %p75, %p76
    %p78 = scmp.ne.s32.totalorder %s70, %s72
    %p79 = scmp.eq.s32.totalorder %s15, 1
    %p80 = por %p78, %p79
    %p81 = scmp.ne.s32.totalorder %s72, %s73
    %p82 = scmp.eq.s32.totalorder %s15, 0
    %p83 = por %p81, %p82
    %p84 = scmp.ne.s32.totalorder %s72, %s73
    %p85 = scmp.eq.s32.totalorder %s16, 1
    %p86 = por %p84, %p85
    %p88 = scmp.ne.s32.totalorder %s73, %s87
    %p89 = scmp.eq.s32.totalorder %s16, 0
    %p90 = por %p88, %p89
    %s92 = sadd.s32 %s91, 1
    %p95 = scmp.eq.s32.totalorder %s10, 1
    %p96 = scmp.ne.s32.totalorder %s91, %s93
    %p97 = scmp.eq.s32.totalorder %s10, 0
    %p98 = por %p96, %p97
    %p99 = scmp.ne.s32.totalorder %s91, %s93
    %p100 = scmp.eq.s32.totalorder %s15, 1
    %p101 = por %p99, %p100
    %p102 = scmp.ne.s32.totalorder %s93, %s94
    %p103 = scmp.eq.s32.totalorder %s15, 0
    %p104 = por %p102, %p103
    %p105 = scmp.ne.s32.totalorder %s93, %s94
    %p106 = scmp.eq.s32.totalorder %s16, 1
    %p107 = por %p105, %p106
    %p109 = scmp.ne.s32.totalorder %s94, %s108
    %p110 = scmp.eq.s32.totalorder %s16, 0
    %p111 = por %p109, %p110
    %s112 = ssub.s32 %s10, %s17
    %p113 = scmp.eq.s32.totalorder %s112, 0
    %s115 = sadd.s32 %s114, 1
    %s116 = scalar_select %p113, %s114, %s115
    %p119 = pneg %p113
    %p120 = scmp.eq.s32.totalorder %s10, 1
    %p121 = por %p119, %p120
    %p122 = scmp.ne.s32.totalorder %s114, %s117
    %p123 = scmp.eq.s32.totalorder %s10, 0
    %p124 = por %p122, %p123
    %p125 = scmp.ne.s32.totalorder %s114, %s117
    %p126 = scmp.eq.s32.totalorder %s15, 1
    %p127 = por %p125, %p126
    %p128 = scmp.ne.s32.totalorder %s117, %s118
    %p129 = scmp.eq.s32.totalorder %s15, 0
    %p130 = por %p128, %p129
    %p131 = scmp.ne.s32.totalorder %s117, %s118
    %p132 = scmp.eq.s32.totalorder %s16, 1
    %p133 = por %p131, %p132
    %p135 = scmp.ne.s32.totalorder %s118, %s134
    %p136 = scmp.eq.s32.totalorder %s16, 0
    %p137 = por %p135, %p136
    %p138 = scmp.le.s32.totalorder 1, %s10
    %p139 = scmp.lt.s32.totalorder %s10, 3
    %p140 = pnand %p138, %p139
    %p141 = pneg %p140
    // Predicated region
    $region9: #{sam_with_bbox_forward.1} parent=5 // pred_check
      _
    $region10: #{sam_with_bbox_forward.1} parent=5 // pred_check_branch
      %143 = sbr.rel (%p140) target = $region12
    $region11: #{sam_with_bbox_forward.1} parent=5 // pred_region
      %s144 = ssub.s32 %s10, 1
      // Predicated region
      $region13: #{sam_with_bbox_forward.1} parent=11 // pred_check
        %p145 = pneg %p83
      $region14: #{sam_with_bbox_forward.1} parent=11 // pred_check_branch
        %147 = sbr.rel (%p145) target = $region16
      $region15: #{sam_with_bbox_forward.1} parent=11 // pred_region
        _
      $region16: #{sam_with_bbox_forward.1} parent=11 // pred_fallthru
        _
      // Predicated region
      $region17: #{sam_with_bbox_forward.1} parent=11 // pred_check
        %p148 = pneg %p104
      $region18: #{sam_with_bbox_forward.1} parent=11 // pred_check_branch
        %150 = sbr.rel (%p148) target = $region20
      $region19: #{sam_with_bbox_forward.1} parent=11 // pred_region
        _
      $region20: #{sam_with_bbox_forward.1} parent=11 // pred_fallthru
        _
    $region12: #{sam_with_bbox_forward.1} parent=5 // pred_fallthru
      _
    %p151 = scmp.lt.s32.totalorder %s10, 2
    // Predicated region
    $region21: #{sam_with_bbox_forward.1} parent=5 // pred_check
      %p152 = pneg %p151
    $region22: #{sam_with_bbox_forward.1} parent=5 // pred_check_branch
      %154 = sbr.rel (%p152) target = $region24
    $region23: #{sam_with_bbox_forward.1} parent=5 // pred_region
      // Predicated region
      $region25: #{sam_with_bbox_forward.1} parent=23 // pred_check
        %p155 = pneg %p30
      $region26: #{sam_with_bbox_forward.1} parent=23 // pred_check_branch
        %157 = sbr.rel (%p155) target = $region28
      $region27: #{sam_with_bbox_forward.1} parent=23 // pred_region
        %p158 = scmp.lt.s32.totalorder %s10, 1
        %s159 = scalar_select %p158, %s10, 1
        %s160 = smul.addr %s159, 4
        %s161 = smul.addr %s160, 8
        %s162 = scalar_lea.vmem %s0, %s161
      $region28: #{sam_with_bbox_forward.1} parent=23 // pred_fallthru
        _
      // Predicated region
      $region29: #{sam_with_bbox_forward.1} parent=23 // pred_check
        %p163 = pneg %p56
      $region30: #{sam_with_bbox_forward.1} parent=23 // pred_check_branch
        %165 = sbr.rel (%p163) target = $region32
      $region31: #{sam_with_bbox_forward.1} parent=23 // pred_region
        %p166 = scmp.lt.s32.totalorder %s10, 1
        %s167 = scalar_select %p166, %s10, 1
        %s168 = smul.addr %s167, 8
        %s169 = scalar_lea.vmem %s1, %s168
      $region32: #{sam_with_bbox_forward.1} parent=23 // pred_fallthru
        _
    $region24: #{sam_with_bbox_forward.1} parent=5 // pred_fallthru
      _
    %p170 = scmp.le.s32.totalorder 1, %s10
    %p171 = scmp.lt.s32.totalorder %s10, 3
    %p172 = pnand %p170, %p171
    %p173 = pneg %p172
    // Predicated region
    $region33: #{sam_with_bbox_forward.1} parent=5 // pred_check
      _
    $region34: #{sam_with_bbox_forward.1} parent=5 // pred_check_branch
      %175 = sbr.rel (%p172) target = $region36
    $region35: #{sam_with_bbox_forward.1} parent=5 // pred_region
      %s176 = ssub.s32 %s10, 1
      %p177 = scmp.lt.s32.totalorder %s15, 1
      %s178 = scalar_select %p177, %s15, 1
      %s179 = smul.addr %s178, 4
      %s180 = smul.addr %s179, 8
      %s181 = scalar_lea.vmem %s0, %s180
      %p182 = pneg %p36
      %p183 = pneg %p33
      %p184 = scmp.lt.s32.totalorder %s15, 1
      %s185 = scalar_select %p184, %s15, 1
      %s186 = smul.addr %s185, 8
      %s187 = scalar_lea.vmem %s1, %s186
      %p188 = pneg %p62
      %p189 = pneg %p59
      %p190 = pneg %p83
      %p191 = pneg %p80
      %p192 = pneg %p104
      %p193 = pneg %p101
      %p194 = pneg %p130
      %p195 = pneg %p127
      %p196 = scmp.lt.s32.totalorder %s15, 1
      %s197 = scalar_select %p196, %s15, 1
      %s198 = smul.addr %s197, 2
      %s199 = smul.addr %s198, 8
      %s200 = scalar_lea.vmem %s4, %s199
      %p201 = scmp.lt.s32.totalorder %s15, 1
      %s202 = scalar_select %p201, %s15, 1
      %s203 = smul.addr %s202, 4
      %s204 = smul.addr %s203, 8
      %s205 = scalar_lea.vmem %s0, %s204
      %p206 = scmp.lt.s32.totalorder %s15, 1
      %s207 = scalar_select %p206, %s15, 1
      %s208 = smul.addr %s207, 8
      %s209 = scalar_lea.vmem %s1, %s208
      %p210 = scmp.lt.s32.totalorder %s15, 1
      %s211 = scalar_select %p210, %s15, 1
      %s212 = smul.addr %s211, 2
      %s213 = smul.addr %s212, 8
      %s214 = scalar_lea.vmem %s4, %s213
      %v216 = vld [vmem:[%s205] sm:$0xff]
      %v217 = vld [vmem:[%s205 + $0x8] sm:$0xff]
      %v218 = vld [vmem:[%s205 + $0x10] sm:$0xff]
      %v219 = vld [vmem:[%s205 + $0x18] sm:$0xff]
      %v220 = vld [vmem:[%s2] sm:$0xf]
      %v221 = vld [vmem:[%s2 + $0x8] sm:$0xf]
      %v222 = vld [vmem:[%s2 + $0x10] sm:$0xf]
      %v223 = vld [vmem:[%s2 + $0x18] sm:$0xf]
      %v224 = vld [vmem:[%s2 + $0x20] sm:$0xf]
      %v225 = vld [vmem:[%s2 + $0x28] sm:$0xf]
      %v226 = vld [vmem:[%s2 + $0x30] sm:$0xf]
      %v227 = vld [vmem:[%s2 + $0x38] sm:$0xf]
      %v228 = vld [vmem:[%s2 + $0x40] sm:$0xf]
      %v229 = vld [vmem:[%s2 + $0x48] sm:$0xf]
      %v230 = vld [vmem:[%s2 + $0x50] sm:$0xf]
      %v231 = vld [vmem:[%s2 + $0x58] sm:$0xf]
      %v232 = vld [vmem:[%s2 + $0x60] sm:$0xf]
      %v233 = vld [vmem:[%s2 + $0x68] sm:$0xf]
      %v234 = vld [vmem:[%s2 + $0x70] sm:$0xf]
      %v235 = vld [vmem:[%s2 + $0x78] sm:$0xf]
      %v236 = vld [vmem:[%s2 + $0x80] sm:$0xf]
      %v237 = vld [vmem:[%s2 + $0x88] sm:$0xf]
      %v238 = vld [vmem:[%s2 + $0x90] sm:$0xf]
      %v239 = vld [vmem:[%s2 + $0x98] sm:$0xf]
      %v240 = vld [vmem:[%s2 + $0xa0] sm:$0xf]
      %v241 = vld [vmem:[%s2 + $0xa8] sm:$0xf]
      %v242 = vld [vmem:[%s2 + $0xb0] sm:$0xf]
      %v243 = vld [vmem:[%s2 + $0xb8] sm:$0xf]
      %v244 = vpack.c.bf16 %v218, %v216
      %v245 = vpack.c.bf16 %v219, %v217
      %v246 = vld [vmem:[%s3 + $0x20] sm:$0x1]
      %v247 = vlaneseq
      %v248 = vshrl.u32 %v247, 7
      %v249 = vsub.s32 0, %v248
      %v250 = vrot.slane %v246, %v249
      %v275 = vunpack.c.l.b16 %v220
      %v276 = vunpack.c.l.b16 %v221
      %v277 = vunpack.c.l.b16 %v222
      %v278 = vunpack.c.l.b16 %v223
      %v279 = vunpack.c.l.b16 %v224
      %v280 = vunpack.c.l.b16 %v225
      %v281 = vunpack.c.l.b16 %v226
      %v282 = vunpack.c.l.b16 %v227
      %v283 = vunpack.c.l.b16 %v228
      %v284 = vunpack.c.l.b16 %v229
      %v285 = vunpack.c.l.b16 %v230
      %v286 = vunpack.c.l.b16 %v231
      %v287 = vunpack.c.l.b16 %v232
      %v288 = vunpack.c.l.b16 %v233
      %v289 = vunpack.c.l.b16 %v234
      %v290 = vunpack.c.l.b16 %v235
      %v291 = vunpack.c.l.b16 %v236
      %v292 = vunpack.c.l.b16 %v237
      %v293 = vunpack.c.l.b16 %v238
      %v294 = vunpack.c.l.b16 %v239
      %v295 = vunpack.c.l.b16 %v240
      %v296 = vunpack.c.l.b16 %v241
      %v297 = vunpack.c.l.b16 %v242
      %v298 = vunpack.c.l.b16 %v243
      %v299 = vpack.c.b16 %v276, %v275
      %v300 = vpack.c.b16 %v278, %v277
      %v301 = vpack.c.b16 %v280, %v279
      %v302 = vpack.c.b16 %v282, %v281
      %v303 = vpack.c.b16 %v284, %v283
      %v304 = vpack.c.b16 %v286, %v285
      %v305 = vpack.c.b16 %v288, %v287
      %v306 = vpack.c.b16 %v290, %v289
      %v307 = vpack.c.b16 %v292, %v291
      %v308 = vpack.c.b16 %v294, %v293
      %v309 = vpack.c.b16 %v296, %v295
      %v310 = vpack.c.b16 %v298, %v297
      %vm323 = vcmask 523264
      %v325 = vsel %vm323, %v245, 0
      %327 = vmatprep.subr.bf16.mxu0 0
      %328 = vmatpush1.bf16.msra.mxu0 %v299
      %329 = vmatprep.subr.bf16.mxu0 0
      %330 = vmatpush1.bf16.msra.mxu0 %v300
      %331 = vmatprep.subr.bf16.mxu0 0
      %332 = vmatpush1.bf16.msra.mxu0 %v301
      %333 = vmatprep.subr.bf16.mxu0 0
      %334 = vmatpush1.bf16.msra.mxu0 %v302
      %335 = vmatprep.subr.bf16.mxu0 0
      %336 = vmatpush1.bf16.msra.mxu0 %v303
      %337 = vmatprep.subr.bf16.mxu0 0
      %338 = vmatpush1.bf16.msra.mxu0 %v304
      %339 = vmatprep.subr.bf16.mxu0 0
      %340 = vmatpush1.bf16.msra.mxu0 %v305
      %341 = vmatprep.subr.bf16.mxu0 0
      %342 = vmatpush1.bf16.msra.mxu0 %v306
      %343 = vmatprep.subr.bf16.mxu0 0
      %344 = vmatpush1.bf16.msra.mxu0 %v307
      %345 = vmatprep.subr.bf16.mxu0 0
      %346 = vmatpush1.bf16.msra.mxu0 %v308
      %347 = vmatprep.subr.bf16.mxu0 0
      %348 = vmatpush1.bf16.msra.mxu0 %v309
      %349 = vmatprep.subr.bf16.mxu0 0
      %350 = vmatpush1.bf16.msra.mxu0 %v310
      %351 = vmatprep.subr.bf16.mxu0 0
      %352 = vmatpush1.bf16.msra.mxu0 0
      %353 = vmatprep.subr.bf16.mxu0 0
      %354 = vmatpush1.bf16.msra.mxu0 0
      %355 = vmatprep.subr.bf16.mxu0 0
      %356 = vmatpush1.bf16.msra.mxu0 0
      %357 = vmatprep.subr.bf16.mxu0 0
      %358 = vmatpush1.bf16.msra.mxu0 0
      %359 = vmatprep.mubr.bf16.mxu0 %v325
      %360 = vmatmul.mubr.bf16.gmra.mrb[0].mxu0 %v244
      %v361 = vpop.f32.mrb[0].mxu0
      %v362 = vadd.f32 %v250, %v361
      %v363 = vpop.f32.mrb[0].mxu0
      %v364 = vpop.f32.mrb[0].mxu0
      %v365 = vadd.f32 %v250, %v364
      %v366 = vpop.f32.mrb[0].mxu0
      %367 = vdwg.mxu0
      %v368 = vld [vmem:[%s3] sm:$0xff]
      %v369 = vld [vmem:[%s3 + $0x8] sm:$0xff]
      %v370 = vadd.f32 %v362, %v368
      %v371 = vadd.f32 %v365, %v369
      %v372 = vld [vmem:[%s3 + $0x28] sm:$0x1]
      %v373 = vld [vmem:[%s3 + $0x30] sm:$0x1]
      %vm374 = vcmask 261120
      %v375 = vsel %vm374, %v370, 0.0
      %376 = vadd.xlane.f32.xlu0 %v375
      %v377 = vpop.xlane.xlu0 %376
      %v378 = vsel %vm374, %v371, 0.0
      %379 = vadd.xlane.f32.xlu0 %v378
      %v380 = vpop.xlane.xlu0 %379
      %v381 = vrcp.pop 32.0
      %v382 = vmul.f32 %v377, %v381
      %v383 = vmul.f32 %v380, %v381
      %v384 = vsub.f32 %v370, %v382
      %v385 = vsub.f32 %v371, %v383
      %v386 = vmul.f32 %v384, %v384
      %v387 = vmul.f32 %v385, %v385
      %v388 = vsel %vm374, %v386, 0.0
      %389 = vadd.xlane.f32.xlu0 %v388
      %v390 = vpop.xlane.xlu0 %389
      %v391 = vsel %vm374, %v387, 0.0
      %392 = vadd.xlane.f32.xlu0 %v391
      %v393 = vpop.xlane.xlu0 %392
      %v394 = vmul.f32 %v390, %v381
      %v395 = vmul.f32 %v393, %v381
      %v396 = vadd.f32 %v394, 1e-05
      %v397 = vadd.f32 %v395, 1e-05
      %v398 = vrsqrt.pop %v396
      %v399 = vrsqrt.pop %v397
      %v400 = vmul.f32 %v384, %v398
      %v401 = vmul.f32 %v385, %v399
      %v402 = vlaneseq
      %v403 = vshrl.u32 %v402, 7
      %v404 = vsub.s32 0, %v403
      %v405 = vrot.slane %v372, %v404
      %v406 = vmul.f32 %v400, %v405
      %v407 = vmul.f32 %v401, %v405
      %v408 = vlaneseq
      %v409 = vshrl.u32 %v408, 7
      %v410 = vsub.s32 0, %v409
      %v411 = vrot.slane %v373, %v410
      %v412 = vadd.f32 %v406, %v411
      %v413 = vadd.f32 %v407, %v411
      %v414 = vld [vmem:[%s2 + $0xc0] sm:$0xf]
      %v415 = vld [vmem:[%s2 + $0xc8] sm:$0xf]
      %v416 = vld [vmem:[%s2 + $0xd0] sm:$0xf]
      %v417 = vld [vmem:[%s2 + $0xd8] sm:$0xf]
      %v418 = vpack.c.bf16 %v413, %v412
      %v419 = vld [vmem:[%s3 + $0x38] sm:$0x1]
      %v420 = vlaneseq
      %v421 = vshrl.u32 %v420, 7
      %v422 = vsub.s32 0, %v421
      %v423 = vrot.slane %v419, %v422
      %v428 = vunpack.c.l.b16 %v414
      %v429 = vunpack.c.l.b16 %v415
      %v430 = vunpack.c.l.b16 %v416
      %v431 = vunpack.c.l.b16 %v417
      %v432 = vpack.c.b16 %v429, %v428
      %v433 = vpack.c.b16 %v431, %v430
      %v437 = vsel %vm374, %v418, 0
      %439 = vmatprep.subr.bf16.mxu0 0
      %440 = vmatpush1.bf16.msra.mxu0 %v432
      %441 = vmatprep.subr.bf16.mxu0 0
      %442 = vmatpush1.bf16.msra.mxu0 %v433
      %443 = vmatprep.subr.bf16.mxu0 0
      %444 = vmatpush1.bf16.msra.mxu0 0
      %445 = vmatprep.subr.bf16.mxu0 0
      %446 = vmatpush1.bf16.msra.mxu0 0
      %447 = vmatprep.subr.bf16.mxu0 0
      %448 = vmatpush1.bf16.msra.mxu0 0
      %449 = vmatprep.subr.bf16.mxu0 0
      %450 = vmatpush1.bf16.msra.mxu0 0
      %451 = vmatprep.subr.bf16.mxu0 0
      %452 = vmatpush1.bf16.msra.mxu0 0
      %453 = vmatprep.subr.bf16.mxu0 0
      %454 = vmatpush1.bf16.msra.mxu0 0
      %455 = vmatprep.subr.bf16.mxu0 0
      %456 = vmatpush1.bf16.msra.mxu0 0
      %457 = vmatprep.subr.bf16.mxu0 0
      %458 = vmatpush1.bf16.msra.mxu0 0
      %459 = vmatprep.subr.bf16.mxu0 0
      %460 = vmatpush1.bf16.msra.mxu0 0
      %461 = vmatprep.subr.bf16.mxu0 0
      %462 = vmatpush1.bf16.msra.mxu0 0
      %463 = vmatprep.subr.bf16.mxu0 0
      %464 = vmatpush1.bf16.msra.mxu0 0
      %465 = vmatprep.subr.bf16.mxu0 0
      %466 = vmatpush1.bf16.msra.mxu0 0
      %467 = vmatprep.subr.bf16.mxu0 0
      %468 = vmatpush1.bf16.msra.mxu0 0
      %469 = vmatprep.subr.bf16.mxu0 0
      %470 = vmatpush1.bf16.msra.mxu0 0
      %471 = vmatprep.mubr.bf16.mxu0 0
      %472 = vmatmul.mubr.bf16.gmra.mrb[0].mxu0 %v437
      %v473 = vpop.f32.mrb[0].mxu0
      %v474 = vadd.f32 %v423, %v473
      %v475 = vpop.f32.mrb[0].mxu0
      %v476 = vpop.f32.mrb[0].mxu0
      %v477 = vadd.f32 %v423, %v476
      %v478 = vpop.f32.mrb[0].mxu0
      %479 = vdwg.mxu0
      %v480 = vld [vmem:[%s2 + $0xe0] sm:$0xf]
      %v481 = vld [vmem:[%s2 + $0xe8] sm:$0xf]
      %v482 = vld [vmem:[%s2 + $0xf0] sm:$0xf]
      %v483 = vld [vmem:[%s2 + $0xf8] sm:$0xf]
      %v484 = vld [vmem:[%s3 + $0x40] sm:$0x1]
      %v485 = vpack.c.bf16 %v477, %v474
      %487 = vrot.lane.b32.xlu0 %v485, 96
      %v488 = vpop.permute.xlu0 %487
      %vm489 = vcmask 130048
      %v491 = vsel %vm489, %v485, 0
      %v494 = vsel %vm489, %v488, 0
      %496 = vmatprep.subr.bf16.mxu0 0
      %497 = vmatpush1.bf16.xpose.msra.mxu0 %v494
      %498 = vmatprep.subr.bf16.mxu0 0
      %499 = vmatpush1.bf16.xpose.msra.mxu0 0
      %500 = vmatprep.subr.bf16.mxu0 0
      %501 = vmatpush1.bf16.xpose.msra.mxu0 0
      %502 = vmatprep.subr.bf16.mxu0 0
      %503 = vmatpush1.bf16.xpose.msra.mxu0 0
      %504 = vmatprep.subr.bf16.mxu0 0
      %505 = vmatpush1.bf16.xpose.msra.mxu0 0
      %506 = vmatprep.subr.bf16.mxu0 0
      %507 = vmatpush1.bf16.xpose.msra.mxu0 0
      %508 = vmatprep.subr.bf16.mxu0 0
      %509 = vmatpush1.bf16.xpose.msra.mxu0 0
      %510 = vmatprep.subr.bf16.mxu0 0
      %511 = vmatpush1.bf16.xpose.msra.mxu0 0
      %512 = vmatprep.subr.bf16.mxu0 0
      %513 = vmatpush1.bf16.xpose.msra.mxu0 0
      %514 = vmatprep.subr.bf16.mxu0 0
      %515 = vmatpush1.bf16.xpose.msra.mxu0 0
      %516 = vmatprep.subr.bf16.mxu0 0
      %517 = vmatpush1.bf16.xpose.msra.mxu0 0
      %518 = vmatprep.subr.bf16.mxu0 0
      %519 = vmatpush1.bf16.xpose.msra.mxu0 0
      %520 = vmatprep.subr.bf16.mxu0 0
      %521 = vmatpush1.bf16.xpose.msra.mxu0 0
      %522 = vmatprep.subr.bf16.mxu0 0
      %523 = vmatpush1.bf16.xpose.msra.mxu0 0
      %524 = vmatprep.subr.bf16.mxu0 0
      %525 = vmatpush1.bf16.xpose.msra.mxu0 0
      %526 = vmatprep.subr.bf16.mxu0 0
      %527 = vmatpush1.bf16.xpose.msra.mxu0 0
      %528 = vmatprep.mubr.bf16.mxu0 0
      %529 = vmatmul.mubr.bf16.gmra.mrb[0].mxu0 %v491
      %v530 = vpop.f32.mrb[0].mxu0
      %v531 = vadd.f32 0.0, %v530
      %v532 = vpop.f32.mrb[0].mxu0
      %v533 = vpop.f32.mrb[0].mxu0
      %v534 = vadd.f32 0.0, %v533
      %v535 = vpop.f32.mrb[0].mxu0
      %536 = vdwg.mxu0
      %v537 = vmul.f32 %v531, 0.25
      %v538 = vmul.f32 %v534, 0.25
      %v539 = vsel %vm489, %v537, -inf
      %540 = vmax.xlane.f32.xlu0 %v539
      %v541 = vpop.xlane.xlu0 %540
      %v542 = vsel %vm489, %v538, -inf
      %543 = vmax.xlane.f32.xlu0 %v542
      %v544 = vpop.xlane.xlu0 %543
      %v545 = vsub.f32 %v537, %v541
      %v546 = vsub.f32 %v538, %v544
      %v547 = vmul.f32 %v545, 1.442695
      %v548 = vpow.pop %v547
      %v549 = vmul.f32 %v546, 1.442695
      %v550 = vpow.pop %v549
      %v551 = vsel %vm489, %v548, 0.0
      %552 = vadd.xlane.f32.xlu0 %v551
      %v553 = vpop.xlane.xlu0 %552
      %v554 = vsel %vm489, %v550, 0.0
      %555 = vadd.xlane.f32.xlu0 %v554
      %v556 = vpop.xlane.xlu0 %555
      %v557 = vrcp.pop %v553
      %v558 = vmul.f32 %v548, %v557
      %v559 = vrcp.pop %v556
      %v560 = vmul.f32 %v550, %v559
      %v561 = vpack.c.bf16 %v560, %v558
      %562 = vrot.lane.b32.xlu0 %v485, 64
      %v563 = vpop.permute.xlu0 %562
      %v566 = vsel %vm489, %v561, 0
      %568 = vmatprep.subr.bf16.mxu0 0
      %569 = vmatpush1.bf16.msra.mxu0 %v563
      %570 = vmatprep.subr.bf16.mxu0 0
      %571 = vmatpush1.bf16.msra.mxu0 0
      %572 = vmatprep.subr.bf16.mxu0 0
      %573 = vmatpush1.bf16.msra.mxu0 0
      %574 = vmatprep.subr.bf16.mxu0 0
      %575 = vmatpush1.bf16.msra.mxu0 0
      %576 = vmatprep.subr.bf16.mxu0 0
      %577 = vmatpush1.bf16.msra.mxu0 0
      %578 = vmatprep.subr.bf16.mxu0 0
      %579 = vmatpush1.bf16.msra.mxu0 0
      %580 = vmatprep.subr.bf16.mxu0 0
      %581 = vmatpush1.bf16.msra.mxu0 0
      %582 = vmatprep.subr.bf16.mxu0 0
      %583 = vmatpush1.bf16.msra.mxu0 0
      %584 = vmatprep.subr.bf16.mxu0 0
      %585 = vmatpush1.bf16.msra.mxu0 0
      %586 = vmatprep.subr.bf16.mxu0 0
      %587 = vmatpush1.bf16.msra.mxu0 0
      %588 = vmatprep.subr.bf16.mxu0 0
      %589 = vmatpush1.bf16.msra.mxu0 0
      %590 = vmatprep.subr.bf16.mxu0 0
      %591 = vmatpush1.bf16.msra.mxu0 0
      %592 = vmatprep.subr.bf16.mxu0 0
      %593 = vmatpush1.bf16.msra.mxu0 0
      %594 = vmatprep.subr.bf16.mxu0 0
      %595 = vmatpush1.bf16.msra.mxu0 0
      %596 = vmatprep.subr.bf16.mxu0 0
      %597 = vmatpush1.bf16.msra.mxu0 0
      %598 = vmatprep.subr.bf16.mxu0 0
      %599 = vmatpush1.bf16.msra.mxu0 0
      %600 = vmatprep.mubr.bf16.mxu0 0
      %601 = vmatmul.mubr.bf16.gmra.mrb[0].mxu0 %v566
      %v602 = vpop.f32.mrb[0].mxu0
      %v603 = vadd.f32 0.0, %v602
      %v604 = vpop.f32.mrb[0].mxu0
      %v605 = vpop.f32.mrb[0].mxu0
      %v606 = vadd.f32 0.0, %v605
      %v607 = vpop.f32.mrb[0].mxu0
      %608 = vdwg.mxu0
      %v609 = vpack.c.bf16 %v606, %v603
      %610 = vrot.lane.b32.xlu0 %v485, 112
      %v611 = vpop.permute.xlu0 %610
      %612 = vrot.lane.b32.xlu0 %v485, 80
      %v613 = vpop.permute.xlu0 %612
      %v615 = vsel %vm489, %v611, 0
      %v618 = vsel %vm489, %v613, 0
      %620 = vmatprep.subr.bf16.mxu0 0
      %621 = vmatpush1.bf16.xpose.msra.mxu0 %v618
      %622 = vmatprep.subr.bf16.mxu0 0
      %623 = vmatpush1.bf16.xpose.msra.mxu0 0
      %624 = vmatprep.subr.bf16.mxu0 0
      %625 = vmatpush1.bf16.xpose.msra.mxu0 0
      %626 = vmatprep.subr.bf16.mxu0 0
      %627 = vmatpush1.bf16.xpose.msra.mxu0 0
      %628 = vmatprep.subr.bf16.mxu0 0
      %629 = vmatpush1.bf16.xpose.msra.mxu0 0
      %630 = vmatprep.subr.bf16.mxu0 0
      %631 = vmatpush1.bf16.xpose.msra.mxu0 0
      %632 = vmatprep.subr.bf16.mxu0 0
      %633 = vmatpush1.bf16.xpose.msra.mxu0 0
      %634 = vmatprep.subr.bf16.mxu0 0
      %635 = vmatpush1.bf16.xpose.msra.mxu0 0
      %636 = vmatprep.subr.bf16.mxu0 0
      %637 = vmatpush1.bf16.xpose.msra.mxu0 0
      %638 = vmatprep.subr.bf16.mxu0 0
      %639 = vmatpush1.bf16.xpose.msra.mxu0 0
      %640 = vmatprep.subr.bf16.mxu0 0
      %641 = vmatpush1.bf16.xpose.msra.mxu0 0
      %642 = vmatprep.subr.bf16.mxu0 0
      %643 = vmatpush1.bf16.xpose.msra.mxu0 0
      %644 = vmatprep.subr.bf16.mxu0 0
      %645 = vmatpush1.bf16.xpose.msra.mxu0 0
      %646 = vmatprep.subr.bf16.mxu0 0
      %647 = vmatpush1.bf16.xpose.msra.mxu0 0
      %648 = vmatprep.subr.bf16.mxu0 0
      %649 = vmatpush1.bf16.xpose.msra.mxu0 0
      %650 = vmatprep.subr.bf16.mxu0 0
      %651 = vmatpush1.bf16.xpose.msra.mxu0 0
      %652 = vmatprep.mubr.bf16.mxu0 0
      %653 = vmatmul.mubr.bf16.gmra.mrb[0].mxu0 %v615
      %v654 = vpop.f32.mrb[0].mxu0
      %v655 = vadd.f32 0.0, %v654
      %v656 = vpop.f32.mrb[0].mxu0
      %v657 = vpop.f32.mrb[0].mxu0
      %v658 = vadd.f32 0.0, %v657
      %v659 = vpop.f32.mrb[0].mxu0
      %660 = vdwg.mxu0
      %v661 = vmul.f32 %v655, 0.25
      %v662 = vmul.f32 %v658, 0.25
      %v663 = vsel %vm489, %v661, -inf
      %664 = vmax.xlane.f32.xlu0 %v663
      %v665 = vpop.xlane.xlu0 %664
      %v666 = vsel %vm489, %v662, -inf
      %667 = vmax.xlane.f32.xlu0 %v666
      %v668 = vpop.xlane.xlu0 %667
      %v669 = vsub.f32 %v661, %v665
      %v670 = vsub.f32 %v662, %v668
      %v671 = vmul.f32 %v669, 1.442695
      %v672 = vpow.pop %v671
      %v673 = vmul.f32 %v670, 1.442695
      %v674 = vpow.pop %v673
      %v675 = vsel %vm489, %v672, 0.0
      %676 = vadd.xlane.f32.xlu0 %v675
      %v677 = vpop.xlane.xlu0 %676
      %v678 = vsel %vm489, %v674, 0.0
      %679 = vadd.xlane.f32.xlu0 %v678
      %v680 = vpop.xlane.xlu0 %679
      %v681 = vrcp.pop %v677
      %v682 = vmul.f32 %v672, %v681
      %v683 = vrcp.pop %v680
      %v684 = vmul.f32 %v674, %v683
      %v685 = vpack.c.bf16 %v684, %v682
      %686 = vrot.lane.b32.xlu0 %v485, 48
      %v687 = vpop.permute.xlu0 %686
      %v690 = vsel %vm489, %v685, 0
      %692 = vmatprep.subr.bf16.mxu0 0
      %693 = vmatpush1.bf16.msra.mxu0 %v687
      %694 = vmatprep.subr.bf16.mxu0 0
      %695 = vmatpush1.bf16.msra.mxu0 0
      %696 = vmatprep.subr.bf16.mxu0 0
      %697 = vmatpush1.bf16.msra.mxu0 0
      %698 = vmatprep.subr.bf16.mxu0 0
      %699 = vmatpush1.bf16.msra.mxu0 0
      %700 = vmatprep.subr.bf16.mxu0 0
      %701 = vmatpush1.bf16.msra.mxu0 0
      %702 = vmatprep.subr.bf16.mxu0 0
      %703 = vmatpush1.bf16.msra.mxu0 0
      %704 = vmatprep.subr.bf16.mxu0 0
      %705 = vmatpush1.bf16.msra.mxu0 0
      %706 = vmatprep.subr.bf16.mxu0 0
      %707 = vmatpush1.bf16.msra.mxu0 0
      %708 = vmatprep.subr.bf16.mxu0 0
      %709 = vmatpush1.bf16.msra.mxu0 0
      %710 = vmatprep.subr.bf16.mxu0 0
      %711 = vmatpush1.bf16.msra.mxu0 0
      %712 = vmatprep.subr.bf16.mxu0 0
      %713 = vmatpush1.bf16.msra.mxu0 0
      %714 = vmatprep.subr.bf16.mxu0 0
      %715 = vmatpush1.bf16.msra.mxu0 0
      %716 = vmatprep.subr.bf16.mxu0 0
      %717 = vmatpush1.bf16.msra.mxu0 0
      %718 = vmatprep.subr.bf16.mxu0 0
      %719 = vmatpush1.bf16.msra.mxu0 0
      %720 = vmatprep.subr.bf16.mxu0 0
      %721 = vmatpush1.bf16.msra.mxu0 0
      %722 = vmatprep.subr.bf16.mxu0 0
      %723 = vmatpush1.bf16.msra.mxu0 0
      %724 = vmatprep.mubr.bf16.mxu0 0
      %725 = vmatmul.mubr.bf16.gmra.mrb[0].mxu0 %v690
      %v726 = vpop.f32.mrb[0].mxu0
      %v727 = vadd.f32 0.0, %v726
      %v728 = vpop.f32.mrb[0].mxu0
      %v729 = vpop.f32.mrb[0].mxu0
      %v730 = vadd.f32 0.0, %v729
      %v731 = vpop.f32.mrb[0].mxu0
      %732 = vdwg.mxu0
      %v733 = vpack.c.bf16 %v730, %v727
      %v736 = vunpack.c.l.b16 %v482
      %v737 = vunpack.c.l.b16 %v483
      %v738 = vpack.c.b16 %v737, %v736
      %v741 = vsel %vm489, %v733, 0
      %743 = vmatprep.subr.bf16.mxu0 0
      %744 = vmatpush1.bf16.msra.mxu0 %v738
      %745 = vmatprep.subr.bf16.mxu0 0
      %746 = vmatpush1.bf16.msra.mxu0 0
      %747 = vmatprep.subr.bf16.mxu0 0
      %748 = vmatpush1.bf16.msra.mxu0 0
      %749 = vmatprep.subr.bf16.mxu0 0
      %750 = vmatpush1.bf16.msra.mxu0 0
      %751 = vmatprep.subr.bf16.mxu0 0
      %752 = vmatpush1.bf16.msra.mxu0 0
      %753 = vmatprep.subr.bf16.mxu0 0
      %754 = vmatpush1.bf16.msra.mxu0 0
      %755 = vmatprep.subr.bf16.mxu0 0
      %756 = vmatpush1.bf16.msra.mxu0 0
      %757 = vmatprep.subr.bf16.mxu0 0
      %758 = vmatpush1.bf16.msra.mxu0 0
      %759 = vmatprep.subr.bf16.mxu0 0
      %760 = vmatpush1.bf16.msra.mxu0 0
      %761 = vmatprep.subr.bf16.mxu0 0
      %762 = vmatpush1.bf16.msra.mxu0 0
      %763 = vmatprep.subr.bf16.mxu0 0
      %764 = vmatpush1.bf16.msra.mxu0 0
      %765 = vmatprep.subr.bf16.mxu0 0
      %766 = vmatpush1.bf16.msra.mxu0 0
      %767 = vmatprep.subr.bf16.mxu0 0
      %768 = vmatpush1.bf16.msra.mxu0 0
      %769 = vmatprep.subr.bf16.mxu0 0
      %770 = vmatpush1.bf16.msra.mxu0 0
      %771 = vmatprep.subr.bf16.mxu0 0
      %772 = vmatpush1.bf16.msra.mxu0 0
      %773 = vmatprep.subr.bf16.mxu0 0
      %774 = vmatpush1.bf16.msra.mxu0 0
      %775 = vmatprep.mubr.bf16.mxu0 0
      %776 = vmatmul.mubr.bf16.gmra.mrb[0].mxu0 %v741
      %v777 = vpop.f32.mrb[0].mxu0
      %v778 = vadd.f32 0.0, %v777
      %v779 = vpop.f32.mrb[0].mxu0
      %v780 = vpop.f32.mrb[0].mxu0
      %v781 = vadd.f32 0.0, %v780
      %v782 = vpop.f32.mrb[0].mxu0
      %783 = vdwg.mxu0
      %v786 = vunpack.c.l.b16 %v480
      %v787 = vunpack.c.l.b16 %v481
      %v788 = vpack.c.b16 %v787, %v786
      %v791 = vsel %vm489, %v609, 0
      %793 = vmatprep.subr.bf16.mxu0 0
      %794 = vmatpush1.bf16.msra.mxu0 %v788
      %795 = vmatprep.subr.bf16.mxu0 0
      %796 = vmatpush1.bf16.msra.mxu0 0
      %797 = vmatprep.subr.bf16.mxu0 0
      %798 = vmatpush1.bf16.msra.mxu0 0
      %799 = vmatprep.subr.bf16.mxu0 0
      %800 = vmatpush1.bf16.msra.mxu0 0
      %801 = vmatprep.subr.bf16.mxu0 0
      %802 = vmatpush1.bf16.msra.mxu0 0
      %803 = vmatprep.subr.bf16.mxu0 0
      %804 = vmatpush1.bf16.msra.mxu0 0
      %805 = vmatprep.subr.bf16.mxu0 0
      %806 = vmatpush1.bf16.msra.mxu0 0
      %807 = vmatprep.subr.bf16.mxu0 0
      %808 = vmatpush1.bf16.msra.mxu0 0
      %809 = vmatprep.subr.bf16.mxu0 0
      %810 = vmatpush1.bf16.msra.mxu0 0
      %811 = vmatprep.subr.bf16.mxu0 0
      %812 = vmatpush1.bf16.msra.mxu0 0
      %813 = vmatprep.subr.bf16.mxu0 0
      %814 = vmatpush1.bf16.msra.mxu0 0
      %815 = vmatprep.subr.bf16.mxu0 0
      %816 = vmatpush1.bf16.msra.mxu0 0
      %817 = vmatprep.subr.bf16.mxu0 0
      %818 = vmatpush1.bf16.msra.mxu0 0
      %819 = vmatprep.subr.bf16.mxu0 0
      %820 = vmatpush1.bf16.msra.mxu0 0
      %821 = vmatprep.subr.bf16.mxu0 0
      %822 = vmatpush1.bf16.msra.mxu0 0
      %823 = vmatprep.subr.bf16.mxu0 0
      %824 = vmatpush1.bf16.msra.mxu0 0
      %825 = vmatprep.mubr.bf16.mxu0 0
      %826 = vmatmul.mubr.bf16.gmra.mrb[0].mxu0 %v791
      %v827 = vpop.f32.mrb[0].mxu0
      %v828 = vadd.f32 %v778, %v827
      %v829 = vpop.f32.mrb[0].mxu0
      %v830 = vpop.f32.mrb[0].mxu0
      %v831 = vadd.f32 %v781, %v830
      %v832 = vpop.f32.mrb[0].mxu0
      %833 = vdwg.mxu0
      %v834 = vlaneseq
      %v835 = vshrl.u32 %v834, 7
      %v836 = vsub.s32 0, %v835
      %v837 = vrot.slane %v484, %v836
      %v838 = vadd.f32 %v828, %v837
      %v839 = vadd.f32 %v831, %v837
      %v840 = vadd.f32 %v370, %v838
      %v841 = vadd.f32 %v371, %v839
      %v842 = vld [vmem:[%s3 + $0x48] sm:$0x1]
      %v843 = vld [vmem:[%s3 + $0x50] sm:$0x1]
      %v844 = vsel %vm374, %v840, 0.0
      %845 = vadd.xlane.f32.xlu0 %v844
      %v846 = vpop.xlane.xlu0 %845
      %v847 = vsel %vm374, %v841, 0.0
      %848 = vadd.xlane.f32.xlu0 %v847
      %v849 = vpop.xlane.xlu0 %848
      %v850 = vmul.f32 %v846, %v381
      %v851 = vmul.f32 %v849, %v381
      %v852 = vsub.f32 %v840, %v850
      %v853 = vsub.f32 %v841, %v851
      %v854 = vmul.f32 %v852, %v852
      %v855 = vmul.f32 %v853, %v853
      %v856 = vsel %vm374, %v854, 0.0
      %857 = vadd.xlane.f32.xlu0 %v856
      %v858 = vpop.xlane.xlu0 %857
      %v859 = vsel %vm374, %v855, 0.0
      %860 = vadd.xlane.f32.xlu0 %v859
      %v861 = vpop.xlane.xlu0 %860
      %v862 = vmul.f32 %v858, %v381
      %v863 = vmul.f32 %v861, %v381
      %v864 = vadd.f32 %v862, 1e-05
      %v865 = vadd.f32 %v863, 1e-05
      %v866 = vrsqrt.pop %v864
      %v867 = vrsqrt.pop %v865
      %v868 = vmul.f32 %v852, %v866
      %v869 = vmul.f32 %v853, %v867
      %v870 = vlaneseq
      %v871 = vshrl.u32 %v870, 7
      %v872 = vsub.s32 0, %v871
      %v873 = vrot.slane %v842, %v872
      %v874 = vmul.f32 %v868, %v873
      %v875 = vmul.f32 %v869, %v873
      %v876 = vlaneseq
      %v877 = vshrl.u32 %v876, 7
      %v878 = vsub.s32 0, %v877
      %v879 = vrot.slane %v843, %v878
      %v880 = vadd.f32 %v874, %v879
      %v881 = vadd.f32 %v875, %v879
      %v882 = vld [vmem:[%s2 + $0x100] sm:$0xf]
      %v883 = vld [vmem:[%s2 + $0x108] sm:$0xf]
      %v884 = vld [vmem:[%s2 + $0x110] sm:$0xf]
      %v885 = vld [vmem:[%s2 + $0x118] sm:$0xf]
      %v886 = vpack.c.bf16 %v881, %v880
      %v887 = vld [vmem:[%s3 + $0x58] sm:$0x1]
      %v888 = vlaneseq
      %v889 = vshrl.u32 %v888, 7
      %v890 = vsub.s32 0, %v889
      %v891 = vrot.slane %v887, %v890
      %v896 = vunpack.c.l.b16 %v882
      %v897 = vunpack.c.l.b16 %v883
      %v898 = vunpack.c.l.b16 %v884
      %v899 = vunpack.c.l.b16 %v885
      %v900 = vpack.c.b16 %v897, %v896
      %v901 = vpack.c.b16 %v899, %v898
      %v905 = vsel %vm374, %v886, 0
      %907 = vmatprep.subr.bf16.mxu0 0
      %908 = vmatpush1.bf16.msra.mxu0 %v900
      %909 = vmatprep.subr.bf16.mxu0 0
      %910 = vmatpush1.bf16.msra.mxu0 %v901
      %911 = vmatprep.subr.bf16.mxu0 0
      %912 = vmatpush1.bf16.msra.mxu0 0
      %913 = vmatprep.subr.bf16.mxu0 0
      %914 = vmatpush1.bf16.msra.mxu0 0
      %915 = vmatprep.subr.bf16.mxu0 0
      %916 = vmatpush1.bf16.msra.mxu0 0
      %917 = vmatprep.subr.bf16.mxu0 0
      %918 = vmatpush1.bf16.msra.mxu0 0
      %919 = vmatprep.subr.bf16.mxu0 0
      %920 = vmatpush1.bf16.msra.mxu0 0
      %921 = vmatprep.subr.bf16.mxu0 0
      %922 = vmatpush1.bf16.msra.mxu0 0
      %923 = vmatprep.subr.bf16.mxu0 0
      %924 = vmatpush1.bf16.msra.mxu0 0
      %925 = vmatprep.subr.bf16.mxu0 0
      %926 = vmatpush1.bf16.msra.mxu0 0
      %927 = vmatprep.subr.bf16.mxu0 0
      %928 = vmatpush1.bf16.msra.mxu0 0
      %929 = vmatprep.subr.bf16.mxu0 0
      %930 = vmatpush1.bf16.msra.mxu0 0
      %931 = vmatprep.subr.bf16.mxu0 0
      %932 = vmatpush1.bf16.msra.mxu0 0
      %933 = vmatprep.subr.bf16.mxu0 0
      %934 = vmatpush1.bf16.msra.mxu0 0
      %935 = vmatprep.subr.bf16.mxu0 0
      %936 = vmatpush1.bf16.msra.mxu0 0
      %937 = vmatprep.subr.bf16.mxu0 0
      %938 = vmatpush1.bf16.msra.mxu0 0
      %939 = vmatprep.mubr.bf16.mxu0 0
      %940 = vmatmul.mubr.bf16.gmra.mrb[0].mxu0 %v905
      %v941 = vpop.f32.mrb[0].mxu0
      %v942 = vadd.f32 %v891, %v941
      %v943 = vpop.f32.mrb[0].mxu0
      %v944 = vpop.f32.mrb[0].mxu0
      %v945 = vadd.f32 %v891, %v944
      %v946 = vpop.f32.mrb[0].mxu0
      %947 = vdwg.mxu0
      %v948 = vmul.f32 %v942, %v942
      %v949 = vmul.f32 %v945, %v945
      %v950 = vmul.f32 %v942, %v948
      %v951 = vmul.f32 %v945, %v949
      %v952 = vmul.f32 %v950, 0.044715
      %v953 = vmul.f32 %v951, 0.044715
      %v954 = vadd.f32 %v942, %v952
      %v955 = vadd.f32 %v945, %v953
      %v956 = vmul.f32 %v954, 0.7978846
      %v957 = vmul.f32 %v955, 0.7978846
      %v958 = vtanh.pop %v956
      %v959 = vtanh.pop %v957
      %v960 = vadd.f32 %v958, 1.0
      %v961 = vadd.f32 %v959, 1.0
      %v962 = vmul.f32 %v960, 0.5
      %v963 = vmul.f32 %v961, 0.5
      %v964 = vmul.f32 %v942, %v962
      %v965 = vmul.f32 %v945, %v963
      %v966 = vld [vmem:[%s2 + $0x120] sm:$0xf]
      %v967 = vld [vmem:[%s2 + $0x128] sm:$0xf]
      %v968 = vld [vmem:[%s2 + $0x130] sm:$0xf]
      %v969 = vld [vmem:[%s2 + $0x138] sm:$0xf]
      %v970 = vld [vmem:[%s2 + $0x140] sm:$0xf]
      %v971 = vld [vmem:[%s2 + $0x148] sm:$0xf]
      %v972 = vld [vmem:[%s2 + $0x150] sm:$0xf]
      %v973 = vld [vmem:[%s2 + $0x158] sm:$0xf]
      %v974 = vld [vmem:[%s2 + $0x160] sm:$0xf]
      %v975 = vld [vmem:[%s2 + $0x168] sm:$0xf]
      %v976 = vld [vmem:[%s2 + $0x170] sm:$0xf]
      %v977 = vld [vmem:[%s2 + $0x178] sm:$0xf]
      %v978 = vld [vmem:[%s2 + $0x180] sm:$0xf]
      %v979 = vld [vmem:[%s2 + $0x188] sm:$0xf]
      %v980 = vld [vmem:[%s2 + $0x190] sm:$0xf]
      %v981 = vld [vmem:[%s2 + $0x198] sm:$0xf]
      %v982 = vpack.c.bf16 %v965, %v964
      %v999 = vunpack.c.l.b16 %v966
      %v1000 = vunpack.c.l.b16 %v967
      %v1001 = vunpack.c.l.b16 %v968
      %v1002 = vunpack.c.l.b16 %v969
      %v1003 = vunpack.c.l.b16 %v970
      %v1004 = vunpack.c.l.b16 %v971
      %v1005 = vunpack.c.l.b16 %v972
      %v1006 = vunpack.c.l.b16 %v973
      %v1007 = vunpack.c.l.b16 %v974
      %v1008 = vunpack.c.l.b16 %v975
      %v1009 = vunpack.c.l.b16 %v976
      %v1010 = vunpack.c.l.b16 %v977
      %v1011 = vunpack.c.l.b16 %v978
      %v1012 = vunpack.c.l.b16 %v979
      %v1013 = vunpack.c.l.b16 %v980
      %v1014 = vunpack.c.l.b16 %v981
      %v1015 = vpack.c.b16 %v1000, %v999
      %v1016 = vpack.c.b16 %v1002, %v1001
      %v1017 = vpack.c.b16 %v1004, %v1003
      %v1018 = vpack.c.b16 %v1006, %v1005
      %v1019 = vpack.c.b16 %v1008, %v1007
      %v1020 = vpack.c.b16 %v1010, %v1009
      %v1021 = vpack.c.b16 %v1012, %v1011
      %v1022 = vpack.c.b16 %v1014, %v1013
      %1031 = vmatprep.subr.bf16.mxu0 0
      %1032 = vmatpush1.bf16.msra.mxu0 %v1015
      %1033 = vmatprep.subr.bf16.mxu0 0
      %1034 = vmatpush1.bf16.msra.mxu0 %v1016
      %1035 = vmatprep.subr.bf16.mxu0 0
      %1036 = vmatpush1.bf16.msra.mxu0 %v1017
      %1037 = vmatprep.subr.bf16.mxu0 0
      %1038 = vmatpush1.bf16.msra.mxu0 %v1018
      %1039 = vmatprep.subr.bf16.mxu0 0
      %1040 = vmatpush1.bf16.msra.mxu0 %v1019
      %1041 = vmatprep.subr.bf16.mxu0 0
      %1042 = vmatpush1.bf16.msra.mxu0 %v1020
      %1043 = vmatprep.subr.bf16.mxu0 0
      %1044 = vmatpush1.bf16.msra.mxu0 %v1021
      %1045 = vmatprep.subr.bf16.mxu0 0
      %1046 = vmatpush1.bf16.msra.mxu0 %v1022
      %1047 = vmatprep.subr.bf16.mxu0 0
      %1048 = vmatpush1.bf16.msra.mxu0 0
      %1049 = vmatprep.subr.bf16.mxu0 0
      %1050 = vmatpush1.bf16.msra.mxu0 0
      %1051 = vmatprep.subr.bf16.mxu0 0
      %1052 = vmatpush1.bf16.msra.mxu0 0
      %1053 = vmatprep.subr.bf16.mxu0 0
      %1054 = vmatpush1.bf16.msra.mxu0 0
      %1055 = vmatprep.subr.bf16.mxu0 0
      %1056 = vmatpush1.bf16.msra.mxu0 0
      %1057 = vmatprep.subr.bf16.mxu0 0
      %1058 = vmatpush1.bf16.msra.mxu0 0
      %1059 = vmatprep.subr.bf16.mxu0 0
      %1060 = vmatpush1.bf16.msra.mxu0 0
      %1061 = vmatprep.subr.bf16.mxu0 0
      %1062 = vmatpush1.bf16.msra.mxu0 0
      %1063 = vmatprep.mubr.bf16.mxu0 0
      %1064 = vmatmul.mubr.bf16.gmra.mrb[0].mxu0 %v982
      %v1065 = vpop.f32.mrb[0].mxu0
      %v1066 = vadd.f32 0.0, %v1065
      %v1067 = vpop.f32.mrb[0].mxu0
      %v1068 = vpop.f32.mrb[0].mxu0
      %v1069 = vadd.f32 0.0, %v1068
      %v1070 = vpop.f32.mrb[0].mxu0
      %1071 = vdwg.mxu0
      %v1072 = vadd.f32 %v840, %v1066
      %v1073 = vadd.f32 %v841, %v1069
      %v1074 = vld [vmem:[%s3 + $0x60] sm:$0x1]
      %v1075 = vlaneseq
      %v1076 = vshrl.u32 %v1075, 7
      %v1077 = vsub.s32 0, %v1076
      %v1078 = vrot.slane %v1074, %v1077
      %v1079 = vadd.f32 %v1072, %v1078
      %v1080 = vadd.f32 %v1073, %v1078
      %v1081 = vld [vmem:[%s2 + $0x1a0] sm:$0xf]
      %v1082 = vld [vmem:[%s2 + $0x1a8] sm:$0xf]
      %v1083 = vld [vmem:[%s2 + $0x1b0] sm:$0xf]
      %v1084 = vld [vmem:[%s2 + $0x1b8] sm:$0xf]
      %v1085 = vpack.c.bf16 %v1080, %v1079
      %v1086 = vld [vmem:[%s3 + $0x68] sm:$0x1]
      %v1087 = vlaneseq
      %v1088 = vshrl.u32 %v1087, 7
      %v1089 = vsub.s32 0, %v1088
      %v1090 = vrot.slane %v1086, %v1089
      %v1095 = vunpack.c.l.b16 %v1081
      %v1096 = vunpack.c.l.b16 %v1082
      %v1097 = vunpack.c.l.b16 %v1083
      %v1098 = vunpack.c.l.b16 %v1084
      %v1099 = vpack.c.b16 %v1096, %v1095
      %v1100 = vpack.c.b16 %v1098, %v1097
      %v1104 = vsel %vm374, %v1085, 0
      %1106 = vmatprep.subr.bf16.mxu0 0
      %1107 = vmatpush1.bf16.msra.mxu0 %v1099
      %1108 = vmatprep.subr.bf16.mxu0 0
      %1109 = vmatpush1.bf16.msra.mxu0 %v1100
      %1110 = vmatprep.subr.bf16.mxu0 0
      %1111 = vmatpush1.bf16.msra.mxu0 0
      %1112 = vmatprep.subr.bf16.mxu0 0
      %1113 = vmatpush1.bf16.msra.mxu0 0
      %1114 = vmatprep.subr.bf16.mxu0 0
      %1115 = vmatpush1.bf16.msra.mxu0 0
      %1116 = vmatprep.subr.bf16.mxu0 0
      %1117 = vmatpush1.bf16.msra.mxu0 0
      %1118 = vmatprep.subr.bf16.mxu0 0
      %1119 = vmatpush1.bf16.msra.mxu0 0
      %1120 = vmatprep.subr.bf16.mxu0 0
      %1121 = vmatpush1.bf16.msra.mxu0 0
      %1122 = vmatprep.subr.bf16.mxu0 0
      %1123 = vmatpush1.bf16.msra.mxu0 0
      %1124 = vmatprep.subr.bf16.mxu0 0
      %1125 = vmatpush1.bf16.msra.mxu0 0
      %1126 = vmatprep.subr.bf16.mxu0 0
      %1127 = vmatpush1.bf16.msra.mxu0 0
      %1128 = vmatprep.subr.bf16.mxu0 0
      %1129 = vmatpush1.bf16.msra.mxu0 0
      %1130 = vmatprep.subr.bf16.mxu0 0
      %1131 = vmatpush1.bf16.msra.mxu0 0
      %1132 = vmatprep.subr.bf16.mxu0 0
      %1133 = vmatpush1.bf16.msra.mxu0 0
      %1134 = vmatprep.subr.bf16.mxu0 0
      %1135 = vmatpush1.bf16.msra.mxu0 0
      %1136 = vmatprep.subr.bf16.mxu0 0
      %1137 = vmatpush1.bf16.msra.mxu0 0
      %1138 = vmatprep.mubr.bf16.mxu0 0
      %1139 = vmatmul.mubr.bf16.gmra.mrb[0].mxu0 %v1104
      %v1140 = vpop.f32.mrb[0].mxu0
      %v1141 = vadd.f32 %v1090, %v1140
      %v1142 = vpop.f32.mrb[0].mxu0
      %v1143 = vpop.f32.mrb[0].mxu0
      %v1144 = vadd.f32 %v1090, %v1143
      %v1145 = vpop.f32.mrb[0].mxu0
      %1146 = vdwg.mxu0
      %v1147 = vld [vmem:[%s3 + $0x70] sm:$0x1]
      %v1148 = vlaneseq
      %v1149 = vshrl.u32 %v1148, 7
      %v1150 = vsub.s32 0, %v1149
      %v1151 = vrot.slane %v1147, %v1150
      %v1152 = vadd.f32 %v1141, %v1151
      %v1153 = vadd.f32 %v1144, %v1151
      %v1154 = vld [vmem:[%s3 + $0x10] sm:$0xff]
      %v1155 = vld [vmem:[%s3 + $0x18] sm:$0xff]
      %v1156 = vld [vmem:[%s209] sm:$0x7f]
      %v1157 = vld [vmem:[%s2 + $0x1c0] sm:$0xf]
      %v1158 = vld [vmem:[%s2 + $0x1c8] sm:$0xf]
      %v1159 = vld [vmem:[%s2 + $0x1d0] sm:$0xf]
      %v1160 = vld [vmem:[%s2 + $0x1d8] sm:$0xf]
      %v1161 = vld [vmem:[%s3 + $0x78] sm:$0x1]
      %v1162 = vpack.c.bf16 %v1156, %v1156
      %v1163 = vlaneseq
      %v1164 = vshrl.u32 %v1163, 7
      %v1165 = vsub.s32 0, %v1164
      %v1166 = vrot.slane %v1161, %v1165
      %v1171 = vunpack.c.l.b16 %v1157
      %v1172 = vunpack.c.l.b16 %v1158
      %v1173 = vunpack.c.l.b16 %v1159
      %v1174 = vunpack.c.l.b16 %v1160
      %v1175 = vpack.c.b16 %v1172, %v1171
      %v1176 = vpack.c.b16 %v1174, %v1173
      %v1180 = vsel %vm374, %v1162, 0
      %1182 = vmatprep.subr.bf16.mxu0 0
      %1183 = vmatpush1.bf16.msra.mxu0 %v1175
      %1184 = vmatprep.subr.bf16.mxu0 0
      %1185 = vmatpush1.bf16.msra.mxu0 %v1176
      %1186 = vmatprep.subr.bf16.mxu0 0
      %1187 = vmatpush1.bf16.msra.mxu0 0
      %1188 = vmatprep.subr.bf16.mxu0 0
      %1189 = vmatpush1.bf16.msra.mxu0 0
      %1190 = vmatprep.subr.bf16.mxu0 0
      %1191 = vmatpush1.bf16.msra.mxu0 0
      %1192 = vmatprep.subr.bf16.mxu0 0
      %1193 = vmatpush1.bf16.msra.mxu0 0
      %1194 = vmatprep.subr.bf16.mxu0 0
      %1195 = vmatpush1.bf16.msra.mxu0 0
      %1196 = vmatprep.subr.bf16.mxu0 0
      %1197 = vmatpush1.bf16.msra.mxu0 0
      %1198 = vmatprep.subr.bf16.mxu0 0
      %1199 = vmatpush1.bf16.msra.mxu0 0
      %1200 = vmatprep.subr.bf16.mxu0 0
      %1201 = vmatpush1.bf16.msra.mxu0 0
      %1202 = vmatprep.subr.bf16.mxu0 0
      %1203 = vmatpush1.bf16.msra.mxu0 0
      %1204 = vmatprep.subr.bf16.mxu0 0
      %1205 = vmatpush1.bf16.msra.mxu0 0
      %1206 = vmatprep.subr.bf16.mxu0 0
      %1207 = vmatpush1.bf16.msra.mxu0 0
      %1208 = vmatprep.subr.bf16.mxu0 0
      %1209 = vmatpush1.bf16.msra.mxu0 0
      %1210 = vmatprep.subr.bf16.mxu0 0
      %1211 = vmatpush1.bf16.msra.mxu0 0
      %1212 = vmatprep.subr.bf16.mxu0 0
      %1213 = vmatpush1.bf16.msra.mxu0 0
      %1214 = vmatprep.mubr.bf16.mxu0 0
      %1215 = vmatmul.mubr.bf16.gmra.mrb[0].mxu0 %v1180
      %v1216 = vpop.f32.mrb[0].mxu0
      %v1217 = vadd.f32 %v1166, %v1216
      %v1218 = vpop.f32.mrb[0].mxu0
      %v1219 = vpop.f32.mrb[0].mxu0
      %v1220 = vpop.f32.mrb[0].mxu0
      %1221 = vdwg.mxu0
      %v1222 = vld [vmem:[%s2 + $0x1e0] sm:$0xf]
      %v1223 = vld [vmem:[%s2 + $0x1e8] sm:$0xf]
      %v1224 = vld [vmem:[%s2 + $0x1f0] sm:$0xf]
      %v1225 = vld [vmem:[%s2 + $0x1f8] sm:$0xf]
      %v1226 = vld [vmem:[%s3 + $0x80] sm:$0x1]
      %v1227 = vpack.c.bf16 %v1217, %v1217
      %1229 = vrot.lane.b32.xlu0 %v1227, 96
      %v1230 = vpop.permute.xlu0 %1229
      %v1232 = vsel %vm489, %v1227, 0
      %v1235 = vsel %vm489, %v1230, 0
      %1237 = vmatprep.subr.bf16.mxu0 0
      %1238 = vmatpush1.bf16.xpose.msra.mxu0 %v1235
      %1239 = vmatprep.subr.bf16.mxu0 0
      %1240 = vmatpush1.bf16.xpose.msra.mxu0 0
      %1241 = vmatprep.subr.bf16.mxu0 0
      %1242 = vmatpush1.bf16.xpose.msra.mxu0 0
      %1243 = vmatprep.subr.bf16.mxu0 0
      %1244 = vmatpush1.bf16.xpose.msra.mxu0 0
      %1245 = vmatprep.subr.bf16.mxu0 0
      %1246 = vmatpush1.bf16.xpose.msra.mxu0 0
      %1247 = vmatprep.subr.bf16.mxu0 0
      %1248 = vmatpush1.bf16.xpose.msra.mxu0 0
      %1249 = vmatprep.subr.bf16.mxu0 0
      %1250 = vmatpush1.bf16.xpose.msra.mxu0 0
      %1251 = vmatprep.subr.bf16.mxu0 0
      %1252 = vmatpush1.bf16.xpose.msra.mxu0 0
      %1253 = vmatprep.subr.bf16.mxu0 0
      %1254 = vmatpush1.bf16.xpose.msra.mxu0 0
      %1255 = vmatprep.subr.bf16.mxu0 0
      %1256 = vmatpush1.bf16.xpose.msra.mxu0 0
      %1257 = vmatprep.subr.bf16.mxu0 0
      %1258 = vmatpush1.bf16.xpose.msra.mxu0 0
      %1259 = vmatprep.subr.bf16.mxu0 0
      %1260 = vmatpush1.bf16.xpose.msra.mxu0 0
      %1261 = vmatprep.subr.bf16.mxu0 0
      %1262 = vmatpush1.bf16.xpose.msra.mxu0 0
      %1263 = vmatprep.subr.bf16.mxu0 0
      %1264 = vmatpush1.bf16.xpose.msra.mxu0 0
      %1265 = vmatprep.subr.bf16.mxu0 0
      %1266 = vmatpush1.bf16.xpose.msra.mxu0 0
      %1267 = vmatprep.subr.bf16.mxu0 0
      %1268 = vmatpush1.bf16.xpose.msra.mxu0 0
      %1269 = vmatprep.mubr.bf16.mxu0 0
      %1270 = vmatmul.mubr.bf16.gmra.mrb[0].mxu0 %v1232
      %v1271 = vpop.f32.mrb[0].mxu0
      %v1272 = vadd.f32 0.0, %v1271
      %v1273 = vpop.f32.mrb[0].mxu0
      %v1274 = vpop.f32.mrb[0].mxu0
      %v1275 = vpop.f32.mrb[0].mxu0
      %1276 = vdwg.mxu0
      %v1277 = vmul.f32 %v1272, 0.25
      %vm1278 = vcmask 55296
      %v1279 = vsel %vm1278, %v1277, -inf
      %1280 = vmax.xlane.f32.xlu0 %v1279
      %v1281 = vpop.xlane.xlu0 %1280
      %v1282 = vsub.f32 %v1277, %v1281
      %v1283 = vmul.f32 %v1282, 1.442695
      %v1284 = vpow.pop %v1283
      %v1285 = vsel %vm1278, %v1284, 0.0
      %1286 = vadd.xlane.f32.xlu0 %v1285
      %v1287 = vpop.xlane.xlu0 %1286
      %v1288 = vrcp.pop %v1287
      %v1289 = vmul.f32 %v1284, %v1288
      %v1290 = vpack.c.bf16 %v1289, %v1289
      %1291 = vrot.lane.b32.xlu0 %v1227, 64
      %v1292 = vpop.permute.xlu0 %1291
      %vm1293 = vcmask 56320
      %v1295 = vsel %vm1293, %v1290, 0
      %vm1297 = vcmask 1042432
      %vm1298 = vcmask 1043456
      %v1299 = vsel %vm1297, 4294967295, 65535
      %v1300 = vsel %vm1298, %v1299, 0
      %v1302 = vand.u32 %v1292, %v1300
      %1304 = vmatprep.subr.bf16.mxu0 0
      %1305 = vmatpush1.bf16.msra.mxu0 %v1302
      %1306 = vmatprep.subr.bf16.mxu0 0
      %1307 = vmatpush1.bf16.msra.mxu0 0
      %1308 = vmatprep.subr.bf16.mxu0 0
      %1309 = vmatpush1.bf16.msra.mxu0 0
      %1310 = vmatprep.subr.bf16.mxu0 0
      %1311 = vmatpush1.bf16.msra.mxu0 0
      %1312 = vmatprep.subr.bf16.mxu0 0
      %1313 = vmatpush1.bf16.msra.mxu0 0
      %1314 = vmatprep.subr.bf16.mxu0 0
      %1315 = vmatpush1.bf16.msra.mxu0 0
      %1316 = vmatprep.subr.bf16.mxu0 0
      %1317 = vmatpush1.bf16.msra.mxu0 0
      %1318 = vmatprep.subr.bf16.mxu0 0
      %1319 = vmatpush1.bf16.msra.mxu0 0
      %1320 = vmatprep.subr.bf16.mxu0 0
      %1321 = vmatpush1.bf16.msra.mxu0 0
      %1322 = vmatprep.subr.bf16.mxu0 0
      %1323 = vmatpush1.bf16.msra.mxu0 0
      %1324 = vmatprep.subr.bf16.mxu0 0
      %1325 = vmatpush1.bf16.msra.mxu0 0
      %1326 = vmatprep.subr.bf16.mxu0 0
      %1327 = vmatpush1.bf16.msra.mxu0 0
      %1328 = vmatprep.subr.bf16.mxu0 0
      %1329 = vmatpush1.bf16.msra.mxu0 0
      %1330 = vmatprep.subr.bf16.mxu0 0
      %1331 = vmatpush1.bf16.msra.mxu0 0
      %1332 = vmatprep.subr.bf16.mxu0 0
      %1333 = vmatpush1.bf16.msra.mxu0 0
      %1334 = vmatprep.subr.bf16.mxu0 0
      %1335 = vmatpush1.bf16.msra.mxu0 0
      %1336 = vmatprep.mubr.bf16.mxu0 0
      %1337 = vmatmul.mubr.bf16.gmra.mrb[0].mxu0 %v1295
      %v1338 = vpop.f32.mrb[0].mxu0
      %v1339 = vadd.f32 0.0, %v1338
      %v1340 = vpop.f32.mrb[0].mxu0
      %v1341 = vpop.f32.mrb[0].mxu0
      %v1342 = vpop.f32.mrb[0].mxu0
      %1343 = vdwg.mxu0
      %v1344 = vpack.c.bf16 %v1339, %v1339
      %1345 = vrot.lane.b32.xlu0 %v1227, 112
      %v1346 = vpop.permute.xlu0 %1345
      %1347 = vrot.lane.b32.xlu0 %v1227, 80
      %v1348 = vpop.permute.xlu0 %1347
      %v1350 = vsel %vm489, %v1346, 0
      %v1353 = vsel %vm489, %v1348, 0
      %1355 = vmatprep.subr.bf16.mxu0 0
      %1356 = vmatpush1.bf16.xpose.msra.mxu0 %v1353
      %1357 = vmatprep.subr.bf16.mxu0 0
      %1358 = vmatpush1.bf16.xpose.msra.mxu0 0
      %1359 = vmatprep.subr.bf16.mxu0 0
      %1360 = vmatpush1.bf16.xpose.msra.mxu0 0
      %1361 = vmatprep.subr.bf16.mxu0 0
      %1362 = vmatpush1.bf16.xpose.msra.mxu0 0
      %1363 = vmatprep.subr.bf16.mxu0 0
      %1364 = vmatpush1.bf16.xpose.msra.mxu0 0
      %1365 = vmatprep.subr.bf16.mxu0 0
      %1366 = vmatpush1.bf16.xpose.msra.mxu0 0
      %1367 = vmatprep.subr.bf16.mxu0 0
      %1368 = vmatpush1.bf16.xpose.msra.mxu0 0
      %1369 = vmatprep.subr.bf16.mxu0 0
      %1370 = vmatpush1.bf16.xpose.msra.mxu0 0
      %1371 = vmatprep.subr.bf16.mxu0 0
      %1372 = vmatpush1.bf16.xpose.msra.mxu0 0
      %1373 = vmatprep.subr.bf16.mxu0 0
      %1374 = vmatpush1.bf16.xpose.msra.mxu0 0
      %1375 = vmatprep.subr.bf16.mxu0 0
      %1376 = vmatpush1.bf16.xpose.msra.mxu0 0
      %1377 = vmatprep.subr.bf16.mxu0 0
      %1378 = vmatpush1.bf16.xpose.msra.mxu0 0
      %1379 = vmatprep.subr.bf16.mxu0 0
      %1380 = vmatpush1.bf16.xpose.msra.mxu0 0
      %1381 = vmatprep.subr.bf16.mxu0 0
      %1382 = vmatpush1.bf16.xpose.msra.mxu0 0
      %1383 = vmatprep.subr.bf16.mxu0 0
      %1384 = vmatpush1.bf16.xpose.msra.mxu0 0
      %1385 = vmatprep.subr.bf16.mxu0 0
      %1386 = vmatpush1.bf16.xpose.msra.mxu0 0
      %1387 = vmatprep.mubr.bf16.mxu0 0
      %1388 = vmatmul.mubr.bf16.gmra.mrb[0].mxu0 %v1350
      %v1389 = vpop.f32.mrb[0].mxu0
      %v1390 = vadd.f32 0.0, %v1389
      %v1391 = vpop.f32.mrb[0].mxu0
      %v1392 = vpop.f32.mrb[0].mxu0
      %v1393 = vpop.f32.mrb[0].mxu0
      %1394 = vdwg.mxu0
      %v1395 = vmul.f32 %v1390, 0.25
      %v1396 = vsel %vm1278, %v1395, -inf
      %1397 = vmax.xlane.f32.xlu0 %v1396
      %v1398 = vpop.xlane.xlu0 %1397
      %v1399 = vsub.f32 %v1395, %v1398
      %v1400 = vmul.f32 %v1399, 1.442695
      %v1401 = vpow.pop %v1400
      %v1402 = vsel %vm1278, %v1401, 0.0
      %1403 = vadd.xlane.f32.xlu0 %v1402
      %v1404 = vpop.xlane.xlu0 %1403
      %v1405 = vrcp.pop %v1404
      %v1406 = vmul.f32 %v1401, %v1405
      %v1407 = vpack.c.bf16 %v1406, %v1406
      %1408 = vrot.lane.b32.xlu0 %v1227, 48
      %v1409 = vpop.permute.xlu0 %1408
      %v1411 = vsel %vm1293, %v1407, 0
      %v1414 = vand.u32 %v1409, %v1300
      %1416 = vmatprep.subr.bf16.mxu0 0
      %1417 = vmatpush1.bf16.msra.mxu0 %v1414
      %1418 = vmatprep.subr.bf16.mxu0 0
      %1419 = vmatpush1.bf16.msra.mxu0 0
      %1420 = vmatprep.subr.bf16.mxu0 0
      %1421 = vmatpush1.bf16.msra.mxu0 0
      %1422 = vmatprep.subr.bf16.mxu0 0
      %1423 = vmatpush1.bf16.msra.mxu0 0
      %1424 = vmatprep.subr.bf16.mxu0 0
      %1425 = vmatpush1.bf16.msra.mxu0 0
      %1426 = vmatprep.subr.bf16.mxu0 0
      %1427 = vmatpush1.bf16.msra.mxu0 0
      %1428 = vmatprep.subr.bf16.mxu0 0
      %1429 = vmatpush1.bf16.msra.mxu0 0
      %1430 = vmatprep.subr.bf16.mxu0 0
      %1431 = vmatpush1.bf16.msra.mxu0 0
      %1432 = vmatprep.subr.bf16.mxu0 0
      %1433 = vmatpush1.bf16.msra.mxu0 0
      %1434 = vmatprep.subr.bf16.mxu0 0
      %1435 = vmatpush1.bf16.msra.mxu0 0
      %1436 = vmatprep.subr.bf16.mxu0 0
      %1437 = vmatpush1.bf16.msra.mxu0 0
      %1438 = vmatprep.subr.bf16.mxu0 0
      %1439 = vmatpush1.bf16.msra.mxu0 0
      %1440 = vmatprep.subr.bf16.mxu0 0
      %1441 = vmatpush1.bf16.msra.mxu0 0
      %1442 = vmatprep.subr.bf16.mxu0 0
      %1443 = vmatpush1.bf16.msra.mxu0 0
      %1444 = vmatprep.subr.bf16.mxu0 0
      %1445 = vmatpush1.bf16.msra.mxu0 0
      %1446 = vmatprep.subr.bf16.mxu0 0
      %1447 = vmatpush1.bf16.msra.mxu0 0
      %1448 = vmatprep.mubr.bf16.mxu0 0
      %1449 = vmatmul.mubr.bf16.gmra.mrb[0].mxu0 %v1411
      %v1450 = vpop.f32.mrb[0].mxu0
      %v1451 = vadd.f32 0.0, %v1450
      %v1452 = vpop.f32.mrb[0].mxu0
      %v1453 = vpop.f32.mrb[0].mxu0
      %v1454 = vpop.f32.mrb[0].mxu0
      %1455 = vdwg.mxu0
      %v1456 = vpack.c.bf16 %v1451, %v1451
      %v1459 = vunpack.c.l.b16 %v1224
      %v1460 = vunpack.c.l.b16 %v1225
      %v1461 = vpack.c.b16 %v1460, %v1459
      %v1464 = vsel %vm489, %v1456, 0
      %1466 = vmatprep.subr.bf16.mxu0 0
      %1467 = vmatpush1.bf16.msra.mxu0 %v1461
      %1468 = vmatprep.subr.bf16.mxu0 0
      %1469 = vmatpush1.bf16.msra.mxu0 0
      %1470 = vmatprep.subr.bf16.mxu0 0
      %1471 = vmatpush1.bf16.msra.mxu0 0
      %1472 = vmatprep.subr.bf16.mxu0 0
      %1473 = vmatpush1.bf16.msra.mxu0 0
      %1474 = vmatprep.subr.bf16.mxu0 0
      %1475 = vmatpush1.bf16.msra.mxu0 0
      %1476 = vmatprep.subr.bf16.mxu0 0
      %1477 = vmatpush1.bf16.msra.mxu0 0
      %1478 = vmatprep.subr.bf16.mxu0 0
      %1479 = vmatpush1.bf16.msra.mxu0 0
      %1480 = vmatprep.subr.bf16.mxu0 0
      %1481 = vmatpush1.bf16.msra.mxu0 0
      %1482 = vmatprep.subr.bf16.mxu0 0
      %1483 = vmatpush1.bf16.msra.mxu0 0
      %1484 = vmatprep.subr.bf16.mxu0 0
      %1485 = vmatpush1.bf16.msra.mxu0 0
      %1486 = vmatprep.subr.bf16.mxu0 0
      %1487 = vmatpush1.bf16.msra.mxu0 0
      %1488 = vmatprep.subr.bf16.mxu0 0
      %1489 = vmatpush1.bf16.msra.mxu0 0
      %1490 = vmatprep.subr.bf16.mxu0 0
      %1491 = vmatpush1.bf16.msra.mxu0 0
      %1492 = vmatprep.subr.bf16.mxu0 0
      %1493 = vmatpush1.bf16.msra.mxu0 0
      %1494 = vmatprep.subr.bf16.mxu0 0
      %1495 = vmatpush1.bf16.msra.mxu0 0
      %1496 = vmatprep.subr.bf16.mxu0 0
      %1497 = vmatpush1.bf16.msra.mxu0 0
      %1498 = vmatprep.mubr.bf16.mxu0 0
      %1499 = vmatmul.mubr.bf16.gmra.mrb[0].mxu0 %v1464
      %v1500 = vpop.f32.mrb[0].mxu0
      %v1501 = vadd.f32 0.0, %v1500
      %v1502 = vpop.f32.mrb[0].mxu0
      %v1503 = vpop.f32.mrb[0].mxu0
      %v1504 = vpop.f32.mrb[0].mxu0
      %1505 = vdwg.mxu0
      %v1508 = vunpack.c.l.b16 %v1222
      %v1509 = vunpack.c.l.b16 %v1223
      %v1510 = vpack.c.b16 %v1509, %v1508
      %v1513 = vsel %vm489, %v1344, 0
      %1515 = vmatprep.subr.bf16.mxu0 0
      %1516 = vmatpush1.bf16.msra.mxu0 %v1510
      %1517 = vmatprep.subr.bf16.mxu0 0
      %1518 = vmatpush1.bf16.msra.mxu0 0
      %1519 = vmatprep.subr.bf16.mxu0 0
      %1520 = vmatpush1.bf16.msra.mxu0 0
      %1521 = vmatprep.subr.bf16.mxu0 0
      %1522 = vmatpush1.bf16.msra.mxu0 0
      %1523 = vmatprep.subr.bf16.mxu0 0
      %1524 = vmatpush1.bf16.msra.mxu0 0
      %1525 = vmatprep.subr.bf16.mxu0 0
      %1526 = vmatpush1.bf16.msra.mxu0 0
      %1527 = vmatprep.subr.bf16.mxu0 0
      %1528 = vmatpush1.bf16.msra.mxu0 0
      %1529 = vmatprep.subr.bf16.mxu0 0
      %1530 = vmatpush1.bf16.msra.mxu0 0
      %1531 = vmatprep.subr.bf16.mxu0 0
      %1532 = vmatpush1.bf16.msra.mxu0 0
      %1533 = vmatprep.subr.bf16.mxu0 0
      %1534 = vmatpush1.bf16.msra.mxu0 0
      %1535 = vmatprep.subr.bf16.mxu0 0
      %1536 = vmatpush1.bf16.msra.mxu0 0
      %1537 = vmatprep.subr.bf16.mxu0 0
      %1538 = vmatpush1.bf16.msra.mxu0 0
      %1539 = vmatprep.subr.bf16.mxu0 0
      %1540 = vmatpush1.bf16.msra.mxu0 0
      %1541 = vmatprep.subr.bf16.mxu0 0
      %1542 = vmatpush1.bf16.msra.mxu0 0
      %1543 = vmatprep.subr.bf16.mxu0 0
      %1544 = vmatpush1.bf16.msra.mxu0 0
      %1545 = vmatprep.subr.bf16.mxu0 0
      %1546 = vmatpush1.bf16.msra.mxu0 0
      %1547 = vmatprep.mubr.bf16.mxu0 0
      %1548 = vmatmul.mubr.bf16.gmra.mrb[0].mxu0 %v1513
      %v1549 = vpop.f32.mrb[0].mxu0
      %v1550 = vadd.f32 %v1501, %v1549
      %v1551 = vpop.f32.mrb[0].mxu0
      %v1552 = vpop.f32.mrb[0].mxu0
      %v1553 = vpop.f32.mrb[0].mxu0
      %1554 = vdwg.mxu0
      %v1555 = vlaneseq
      %v1556 = vshrl.u32 %v1555, 7
      %v1557 = vsub.s32 0, %v1556
      %v1558 = vrot.slane %v1226, %v1557
      %v1559 = vadd.f32 %v1550, %v1558
      %v1560 = vadd.f32 %v1156, %v1559
      %v1561 = vld [vmem:[%s3 + $0xc8] sm:$0x1]
      %v1562 = vld [vmem:[%s3 + $0xd0] sm:$0x1]
      %vm1563 = vcmask 260096
      %v1564 = vsel %vm1563, %v1560, 0.0
      %1565 = vadd.xlane.f32.xlu0 %v1564
      %v1566 = vpop.xlane.xlu0 %1565
      %v1567 = vmul.f32 %v1566, %v381
      %v1568 = vsub.f32 %v1560, %v1567
      %v1569 = vmul.f32 %v1568, %v1568
      %v1570 = vsel %vm1563, %v1569, 0.0
      %1571 = vadd.xlane.f32.xlu0 %v1570
      %v1572 = vpop.xlane.xlu0 %1571
      %v1573 = vmul.f32 %v1572, %v381
      %v1574 = vadd.f32 %v1573, 1e-05
      %v1575 = vrsqrt.pop %v1574
      %v1576 = vmul.f32 %v1568, %v1575
      %v1577 = vlaneseq
      %v1578 = vshrl.u32 %v1577, 7
      %v1579 = vsub.s32 0, %v1578
      %v1580 = vrot.slane %v1561, %v1579
      %v1581 = vmul.f32 %v1576, %v1580
      %v1582 = vlaneseq
      %v1583 = vshrl.u32 %v1582, 7
      %v1584 = vsub.s32 0, %v1583
      %v1585 = vrot.slane %v1562, %v1584
      %v1586 = vadd.f32 %v1581, %v1585
      %v1587 = vadd.f32 %v1586, %v1156
      %v1588 = vadd.f32 %v1152, %v1154
      %v1589 = vadd.f32 %v1153, %v1155
      %v1590 = vld [vmem:[%s2 + $0x200] sm:$0xf]
      %v1591 = vld [vmem:[%s2 + $0x208] sm:$0xf]
      %v1592 = vld [vmem:[%s2 + $0x210] sm:$0xf]
      %v1593 = vld [vmem:[%s2 + $0x218] sm:$0xf]
      %v1594 = vld [vmem:[%s3 + $0x88] sm:$0x1]
      %v1595 = vpack.c.bf16 %v1587, %v1587
      %v1596 = vlaneseq
      %v1597 = vshrl.u32 %v1596, 7
      %v1598 = vsub.s32 0, %v1597
      %v1599 = vrot.slane %v1594, %v1598
      %v1604 = vunpack.c.l.b16 %v1590
      %v1605 = vunpack.c.l.b16 %v1591
      %v1606 = vunpack.c.l.b16 %v1592
      %v1607 = vunpack.c.l.b16 %v1593
      %v1608 = vpack.c.b16 %v1605, %v1604
      %v1609 = vpack.c.b16 %v1607, %v1606
      %v1613 = vsel %vm374, %v1595, 0
      %1615 = vmatprep.subr.bf16.mxu0 0
      %1616 = vmatpush1.bf16.msra.mxu0 %v1608
      %1617 = vmatprep.subr.bf16.mxu0 0
      %1618 = vmatpush1.bf16.msra.mxu0 %v1609
      %1619 = vmatprep.subr.bf16.mxu0 0
      %1620 = vmatpush1.bf16.msra.mxu0 0
      %1621 = vmatprep.subr.bf16.mxu0 0
      %1622 = vmatpush1.bf16.msra.mxu0 0
      %1623 = vmatprep.subr.bf16.mxu0 0
      %1624 = vmatpush1.bf16.msra.mxu0 0
      %1625 = vmatprep.subr.bf16.mxu0 0
      %1626 = vmatpush1.bf16.msra.mxu0 0
      %1627 = vmatprep.subr.bf16.mxu0 0
      %1628 = vmatpush1.bf16.msra.mxu0 0
      %1629 = vmatprep.subr.bf16.mxu0 0
      %1630 = vmatpush1.bf16.msra.mxu0 0
      %1631 = vmatprep.subr.bf16.mxu0 0
      %1632 = vmatpush1.bf16.msra.mxu0 0
      %1633 = vmatprep.subr.bf16.mxu0 0
      %1634 = vmatpush1.bf16.msra.mxu0 0
      %1635 = vmatprep.subr.bf16.mxu0 0
      %1636 = vmatpush1.bf16.msra.mxu0 0
      %1637 = vmatprep.subr.bf16.mxu0 0
      %1638 = vmatpush1.bf16.msra.mxu0 0
      %1639 = vmatprep.subr.bf16.mxu0 0
      %1640 = vmatpush1.bf16.msra.mxu0 0
      %1641 = vmatprep.subr.bf16.mxu0 0
      %1642 = vmatpush1.bf16.msra.mxu0 0
      %1643 = vmatprep.subr.bf16.mxu0 0
      %1644 = vmatpush1.bf16.msra.mxu0 0
      %1645 = vmatprep.subr.bf16.mxu0 0
      %1646 = vmatpush1.bf16.msra.mxu0 0
      %1647 = vmatprep.mubr.bf16.mxu0 0
      %1648 = vmatmul.mubr.bf16.gmra.mrb[0].mxu0 %v1613
      %v1649 = vpop.f32.mrb[0].mxu0
      %v1650 = vadd.f32 %v1599, %v1649
      %v1651 = vpop.f32.mrb[0].mxu0
      %v1652 = vpop.f32.mrb[0].mxu0
      %v1653 = vpop.f32.mrb[0].mxu0
      %1654 = vdwg.mxu0
      %v1655 = vpack.c.bf16 %v1589, %v1588
      %1656 = vrot.lane.b32.xlu0 %v1608, 96
      %v1657 = vpop.permute.xlu0 %1656
      %1658 = vrot.lane.b32.xlu0 %v1609, 96
      %v1659 = vpop.permute.xlu0 %1658
      %1663 = vrot.lane.b32.xlu0 %v1599, 96
      %v1664 = vpop.permute.xlu0 %1663
      %v1667 = vsel %vm374, %v1655, 0
      %1669 = vmatprep.subr.bf16.mxu0 0
      %1670 = vmatpush1.bf16.msra.mxu0 %v1657
      %1671 = vmatprep.subr.bf16.mxu0 0
      %1672 = vmatpush1.bf16.msra.mxu0 %v1659
      %1673 = vmatprep.subr.bf16.mxu0 0
      %1674 = vmatpush1.bf16.msra.mxu0 0
      %1675 = vmatprep.subr.bf16.mxu0 0
      %1676 = vmatpush1.bf16.msra.mxu0 0
      %1677 = vmatprep.subr.bf16.mxu0 0
      %1678 = vmatpush1.bf16.msra.mxu0 0
      %1679 = vmatprep.subr.bf16.mxu0 0
      %1680 = vmatpush1.bf16.msra.mxu0 0
      %1681 = vmatprep.subr.bf16.mxu0 0
      %1682 = vmatpush1.bf16.msra.mxu0 0
      %1683 = vmatprep.subr.bf16.mxu0 0
      %1684 = vmatpush1.bf16.msra.mxu0 0
      %1685 = vmatprep.subr.bf16.mxu0 0
      %1686 = vmatpush1.bf16.msra.mxu0 0
      %1687 = vmatprep.subr.bf16.mxu0 0
      %1688 = vmatpush1.bf16.msra.mxu0 0
      %1689 = vmatprep.subr.bf16.mxu0 0
      %1690 = vmatpush1.bf16.msra.mxu0 0
      %1691 = vmatprep.subr.bf16.mxu0 0
      %1692 = vmatpush1.bf16.msra.mxu0 0
      %1693 = vmatprep.subr.bf16.mxu0 0
      %1694 = vmatpush1.bf16.msra.mxu0 0
      %1695 = vmatprep.subr.bf16.mxu0 0
      %1696 = vmatpush1.bf16.msra.mxu0 0
      %1697 = vmatprep.subr.bf16.mxu0 0
      %1698 = vmatpush1.bf16.msra.mxu0 0
      %1699 = vmatprep.subr.bf16.mxu0 0
      %1700 = vmatpush1.bf16.msra.mxu0 0
      %1701 = vmatprep.mubr.bf16.mxu0 0
      %1702 = vmatmul.mubr.bf16.gmra.mrb[0].mxu0 %v1667
      %v1703 = vpop.f32.mrb[0].mxu0
      %v1704 = vadd.f32 %v1664, %v1703
      %v1705 = vpop.f32.mrb[0].mxu0
      %v1706 = vpop.f32.mrb[0].mxu0
      %v1707 = vadd.f32 %v1664, %v1706
      %v1708 = vpop.f32.mrb[0].mxu0
      %1709 = vdwg.mxu0
      %v1710 = vpack.c.bf16 %v1153, %v1152
      %1711 = vrot.lane.b32.xlu0 %v1608, 64
      %v1712 = vpop.permute.xlu0 %1711
      %1713 = vrot.lane.b32.xlu0 %v1609, 64
      %v1714 = vpop.permute.xlu0 %1713
      %1717 = vrot.lane.b32.xlu0 %v1599, 64
      %v1718 = vpop.permute.xlu0 %1717
      %v1721 = vsel %vm374, %v1710, 0
      %1723 = vmatprep.subr.bf16.mxu0 0
      %1724 = vmatpush1.bf16.msra.mxu0 %v1712
      %1725 = vmatprep.subr.bf16.mxu0 0
      %1726 = vmatpush1.bf16.msra.mxu0 %v1714
      %1727 = vmatprep.subr.bf16.mxu0 0
      %1728 = vmatpush1.bf16.msra.mxu0 0
      %1729 = vmatprep.subr.bf16.mxu0 0
      %1730 = vmatpush1.bf16.msra.mxu0 0
      %1731 = vmatprep.subr.bf16.mxu0 0
      %1732 = vmatpush1.bf16.msra.mxu0 0
      %1733 = vmatprep.subr.bf16.mxu0 0
      %1734 = vmatpush1.bf16.msra.mxu0 0
      %1735 = vmatprep.subr.bf16.mxu0 0
      %1736 = vmatpush1.bf16.msra.mxu0 0
      %1737 = vmatprep.subr.bf16.mxu0 0
      %1738 = vmatpush1.bf16.msra.mxu0 0
      %1739 = vmatprep.subr.bf16.mxu0 0
      %1740 = vmatpush1.bf16.msra.mxu0 0
      %1741 = vmatprep.subr.bf16.mxu0 0
      %1742 = vmatpush1.bf16.msra.mxu0 0
      %1743 = vmatprep.subr.bf16.mxu0 0
      %1744 = vmatpush1.bf16.msra.mxu0 0
      %1745 = vmatprep.subr.bf16.mxu0 0
      %1746 = vmatpush1.bf16.msra.mxu0 0
      %1747 = vmatprep.subr.bf16.mxu0 0
      %1748 = vmatpush1.bf16.msra.mxu0 0
      %1749 = vmatprep.subr.bf16.mxu0 0
      %1750 = vmatpush1.bf16.msra.mxu0 0
      %1751 = vmatprep.subr.bf16.mxu0 0
      %1752 = vmatpush1.bf16.msra.mxu0 0
      %1753 = vmatprep.subr.bf16.mxu0 0
      %1754 = vmatpush1.bf16.msra.mxu0 0
      %1755 = vmatprep.mubr.bf16.mxu0 0
      %1756 = vmatmul.mubr.bf16.gmra.mrb[0].mxu0 %v1721
      %v1757 = vpop.f32.mrb[0].mxu0
      %v1758 = vadd.f32 %v1718, %v1757
      %v1759 = vpop.f32.mrb[0].mxu0
      %v1760 = vpop.f32.mrb[0].mxu0
      %v1761 = vadd.f32 %v1718, %v1760
      %v1762 = vpop.f32.mrb[0].mxu0
      %1763 = vdwg.mxu0
      %v1764 = vld [vmem:[%s2 + $0x220] sm:$0xf]
      %v1765 = vld [vmem:[%s2 + $0x228] sm:$0xf]
      %v1766 = vld [vmem:[%s2 + $0x230] sm:$0xf]
      %v1767 = vld [vmem:[%s2 + $0x238] sm:$0xf]
      %v1768 = vld [vmem:[%s3 + $0x90] sm:$0x1]
      %v1769 = vpack.c.bf16 %v1650, %v1650
      %v1770 = vpack.c.bf16 %v1707, %v1704
      %v1772 = vsel %vm489, %v1769, 0
      %v1775 = vsel %vm489, %v1770, 0
      %1777 = vmatprep.subr.bf16.mxu0 0
      %1778 = vmatpush1.bf16.xpose.msra.mxu0 %v1775
      %1779 = vmatprep.subr.bf16.mxu0 0
      %1780 = vmatpush1.bf16.xpose.msra.mxu0 0
      %1781 = vmatprep.subr.bf16.mxu0 0
      %1782 = vmatpush1.bf16.xpose.msra.mxu0 0
      %1783 = vmatprep.subr.bf16.mxu0 0
      %1784 = vmatpush1.bf16.xpose.msra.mxu0 0
      %1785 = vmatprep.subr.bf16.mxu0 0
      %1786 = vmatpush1.bf16.xpose.msra.mxu0 0
      %1787 = vmatprep.subr.bf16.mxu0 0
      %1788 = vmatpush1.bf16.xpose.msra.mxu0 0
      %1789 = vmatprep.subr.bf16.mxu0 0
      %1790 = vmatpush1.bf16.xpose.msra.mxu0 0
      %1791 = vmatprep.subr.bf16.mxu0 0
      %1792 = vmatpush1.bf16.xpose.msra.mxu0 0
      %1793 = vmatprep.subr.bf16.mxu0 0
      %1794 = vmatpush1.bf16.xpose.msra.mxu0 0
      %1795 = vmatprep.subr.bf16.mxu0 0
      %1796 = vmatpush1.bf16.xpose.msra.mxu0 0
      %1797 = vmatprep.subr.bf16.mxu0 0
      %1798 = vmatpush1.bf16.xpose.msra.mxu0 0
      %1799 = vmatprep.subr.bf16.mxu0 0
      %1800 = vmatpush1.bf16.xpose.msra.mxu0 0
      %1801 = vmatprep.subr.bf16.mxu0 0
      %1802 = vmatpush1.bf16.xpose.msra.mxu0 0
      %1803 = vmatprep.subr.bf16.mxu0 0
      %1804 = vmatpush1.bf16.xpose.msra.mxu0 0
      %1805 = vmatprep.subr.bf16.mxu0 0
      %1806 = vmatpush1.bf16.xpose.msra.mxu0 0
      %1807 = vmatprep.subr.bf16.mxu0 0
      %1808 = vmatpush1.bf16.xpose.msra.mxu0 0
      %1809 = vmatprep.mubr.bf16.mxu0 0
      %1810 = vmatmul.mubr.bf16.gmra.mrb[0].mxu0 %v1772
      %v1811 = vpop.f32.mrb[0].mxu0
      %v1812 = vadd.f32 0.0, %v1811
      %v1813 = vpop.f32.mrb[0].mxu0
      %v1814 = vpop.f32.mrb[0].mxu0
      %v1815 = vpop.f32.mrb[0].mxu0
      %1816 = vdwg.mxu0
      %v1817 = vmul.f32 %v1812, 0.25
      %vm1818 = vcmask 129024
      %v1819 = vsel %vm1818, %v1817, -inf
      %1820 = vmax.xlane.f32.xlu0 %v1819
      %v1821 = vpop.xlane.xlu0 %1820
      %v1822 = vsub.f32 %v1817, %v1821
      %v1823 = vmul.f32 %v1822, 1.442695
      %v1824 = vpow.pop %v1823
      %v1825 = vsel %vm1818, %v1824, 0.0
      %1826 = vadd.xlane.f32.xlu0 %v1825
      %v1827 = vpop.xlane.xlu0 %1826
      %v1828 = vrcp.pop %v1827
      %v1829 = vmul.f32 %v1824, %v1828
      %v1830 = vpack.c.bf16 %v1829, %v1829
      %v1831 = vpack.c.bf16 %v1761, %v1758
      %v1833 = vsel %vm489, %v1830, 0
      %1835 = vmatprep.subr.bf16.mxu0 0
      %1836 = vmatpush1.bf16.msra.mxu0 %v1831
      %1837 = vmatprep.subr.bf16.mxu0 0
      %1838 = vmatpush1.bf16.msra.mxu0 0
      %1839 = vmatprep.subr.bf16.mxu0 0
      %1840 = vmatpush1.bf16.msra.mxu0 0
      %1841 = vmatprep.subr.bf16.mxu0 0
      %1842 = vmatpush1.bf16.msra.mxu0 0
      %1843 = vmatprep.subr.bf16.mxu0 0
      %1844 = vmatpush1.bf16.msra.mxu0 0
      %1845 = vmatprep.subr.bf16.mxu0 0
      %1846 = vmatpush1.bf16.msra.mxu0 0
      %1847 = vmatprep.subr.bf16.mxu0 0
      %1848 = vmatpush1.bf16.msra.mxu0 0
      %1849 = vmatprep.subr.bf16.mxu0 0
      %1850 = vmatpush1.bf16.msra.mxu0 0
      %1851 = vmatprep.subr.bf16.mxu0 0
      %1852 = vmatpush1.bf16.msra.mxu0 0
      %1853 = vmatprep.subr.bf16.mxu0 0
      %1854 = vmatpush1.bf16.msra.mxu0 0
      %1855 = vmatprep.subr.bf16.mxu0 0
      %1856 = vmatpush1.bf16.msra.mxu0 0
      %1857 = vmatprep.subr.bf16.mxu0 0
      %1858 = vmatpush1.bf16.msra.mxu0 0
      %1859 = vmatprep.subr.bf16.mxu0 0
      %1860 = vmatpush1.bf16.msra.mxu0 0
      %1861 = vmatprep.subr.bf16.mxu0 0
      %1862 = vmatpush1.bf16.msra.mxu0 0
      %1863 = vmatprep.subr.bf16.mxu0 0
      %1864 = vmatpush1.bf16.msra.mxu0 0
      %1865 = vmatprep.subr.bf16.mxu0 0
      %1866 = vmatpush1.bf16.msra.mxu0 0
      %1867 = vmatprep.mubr.bf16.mxu0 0
      %1868 = vmatmul.mubr.bf16.gmra.mrb[0].mxu0 %v1833
      %v1869 = vpop.f32.mrb[0].mxu0
      %v1870 = vadd.f32 0.0, %v1869
      %v1871 = vpop.f32.mrb[0].mxu0
      %v1872 = vpop.f32.mrb[0].mxu0
      %v1873 = vpop.f32.mrb[0].mxu0
      %1874 = vdwg.mxu0
      %v1875 = vpack.c.bf16 %v1870, %v1870
      %1877 = vrot.lane.b32.xlu0 %v1769, 112
      %v1878 = vpop.permute.xlu0 %1877
      %1880 = vrot.lane.b32.xlu0 %v1770, 112
      %v1881 = vpop.permute.xlu0 %1880
      %v1883 = vsel %vm489, %v1878, 0
      %v1886 = vsel %vm489, %v1881, 0
      %1888 = vmatprep.subr.bf16.mxu0 0
      %1889 = vmatpush1.bf16.xpose.msra.mxu0 %v1886
      %1890 = vmatprep.subr.bf16.mxu0 0
      %1891 = vmatpush1.bf16.xpose.msra.mxu0 0
      %1892 = vmatprep.subr.bf16.mxu0 0
      %1893 = vmatpush1.bf16.xpose.msra.mxu0 0
      %1894 = vmatprep.subr.bf16.mxu0 0
      %1895 = vmatpush1.bf16.xpose.msra.mxu0 0
      %1896 = vmatprep.subr.bf16.mxu0 0
      %1897 = vmatpush1.bf16.xpose.msra.mxu0 0
      %1898 = vmatprep.subr.bf16.mxu0 0
      %1899 = vmatpush1.bf16.xpose.msra.mxu0 0
      %1900 = vmatprep.subr.bf16.mxu0 0
      %1901 = vmatpush1.bf16.xpose.msra.mxu0 0
      %1902 = vmatprep.subr.bf16.mxu0 0
      %1903 = vmatpush1.bf16.xpose.msra.mxu0 0
      %1904 = vmatprep.subr.bf16.mxu0 0
      %1905 = vmatpush1.bf16.xpose.msra.mxu0 0
      %1906 = vmatprep.subr.bf16.mxu0 0
      %1907 = vmatpush1.bf16.xpose.msra.mxu0 0
      %1908 = vmatprep.subr.bf16.mxu0 0
      %1909 = vmatpush1.bf16.xpose.msra.mxu0 0
      %1910 = vmatprep.subr.bf16.mxu0 0
      %1911 = vmatpush1.bf16.xpose.msra.mxu0 0
      %1912 = vmatprep.subr.bf16.mxu0 0
      %1913 = vmatpush1.bf16.xpose.msra.mxu0 0
      %1914 = vmatprep.subr.bf16.mxu0 0
      %1915 = vmatpush1.bf16.xpose.msra.mxu0 0
      %1916 = vmatprep.subr.bf16.mxu0 0
      %1917 = vmatpush1.bf16.xpose.msra.mxu0 0
      %1918 = vmatprep.subr.bf16.mxu0 0
      %1919 = vmatpush1.bf16.xpose.msra.mxu0 0
      %1920 = vmatprep.mubr.bf16.mxu0 0
      %1921 = vmatmul.mubr.bf16.gmra.mrb[0].mxu0 %v1883
      %v1922 = vpop.f32.mrb[0].mxu0
      %v1923 = vadd.f32 0.0, %v1922
      %v1924 = vpop.f32.mrb[0].mxu0
      %v1925 = vpop.f32.mrb[0].mxu0
      %v1926 = vpop.f32.mrb[0].mxu0
      %1927 = vdwg.mxu0
      %v1928 = vmul.f32 %v1923, 0.25
      %v1929 = vsel %vm1818, %v1928, -inf
      %1930 = vmax.xlane.f32.xlu0 %v1929
      %v1931 = vpop.xlane.xlu0 %1930
      %v1932 = vsub.f32 %v1928, %v1931
      %v1933 = vmul.f32 %v1932, 1.442695
      %v1934 = vpow.pop %v1933
      %v1935 = vsel %vm1818, %v1934, 0.0
      %1936 = vadd.xlane.f32.xlu0 %v1935
      %v1937 = vpop.xlane.xlu0 %1936
      %v1938 = vrcp.pop %v1937
      %v1939 = vmul.f32 %v1934, %v1938
      %v1940 = vpack.c.bf16 %v1939, %v1939
      %1942 = vrot.lane.b32.xlu0 %v1831, 112
      %v1943 = vpop.permute.xlu0 %1942
      %v1946 = vsel %vm489, %v1940, 0
      %1948 = vmatprep.subr.bf16.mxu0 0
      %1949 = vmatpush1.bf16.msra.mxu0 %v1943
      %1950 = vmatprep.subr.bf16.mxu0 0
      %1951 = vmatpush1.bf16.msra.mxu0 0
      %1952 = vmatprep.subr.bf16.mxu0 0
      %1953 = vmatpush1.bf16.msra.mxu0 0
      %1954 = vmatprep.subr.bf16.mxu0 0
      %1955 = vmatpush1.bf16.msra.mxu0 0
      %1956 = vmatprep.subr.bf16.mxu0 0
      %1957 = vmatpush1.bf16.msra.mxu0 0
      %1958 = vmatprep.subr.bf16.mxu0 0
      %1959 = vmatpush1.bf16.msra.mxu0 0
      %1960 = vmatprep.subr.bf16.mxu0 0
      %1961 = vmatpush1.bf16.msra.mxu0 0
      %1962 = vmatprep.subr.bf16.mxu0 0
      %1963 = vmatpush1.bf16.msra.mxu0 0
      %1964 = vmatprep.subr.bf16.mxu0 0
      %1965 = vmatpush1.bf16.msra.mxu0 0
      %1966 = vmatprep.subr.bf16.mxu0 0
      %1967 = vmatpush1.bf16.msra.mxu0 0
      %1968 = vmatprep.subr.bf16.mxu0 0
      %1969 = vmatpush1.bf16.msra.mxu0 0
      %1970 = vmatprep.subr.bf16.mxu0 0
      %1971 = vmatpush1.bf16.msra.mxu0 0
      %1972 = vmatprep.subr.bf16.mxu0 0
      %1973 = vmatpush1.bf16.msra.mxu0 0
      %1974 = vmatprep.subr.bf16.mxu0 0
      %1975 = vmatpush1.bf16.msra.mxu0 0
      %1976 = vmatprep.subr.bf16.mxu0 0
      %1977 = vmatpush1.bf16.msra.mxu0 0
      %1978 = vmatprep.subr.bf16.mxu0 0
      %1979 = vmatpush1.bf16.msra.mxu0 0
      %1980 = vmatprep.mubr.bf16.mxu0 0
      %1981 = vmatmul.mubr.bf16.gmra.mrb[0].mxu0 %v1946
      %v1982 = vpop.f32.mrb[0].mxu0
      %v1983 = vadd.f32 0.0, %v1982
      %v1984 = vpop.f32.mrb[0].mxu0
      %v1985 = vpop.f32.mrb[0].mxu0
      %v1986 = vpop.f32.mrb[0].mxu0
      %1987 = vdwg.mxu0
      %v1988 = vpack.c.bf16 %v1983, %v1983
      %v1991 = vunpack.c.l.b16 %v1766
      %v1992 = vunpack.c.l.b16 %v1767
      %v1993 = vpack.c.b16 %v1992, %v1991
      %v1996 = vsel %vm489, %v1988, 0
      %1998 = vmatprep.subr.bf16.mxu0 0
      %1999 = vmatpush1.bf16.msra.mxu0 %v1993
      %2000 = vmatprep.subr.bf16.mxu0 0
      %2001 = vmatpush1.bf16.msra.mxu0 0
      %2002 = vmatprep.subr.bf16.mxu0 0
      %2003 = vmatpush1.bf16.msra.mxu0 0
      %2004 = vmatprep.subr.bf16.mxu0 0
      %2005 = vmatpush1.bf16.msra.mxu0 0
      %2006 = vmatprep.subr.bf16.mxu0 0
      %2007 = vmatpush1.bf16.msra.mxu0 0
      %2008 = vmatprep.subr.bf16.mxu0 0
      %2009 = vmatpush1.bf16.msra.mxu0 0
      %2010 = vmatprep.subr.bf16.mxu0 0
      %2011 = vmatpush1.bf16.msra.mxu0 0
      %2012 = vmatprep.subr.bf16.mxu0 0
      %2013 = vmatpush1.bf16.msra.mxu0 0
      %2014 = vmatprep.subr.bf16.mxu0 0
      %2015 = vmatpush1.bf16.msra.mxu0 0
      %2016 = vmatprep.subr.bf16.mxu0 0
      %2017 = vmatpush1.bf16.msra.mxu0 0
      %2018 = vmatprep.subr.bf16.mxu0 0
      %2019 = vmatpush1.bf16.msra.mxu0 0
      %2020 = vmatprep.subr.bf16.mxu0 0
      %2021 = vmatpush1.bf16.msra.mxu0 0
      %2022 = vmatprep.subr.bf16.mxu0 0
      %2023 = vmatpush1.bf16.msra.mxu0 0
      %2024 = vmatprep.subr.bf16.mxu0 0
      %2025 = vmatpush1.bf16.msra.mxu0 0
      %2026 = vmatprep.subr.bf16.mxu0 0
      %2027 = vmatpush1.bf16.msra.mxu0 0
      %2028 = vmatprep.subr.bf16.mxu0 0
      %2029 = vmatpush1.bf16.msra.mxu0 0
      %2030 = vmatprep.mubr.bf16.mxu0 0
      %2031 = vmatmul.mubr.bf16.gmra.mrb[0].mxu0 %v1996
      %v2032 = vpop.f32.mrb[0].mxu0
      %v2033 = vadd.f32 0.0, %v2032
      %v2034 = vpop.f32.mrb[0].mxu0
      %v2035 = vpop.f32.mrb[0].mxu0
      %v2036 = vpop.f32.mrb[0].mxu0
      %2037 = vdwg.mxu0
      %v2040 = vunpack.c.l.b16 %v1764
      %v2041 = vunpack.c.l.b16 %v1765
      %v2042 = vpack.c.b16 %v2041, %v2040
      %v2045 = vsel %vm489, %v1875, 0
      %2047 = vmatprep.subr.bf16.mxu0 0
      %2048 = vmatpush1.bf16.msra.mxu0 %v2042
      %2049 = vmatprep.subr.bf16.mxu0 0
      %2050 = vmatpush1.bf16.msra.mxu0 0
      %2051 = vmatprep.subr.bf16.mxu0 0
      %2052 = vmatpush1.bf16.msra.mxu0 0
      %2053 = vmatprep.subr.bf16.mxu0 0
      %2054 = vmatpush1.bf16.msra.mxu0 0
      %2055 = vmatprep.subr.bf16.mxu0 0
      %2056 = vmatpush1.bf16.msra.mxu0 0
      %2057 = vmatprep.subr.bf16.mxu0 0
      %2058 = vmatpush1.bf16.msra.mxu0 0
      %2059 = vmatprep.subr.bf16.mxu0 0
      %2060 = vmatpush1.bf16.msra.mxu0 0
      %2061 = vmatprep.subr.bf16.mxu0 0
      %2062 = vmatpush1.bf16.msra.mxu0 0
      %2063 = vmatprep.subr.bf16.mxu0 0
      %2064 = vmatpush1.bf16.msra.mxu0 0
      %2065 = vmatprep.subr.bf16.mxu0 0
      %2066 = vmatpush1.bf16.msra.mxu0 0
      %2067 = vmatprep.subr.bf16.mxu0 0
      %2068 = vmatpush1.bf16.msra.mxu0 0
      %2069 = vmatprep.subr.bf16.mxu0 0
      %2070 = vmatpush1.bf16.msra.mxu0 0
      %2071 = vmatprep.subr.bf16.mxu0 0
      %2072 = vmatpush1.bf16.msra.mxu0 0
      %2073 = vmatprep.subr.bf16.mxu0 0
      %2074 = vmatpush1.bf16.msra.mxu0 0
      %2075 = vmatprep.subr.bf16.mxu0 0
      %2076 = vmatpush1.bf16.msra.mxu0 0
      %2077 = vmatprep.subr.bf16.mxu0 0
      %2078 = vmatpush1.bf16.msra.mxu0 0
      %2079 = vmatprep.mubr.bf16.mxu0 0
      %2080 = vmatmul.mubr.bf16.gmra.mrb[0].mxu0 %v2045
      %v2081 = vpop.f32.mrb[0].mxu0
      %v2082 = vadd.f32 %v2033, %v2081
      %v2083 = vpop.f32.mrb[0].mxu0
      %v2084 = vpop.f32.mrb[0].mxu0
      %v2085 = vpop.f32.mrb[0].mxu0
      %2086 = vdwg.mxu0
      %v2087 = vlaneseq
      %v2088 = vshrl.u32 %v2087, 7
      %v2089 = vsub.s32 0, %v2088
      %v2090 = vrot.slane %v1768, %v2089
      %v2091 = vadd.f32 %v2082, %v2090
      %v2092 = vadd.f32 %v1586, %v2091
      %v2093 = vld [vmem:[%s3 + $0xc9] sm:$0x1]
      %v2094 = vld [vmem:[%s3 + $0xd1] sm:$0x1]
      %v2095 = vsel %vm1563, %v2092, 0.0
      %2096 = vadd.xlane.f32.xlu0 %v2095
      %v2097 = vpop.xlane.xlu0 %2096
      %v2098 = vmul.f32 %v2097, %v381
      %v2099 = vsub.f32 %v2092, %v2098
      %v2100 = vmul.f32 %v2099, %v2099
      %v2101 = vsel %vm1563, %v2100, 0.0
      %2102 = vadd.xlane.f32.xlu0 %v2101
      %v2103 = vpop.xlane.xlu0 %2102
      %v2104 = vmul.f32 %v2103, %v381
      %v2105 = vadd.f32 %v2104, 1e-05
      %v2106 = vrsqrt.pop %v2105
      %v2107 = vmul.f32 %v2099, %v2106
      %v2108 = vlaneseq
      %v2109 = vshrl.u32 %v2108, 7
      %v2110 = vsub.s32 0, %v2109
      %v2111 = vrot.slane %v2093, %v2110
      %v2112 = vmul.f32 %v2107, %v2111
      %v2113 = vlaneseq
      %v2114 = vshrl.u32 %v2113, 7
      %v2115 = vsub.s32 0, %v2114
      %v2116 = vrot.slane %v2094, %v2115
      %v2117 = vadd.f32 %v2112, %v2116
      %v2118 = vld [vmem:[%s2 + $0x2c0] sm:$0xf]
      %v2119 = vld [vmem:[%s2 + $0x2c8] sm:$0xf]
      %v2120 = vld [vmem:[%s2 + $0x2d0] sm:$0xf]
      %v2121 = vld [vmem:[%s2 + $0x2d8] sm:$0xf]
      %v2122 = vpack.c.bf16 %v2117, %v2117
      %v2123 = vld [vmem:[%s3 + $0xb8] sm:$0x1]
      %v2124 = vlaneseq
      %v2125 = vshrl.u32 %v2124, 7
      %v2126 = vsub.s32 0, %v2125
      %v2127 = vrot.slane %v2123, %v2126
      %v2132 = vunpack.c.l.b16 %v2118
      %v2133 = vunpack.c.l.b16 %v2119
      %v2134 = vunpack.c.l.b16 %v2120
      %v2135 = vunpack.c.l.b16 %v2121
      %v2136 = vpack.c.b16 %v2133, %v2132
      %v2137 = vpack.c.b16 %v2135, %v2134
      %v2141 = vsel %vm374, %v2122, 0
      %2143 = vmatprep.subr.bf16.mxu0 0
      %2144 = vmatpush1.bf16.msra.mxu0 %v2136
      %2145 = vmatprep.subr.bf16.mxu0 0
      %2146 = vmatpush1.bf16.msra.mxu0 %v2137
      %2147 = vmatprep.subr.bf16.mxu0 0
      %2148 = vmatpush1.bf16.msra.mxu0 0
      %2149 = vmatprep.subr.bf16.mxu0 0
      %2150 = vmatpush1.bf16.msra.mxu0 0
      %2151 = vmatprep.subr.bf16.mxu0 0
      %2152 = vmatpush1.bf16.msra.mxu0 0
      %2153 = vmatprep.subr.bf16.mxu0 0
      %2154 = vmatpush1.bf16.msra.mxu0 0
      %2155 = vmatprep.subr.bf16.mxu0 0
      %2156 = vmatpush1.bf16.msra.mxu0 0
      %2157 = vmatprep.subr.bf16.mxu0 0
      %2158 = vmatpush1.bf16.msra.mxu0 0
      %2159 = vmatprep.subr.bf16.mxu0 0
      %2160 = vmatpush1.bf16.msra.mxu0 0
      %2161 = vmatprep.subr.bf16.mxu0 0
      %2162 = vmatpush1.bf16.msra.mxu0 0
      %2163 = vmatprep.subr.bf16.mxu0 0
      %2164 = vmatpush1.bf16.msra.mxu0 0
      %2165 = vmatprep.subr.bf16.mxu0 0
      %2166 = vmatpush1.bf16.msra.mxu0 0
      %2167 = vmatprep.subr.bf16.mxu0 0
      %2168 = vmatpush1.bf16.msra.mxu0 0
      %2169 = vmatprep.subr.bf16.mxu0 0
      %2170 = vmatpush1.bf16.msra.mxu0 0
      %2171 = vmatprep.subr.bf16.mxu0 0
      %2172 = vmatpush1.bf16.msra.mxu0 0
      %2173 = vmatprep.subr.bf16.mxu0 0
      %2174 = vmatpush1.bf16.msra.mxu0 0
      %2175 = vmatprep.mubr.bf16.mxu0 0
      %2176 = vmatmul.mubr.bf16.gmra.mrb[0].mxu0 %v2141
      %v2177 = vpop.f32.mrb[0].mxu0
      %v2178 = vadd.f32 %v2127, %v2177
      %v2179 = vpop.f32.mrb[0].mxu0
      %v2180 = vpop.f32.mrb[0].mxu0
      %v2181 = vpop.f32.mrb[0].mxu0
      %2182 = vdwg.mxu0
      %v2183 = vmax.f32 %v2178, 0.0
      %v2184 = vld [vmem:[%s2 + $0x2e0] sm:$0xf]
      %v2185 = vld [vmem:[%s2 + $0x2e8] sm:$0xf]
      %v2186 = vld [vmem:[%s2 + $0x2f0] sm:$0xf]
      %v2187 = vld [vmem:[%s2 + $0x2f8] sm:$0xf]
      %v2188 = vld [vmem:[%s2 + $0x300] sm:$0xf]
      %v2189 = vld [vmem:[%s2 + $0x308] sm:$0xf]
      %v2190 = vld [vmem:[%s2 + $0x310] sm:$0xf]
      %v2191 = vld [vmem:[%s2 + $0x318] sm:$0xf]
      %v2192 = vpack.c.bf16 %v2183, %v2183
      %v2201 = vunpack.c.l.b16 %v2184
      %v2202 = vunpack.c.l.b16 %v2185
      %v2203 = vunpack.c.l.b16 %v2186
      %v2204 = vunpack.c.l.b16 %v2187
      %v2205 = vunpack.c.l.b16 %v2188
      %v2206 = vunpack.c.l.b16 %v2189
      %v2207 = vunpack.c.l.b16 %v2190
      %v2208 = vunpack.c.l.b16 %v2191
      %v2209 = vpack.c.b16 %v2202, %v2201
      %v2210 = vpack.c.b16 %v2204, %v2203
      %v2211 = vpack.c.b16 %v2206, %v2205
      %v2212 = vpack.c.b16 %v2208, %v2207
      %v2218 = vsel %vm323, %v2192, 0
      %2220 = vmatprep.subr.bf16.mxu0 0
      %2221 = vmatpush1.bf16.msra.mxu0 %v2209
      %2222 = vmatprep.subr.bf16.mxu0 0
      %2223 = vmatpush1.bf16.msra.mxu0 %v2210
      %2224 = vmatprep.subr.bf16.mxu0 0
      %2225 = vmatpush1.bf16.msra.mxu0 %v2211
      %2226 = vmatprep.subr.bf16.mxu0 0
      %2227 = vmatpush1.bf16.msra.mxu0 %v2212
      %2228 = vmatprep.subr.bf16.mxu0 0
      %2229 = vmatpush1.bf16.msra.mxu0 0
      %2230 = vmatprep.subr.bf16.mxu0 0
      %2231 = vmatpush1.bf16.msra.mxu0 0
      %2232 = vmatprep.subr.bf16.mxu0 0
      %2233 = vmatpush1.bf16.msra.mxu0 0
      %2234 = vmatprep.subr.bf16.mxu0 0
      %2235 = vmatpush1.bf16.msra.mxu0 0
      %2236 = vmatprep.subr.bf16.mxu0 0
      %2237 = vmatpush1.bf16.msra.mxu0 0
      %2238 = vmatprep.subr.bf16.mxu0 0
      %2239 = vmatpush1.bf16.msra.mxu0 0
      %2240 = vmatprep.subr.bf16.mxu0 0
      %2241 = vmatpush1.bf16.msra.mxu0 0
      %2242 = vmatprep.subr.bf16.mxu0 0
      %2243 = vmatpush1.bf16.msra.mxu0 0
      %2244 = vmatprep.subr.bf16.mxu0 0
      %2245 = vmatpush1.bf16.msra.mxu0 0
      %2246 = vmatprep.subr.bf16.mxu0 0
      %2247 = vmatpush1.bf16.msra.mxu0 0
      %2248 = vmatprep.subr.bf16.mxu0 0
      %2249 = vmatpush1.bf16.msra.mxu0 0
      %2250 = vmatprep.subr.bf16.mxu0 0
      %2251 = vmatpush1.bf16.msra.mxu0 0
      %2252 = vmatprep.mubr.bf16.mxu0 0
      %2253 = vmatmul.mubr.bf16.gmra.mrb[0].mxu0 %v2218
      %v2254 = vpop.f32.mrb[0].mxu0
      %v2255 = vadd.f32 0.0, %v2254
      %v2256 = vpop.f32.mrb[0].mxu0
      %v2257 = vpop.f32.mrb[0].mxu0
      %v2258 = vpop.f32.mrb[0].mxu0
      %2259 = vdwg.mxu0
      %v2260 = vadd.f32 %v2117, %v2255
      %v2261 = vld [vmem:[%s3 + $0xc0] sm:$0x1]
      %v2262 = vlaneseq
      %v2263 = vshrl.u32 %v2262, 7
      %v2264 = vsub.s32 0, %v2263
      %v2265 = vrot.slane %v2261, %v2264
      %v2266 = vadd.f32 %v2260, %v2265
      %v2267 = vld [vmem:[%s3 + $0xca] sm:$0x1]
      %v2268 = vld [vmem:[%s3 + $0xd2] sm:$0x1]
      %v2269 = vsel %vm1563, %v2266, 0.0
      %2270 = vadd.xlane.f32.xlu0 %v2269
      %v2271 = vpop.xlane.xlu0 %2270
      %v2272 = vmul.f32 %v2271, %v381
      %v2273 = vsub.f32 %v2266, %v2272
      %v2274 = vmul.f32 %v2273, %v2273
      %v2275 = vsel %vm1563, %v2274, 0.0
      %2276 = vadd.xlane.f32.xlu0 %v2275
      %v2277 = vpop.xlane.xlu0 %2276
      %v2278 = vmul.f32 %v2277, %v381
      %v2279 = vadd.f32 %v2278, 1e-05
      %v2280 = vrsqrt.pop %v2279
      %v2281 = vmul.f32 %v2273, %v2280
      %v2282 = vlaneseq
      %v2283 = vshrl.u32 %v2282, 7
      %v2284 = vsub.s32 0, %v2283
      %v2285 = vrot.slane %v2267, %v2284
      %v2286 = vmul.f32 %v2281, %v2285
      %v2287 = vlaneseq
      %v2288 = vshrl.u32 %v2287, 7
      %v2289 = vsub.s32 0, %v2288
      %v2290 = vrot.slane %v2268, %v2289
      %v2291 = vadd.f32 %v2286, %v2290
      %v2292 = vadd.f32 %v2291, %v1156
      %v2293 = vld [vmem:[%s2 + $0x240] sm:$0xf]
      %v2294 = vld [vmem:[%s2 + $0x248] sm:$0xf]
      %v2295 = vld [vmem:[%s2 + $0x250] sm:$0xf]
      %v2296 = vld [vmem:[%s2 + $0x258] sm:$0xf]
      %v2297 = vld [vmem:[%s3 + $0x98] sm:$0x1]
      %v2298 = vlaneseq
      %v2299 = vshrl.u32 %v2298, 7
      %v2300 = vsub.s32 0, %v2299
      %v2301 = vrot.slane %v2297, %v2300
      %v2306 = vunpack.c.l.b16 %v2293
      %v2307 = vunpack.c.l.b16 %v2294
      %v2308 = vunpack.c.l.b16 %v2295
      %v2309 = vunpack.c.l.b16 %v2296
      %v2310 = vpack.c.b16 %v2307, %v2306
      %v2311 = vpack.c.b16 %v2309, %v2308
      %2314 = vmatprep.subr.bf16.mxu0 0
      %2315 = vmatpush1.bf16.msra.mxu0 %v2310
      %2316 = vmatprep.subr.bf16.mxu0 0
      %2317 = vmatpush1.bf16.msra.mxu0 %v2311
      %2318 = vmatprep.subr.bf16.mxu0 0
      %2319 = vmatpush1.bf16.msra.mxu0 0
      %2320 = vmatprep.subr.bf16.mxu0 0
      %2321 = vmatpush1.bf16.msra.mxu0 0
      %2322 = vmatprep.subr.bf16.mxu0 0
      %2323 = vmatpush1.bf16.msra.mxu0 0
      %2324 = vmatprep.subr.bf16.mxu0 0
      %2325 = vmatpush1.bf16.msra.mxu0 0
      %2326 = vmatprep.subr.bf16.mxu0 0
      %2327 = vmatpush1.bf16.msra.mxu0 0
      %2328 = vmatprep.subr.bf16.mxu0 0
      %2329 = vmatpush1.bf16.msra.mxu0 0
      %2330 = vmatprep.subr.bf16.mxu0 0
      %2331 = vmatpush1.bf16.msra.mxu0 0
      %2332 = vmatprep.subr.bf16.mxu0 0
      %2333 = vmatpush1.bf16.msra.mxu0 0
      %2334 = vmatprep.subr.bf16.mxu0 0
      %2335 = vmatpush1.bf16.msra.mxu0 0
      %2336 = vmatprep.subr.bf16.mxu0 0
      %2337 = vmatpush1.bf16.msra.mxu0 0
      %2338 = vmatprep.subr.bf16.mxu0 0
      %2339 = vmatpush1.bf16.msra.mxu0 0
      %2340 = vmatprep.subr.bf16.mxu0 0
      %2341 = vmatpush1.bf16.msra.mxu0 0
      %2342 = vmatprep.subr.bf16.mxu0 0
      %2343 = vmatpush1.bf16.msra.mxu0 0
      %2344 = vmatprep.subr.bf16.mxu0 0
      %2345 = vmatpush1.bf16.msra.mxu0 0
      %2346 = vmatprep.mubr.bf16.mxu0 0
      %2347 = vmatmul.mubr.bf16.gmra.mrb[0].mxu0 %v1667
      %v2348 = vpop.f32.mrb[0].mxu0
      %v2349 = vadd.f32 %v2301, %v2348
      %v2350 = vpop.f32.mrb[0].mxu0
      %v2351 = vpop.f32.mrb[0].mxu0
      %v2352 = vadd.f32 %v2301, %v2351
      %v2353 = vpop.f32.mrb[0].mxu0
      %2354 = vdwg.mxu0
      %v2355 = vpack.c.bf16 %v2292, %v2292
      %2356 = vrot.lane.b32.xlu0 %v2310, 96
      %v2357 = vpop.permute.xlu0 %2356
      %2358 = vrot.lane.b32.xlu0 %v2311, 96
      %v2359 = vpop.permute.xlu0 %2358
      %2363 = vrot.lane.b32.xlu0 %v2301, 96
      %v2364 = vpop.permute.xlu0 %2363
      %v2367 = vsel %vm374, %v2355, 0
      %2369 = vmatprep.subr.bf16.mxu0 0
      %2370 = vmatpush1.bf16.msra.mxu0 %v2357
      %2371 = vmatprep.subr.bf16.mxu0 0
      %2372 = vmatpush1.bf16.msra.mxu0 %v2359
      %2373 = vmatprep.subr.bf16.mxu0 0
      %2374 = vmatpush1.bf16.msra.mxu0 0
      %2375 = vmatprep.subr.bf16.mxu0 0
      %2376 = vmatpush1.bf16.msra.mxu0 0
      %2377 = vmatprep.subr.bf16.mxu0 0
      %2378 = vmatpush1.bf16.msra.mxu0 0
      %2379 = vmatprep.subr.bf16.mxu0 0
      %2380 = vmatpush1.bf16.msra.mxu0 0
      %2381 = vmatprep.subr.bf16.mxu0 0
      %2382 = vmatpush1.bf16.msra.mxu0 0
      %2383 = vmatprep.subr.bf16.mxu0 0
      %2384 = vmatpush1.bf16.msra.mxu0 0
      %2385 = vmatprep.subr.bf16.mxu0 0
      %2386 = vmatpush1.bf16.msra.mxu0 0
      %2387 = vmatprep.subr.bf16.mxu0 0
      %2388 = vmatpush1.bf16.msra.mxu0 0
      %2389 = vmatprep.subr.bf16.mxu0 0
      %2390 = vmatpush1.bf16.msra.mxu0 0
      %2391 = vmatprep.subr.bf16.mxu0 0
      %2392 = vmatpush1.bf16.msra.mxu0 0
      %2393 = vmatprep.subr.bf16.mxu0 0
      %2394 = vmatpush1.bf16.msra.mxu0 0
      %2395 = vmatprep.subr.bf16.mxu0 0
      %2396 = vmatpush1.bf16.msra.mxu0 0
      %2397 = vmatprep.subr.bf16.mxu0 0
      %2398 = vmatpush1.bf16.msra.mxu0 0
      %2399 = vmatprep.subr.bf16.mxu0 0
      %2400 = vmatpush1.bf16.msra.mxu0 0
      %2401 = vmatprep.mubr.bf16.mxu0 0
      %2402 = vmatmul.mubr.bf16.gmra.mrb[0].mxu0 %v2367
      %v2403 = vpop.f32.mrb[0].mxu0
      %v2404 = vadd.f32 %v2364, %v2403
      %v2405 = vpop.f32.mrb[0].mxu0
      %v2406 = vpop.f32.mrb[0].mxu0
      %v2407 = vpop.f32.mrb[0].mxu0
      %2408 = vdwg.mxu0
      %v2409 = vpack.c.bf16 %v2291, %v2291
      %2410 = vrot.lane.b32.xlu0 %v2310, 64
      %v2411 = vpop.permute.xlu0 %2410
      %2412 = vrot.lane.b32.xlu0 %v2311, 64
      %v2413 = vpop.permute.xlu0 %2412
      %2416 = vrot.lane.b32.xlu0 %v2301, 64
      %v2417 = vpop.permute.xlu0 %2416
      %v2420 = vsel %vm374, %v2409, 0
      %2422 = vmatprep.subr.bf16.mxu0 0
      %2423 = vmatpush1.bf16.msra.mxu0 %v2411
      %2424 = vmatprep.subr.bf16.mxu0 0
      %2425 = vmatpush1.bf16.msra.mxu0 %v2413
      %2426 = vmatprep.subr.bf16.mxu0 0
      %2427 = vmatpush1.bf16.msra.mxu0 0
      %2428 = vmatprep.subr.bf16.mxu0 0
      %2429 = vmatpush1.bf16.msra.mxu0 0
      %2430 = vmatprep.subr.bf16.mxu0 0
      %2431 = vmatpush1.bf16.msra.mxu0 0
      %2432 = vmatprep.subr.bf16.mxu0 0
      %2433 = vmatpush1.bf16.msra.mxu0 0
      %2434 = vmatprep.subr.bf16.mxu0 0
      %2435 = vmatpush1.bf16.msra.mxu0 0
      %2436 = vmatprep.subr.bf16.mxu0 0
      %2437 = vmatpush1.bf16.msra.mxu0 0
      %2438 = vmatprep.subr.bf16.mxu0 0
      %2439 = vmatpush1.bf16.msra.mxu0 0
      %2440 = vmatprep.subr.bf16.mxu0 0
      %2441 = vmatpush1.bf16.msra.mxu0 0
      %2442 = vmatprep.subr.bf16.mxu0 0
      %2443 = vmatpush1.bf16.msra.mxu0 0
      %2444 = vmatprep.subr.bf16.mxu0 0
      %2445 = vmatpush1.bf16.msra.mxu0 0
      %2446 = vmatprep.subr.bf16.mxu0 0
      %2447 = vmatpush1.bf16.msra.mxu0 0
      %2448 = vmatprep.subr.bf16.mxu0 0
      %2449 = vmatpush1.bf16.msra.mxu0 0
      %2450 = vmatprep.subr.bf16.mxu0 0
      %2451 = vmatpush1.bf16.msra.mxu0 0
      %2452 = vmatprep.subr.bf16.mxu0 0
      %2453 = vmatpush1.bf16.msra.mxu0 0
      %2454 = vmatprep.mubr.bf16.mxu0 0
      %2455 = vmatmul.mubr.bf16.gmra.mrb[0].mxu0 %v2420
      %v2456 = vpop.f32.mrb[0].mxu0
      %v2457 = vadd.f32 %v2417, %v2456
      %v2458 = vpop.f32.mrb[0].mxu0
      %v2459 = vpop.f32.mrb[0].mxu0
      %v2460 = vpop.f32.mrb[0].mxu0
      %2461 = vdwg.mxu0
      %v2462 = vld [vmem:[%s2 + $0x260] sm:$0xf]
      %v2463 = vld [vmem:[%s2 + $0x268] sm:$0xf]
      %v2464 = vld [vmem:[%s2 + $0x270] sm:$0xf]
      %v2465 = vld [vmem:[%s2 + $0x278] sm:$0xf]
      %v2466 = vld [vmem:[%s3 + $0xa0] sm:$0x1]
      %v2467 = vpack.c.bf16 %v2352, %v2349
      %v2468 = vpack.c.bf16 %v2404, %v2404
      %v2470 = vsel %vm489, %v2467, 0
      %v2473 = vsel %vm489, %v2468, 0
      %2475 = vmatprep.subr.bf16.mxu0 0
      %2476 = vmatpush1.bf16.xpose.msra.mxu0 %v2473
      %2477 = vmatprep.subr.bf16.mxu0 0
      %2478 = vmatpush1.bf16.xpose.msra.mxu0 0
      %2479 = vmatprep.subr.bf16.mxu0 0
      %2480 = vmatpush1.bf16.xpose.msra.mxu0 0
      %2481 = vmatprep.subr.bf16.mxu0 0
      %2482 = vmatpush1.bf16.xpose.msra.mxu0 0
      %2483 = vmatprep.subr.bf16.mxu0 0
      %2484 = vmatpush1.bf16.xpose.msra.mxu0 0
      %2485 = vmatprep.subr.bf16.mxu0 0
      %2486 = vmatpush1.bf16.xpose.msra.mxu0 0
      %2487 = vmatprep.subr.bf16.mxu0 0
      %2488 = vmatpush1.bf16.xpose.msra.mxu0 0
      %2489 = vmatprep.subr.bf16.mxu0 0
      %2490 = vmatpush1.bf16.xpose.msra.mxu0 0
      %2491 = vmatprep.subr.bf16.mxu0 0
      %2492 = vmatpush1.bf16.xpose.msra.mxu0 0
      %2493 = vmatprep.subr.bf16.mxu0 0
      %2494 = vmatpush1.bf16.xpose.msra.mxu0 0
      %2495 = vmatprep.subr.bf16.mxu0 0
      %2496 = vmatpush1.bf16.xpose.msra.mxu0 0
      %2497 = vmatprep.subr.bf16.mxu0 0
      %2498 = vmatpush1.bf16.xpose.msra.mxu0 0
      %2499 = vmatprep.subr.bf16.mxu0 0
      %2500 = vmatpush1.bf16.xpose.msra.mxu0 0
      %2501 = vmatprep.subr.bf16.mxu0 0
      %2502 = vmatpush1.bf16.xpose.msra.mxu0 0
      %2503 = vmatprep.subr.bf16.mxu0 0
      %2504 = vmatpush1.bf16.xpose.msra.mxu0 0
      %2505 = vmatprep.subr.bf16.mxu0 0
      %2506 = vmatpush1.bf16.xpose.msra.mxu0 0
      %2507 = vmatprep.mubr.bf16.mxu0 0
      %2508 = vmatmul.mubr.bf16.gmra.mrb[0].mxu0 %v2470
      %v2509 = vpop.f32.mrb[0].mxu0
      %v2510 = vadd.f32 0.0, %v2509
      %v2511 = vpop.f32.mrb[0].mxu0
      %v2512 = vpop.f32.mrb[0].mxu0
      %v2513 = vadd.f32 0.0, %v2512
      %v2514 = vpop.f32.mrb[0].mxu0
      %2515 = vdwg.mxu0
      %v2516 = vmul.f32 %v2510, 0.25
      %v2517 = vmul.f32 %v2513, 0.25
      %v2518 = vsel %vm1293, %v2516, -inf
      %2519 = vmax.xlane.f32.xlu0 %v2518
      %v2520 = vpop.xlane.xlu0 %2519
      %v2521 = vsel %vm1293, %v2517, -inf
      %2522 = vmax.xlane.f32.xlu0 %v2521
      %v2523 = vpop.xlane.xlu0 %2522
      %v2524 = vsub.f32 %v2516, %v2520
      %v2525 = vsub.f32 %v2517, %v2523
      %v2526 = vmul.f32 %v2524, 1.442695
      %v2527 = vpow.pop %v2526
      %v2528 = vmul.f32 %v2525, 1.442695
      %v2529 = vpow.pop %v2528
      %v2530 = vsel %vm1293, %v2527, 0.0
      %2531 = vadd.xlane.f32.xlu0 %v2530
      %v2532 = vpop.xlane.xlu0 %2531
      %v2533 = vsel %vm1293, %v2529, 0.0
      %2534 = vadd.xlane.f32.xlu0 %v2533
      %v2535 = vpop.xlane.xlu0 %2534
      %v2536 = vrcp.pop %v2532
      %v2537 = vmul.f32 %v2527, %v2536
      %v2538 = vrcp.pop %v2535
      %v2539 = vmul.f32 %v2529, %v2538
      %v2540 = vpack.c.bf16 %v2539, %v2537
      %v2541 = vpack.c.bf16 %v2457, %v2457
      %v2543 = vsel %vm1293, %v2540, 0
      %v2546 = vand.u32 %v2541, %v1300
      %2548 = vmatprep.subr.bf16.mxu0 0
      %2549 = vmatpush1.bf16.msra.mxu0 %v2546
      %2550 = vmatprep.subr.bf16.mxu0 0
      %2551 = vmatpush1.bf16.msra.mxu0 0
      %2552 = vmatprep.subr.bf16.mxu0 0
      %2553 = vmatpush1.bf16.msra.mxu0 0
      %2554 = vmatprep.subr.bf16.mxu0 0
      %2555 = vmatpush1.bf16.msra.mxu0 0
      %2556 = vmatprep.subr.bf16.mxu0 0
      %2557 = vmatpush1.bf16.msra.mxu0 0
      %2558 = vmatprep.subr.bf16.mxu0 0
      %2559 = vmatpush1.bf16.msra.mxu0 0
      %2560 = vmatprep.subr.bf16.mxu0 0
      %2561 = vmatpush1.bf16.msra.mxu0 0
      %2562 = vmatprep.subr.bf16.mxu0 0
      %2563 = vmatpush1.bf16.msra.mxu0 0
      %2564 = vmatprep.subr.bf16.mxu0 0
      %2565 = vmatpush1.bf16.msra.mxu0 0
      %2566 = vmatprep.subr.bf16.mxu0 0
      %2567 = vmatpush1.bf16.msra.mxu0 0
      %2568 = vmatprep.subr.bf16.mxu0 0
      %2569 = vmatpush1.bf16.msra.mxu0 0
      %2570 = vmatprep.subr.bf16.mxu0 0
      %2571 = vmatpush1.bf16.msra.mxu0 0
      %2572 = vmatprep.subr.bf16.mxu0 0
      %2573 = vmatpush1.bf16.msra.mxu0 0
      %2574 = vmatprep.subr.bf16.mxu0 0
      %2575 = vmatpush1.bf16.msra.mxu0 0
      %2576 = vmatprep.subr.bf16.mxu0 0
      %2577 = vmatpush1.bf16.msra.mxu0 0
      %2578 = vmatprep.subr.bf16.mxu0 0
      %2579 = vmatpush1.bf16.msra.mxu0 0
      %2580 = vmatprep.mubr.bf16.mxu0 0
      %2581 = vmatmul.mubr.bf16.gmra.mrb[0].mxu0 %v2543
      %v2582 = vpop.f32.mrb[0].mxu0
      %v2583 = vadd.f32 0.0, %v2582
      %v2584 = vpop.f32.mrb[0].mxu0
      %v2585 = vpop.f32.mrb[0].mxu0
      %v2586 = vadd.f32 0.0, %v2585
      %v2587 = vpop.f32.mrb[0].mxu0
      %2588 = vdwg.mxu0
      %v2589 = vpack.c.bf16 %v2586, %v2583
      %2591 = vrot.lane.b32.xlu0 %v2467, 112
      %v2592 = vpop.permute.xlu0 %2591
      %2594 = vrot.lane.b32.xlu0 %v2468, 112
      %v2595 = vpop.permute.xlu0 %2594
      %v2597 = vsel %vm489, %v2592, 0
      %v2600 = vsel %vm489, %v2595, 0
      %2602 = vmatprep.subr.bf16.mxu0 0
      %2603 = vmatpush1.bf16.xpose.msra.mxu0 %v2600
      %2604 = vmatprep.subr.bf16.mxu0 0
      %2605 = vmatpush1.bf16.xpose.msra.mxu0 0
      %2606 = vmatprep.subr.bf16.mxu0 0
      %2607 = vmatpush1.bf16.xpose.msra.mxu0 0
      %2608 = vmatprep.subr.bf16.mxu0 0
      %2609 = vmatpush1.bf16.xpose.msra.mxu0 0
      %2610 = vmatprep.subr.bf16.mxu0 0
      %2611 = vmatpush1.bf16.xpose.msra.mxu0 0
      %2612 = vmatprep.subr.bf16.mxu0 0
      %2613 = vmatpush1.bf16.xpose.msra.mxu0 0
      %2614 = vmatprep.subr.bf16.mxu0 0
      %2615 = vmatpush1.bf16.xpose.msra.mxu0 0
      %2616 = vmatprep.subr.bf16.mxu0 0
      %2617 = vmatpush1.bf16.xpose.msra.mxu0 0
      %2618 = vmatprep.subr.bf16.mxu0 0
      %2619 = vmatpush1.bf16.xpose.msra.mxu0 0
      %2620 = vmatprep.subr.bf16.mxu0 0
      %2621 = vmatpush1.bf16.xpose.msra.mxu0 0
      %2622 = vmatprep.subr.bf16.mxu0 0
      %2623 = vmatpush1.bf16.xpose.msra.mxu0 0
      %2624 = vmatprep.subr.bf16.mxu0 0
      %2625 = vmatpush1.bf16.xpose.msra.mxu0 0
      %2626 = vmatprep.subr.bf16.mxu0 0
      %2627 = vmatpush1.bf16.xpose.msra.mxu0 0
      %2628 = vmatprep.subr.bf16.mxu0 0
      %2629 = vmatpush1.bf16.xpose.msra.mxu0 0
      %2630 = vmatprep.subr.bf16.mxu0 0
      %2631 = vmatpush1.bf16.xpose.msra.mxu0 0
      %2632 = vmatprep.subr.bf16.mxu0 0
      %2633 = vmatpush1.bf16.xpose.msra.mxu0 0
      %2634 = vmatprep.mubr.bf16.mxu0 0
      %2635 = vmatmul.mubr.bf16.gmra.mrb[0].mxu0 %v2597
      %v2636 = vpop.f32.mrb[0].mxu0
      %v2637 = vadd.f32 0.0, %v2636
      %v2638 = vpop.f32.mrb[0].mxu0
      %v2639 = vpop.f32.mrb[0].mxu0
      %v2640 = vadd.f32 0.0, %v2639
      %v2641 = vpop.f32.mrb[0].mxu0
      %2642 = vdwg.mxu0
      %v2643 = vmul.f32 %v2637, 0.25
      %v2644 = vmul.f32 %v2640, 0.25
      %v2645 = vsel %vm1293, %v2643, -inf
      %2646 = vmax.xlane.f32.xlu0 %v2645
      %v2647 = vpop.xlane.xlu0 %2646
      %v2648 = vsel %vm1293, %v2644, -inf
      %2649 = vmax.xlane.f32.xlu0 %v2648
      %v2650 = vpop.xlane.xlu0 %2649
      %v2651 = vsub.f32 %v2643, %v2647
      %v2652 = vsub.f32 %v2644, %v2650
      %v2653 = vmul.f32 %v2651, 1.442695
      %v2654 = vpow.pop %v2653
      %v2655 = vmul.f32 %v2652, 1.442695
      %v2656 = vpow.pop %v2655
      %v2657 = vsel %vm1293, %v2654, 0.0
      %2658 = vadd.xlane.f32.xlu0 %v2657
      %v2659 = vpop.xlane.xlu0 %2658
      %v2660 = vsel %vm1293, %v2656, 0.0
      %2661 = vadd.xlane.f32.xlu0 %v2660
      %v2662 = vpop.xlane.xlu0 %2661
      %v2663 = vrcp.pop %v2659
      %v2664 = vmul.f32 %v2654, %v2663
      %v2665 = vrcp.pop %v2662
      %v2666 = vmul.f32 %v2656, %v2665
      %v2667 = vpack.c.bf16 %v2666, %v2664
      %2669 = vrot.lane.b32.xlu0 %v2541, 112
      %v2670 = vpop.permute.xlu0 %2669
      %v2672 = vsel %vm1293, %v2667, 0
      %v2675 = vand.u32 %v2670, %v1300
      %2677 = vmatprep.subr.bf16.mxu0 0
      %2678 = vmatpush1.bf16.msra.mxu0 %v2675
      %2679 = vmatprep.subr.bf16.mxu0 0
      %2680 = vmatpush1.bf16.msra.mxu0 0
      %2681 = vmatprep.subr.bf16.mxu0 0
      %2682 = vmatpush1.bf16.msra.mxu0 0
      %2683 = vmatprep.subr.bf16.mxu0 0
      %2684 = vmatpush1.bf16.msra.mxu0 0
      %2685 = vmatprep.subr.bf16.mxu0 0
      %2686 = vmatpush1.bf16.msra.mxu0 0
      %2687 = vmatprep.subr.bf16.mxu0 0
      %2688 = vmatpush1.bf16.msra.mxu0 0
      %2689 = vmatprep.subr.bf16.mxu0 0
      %2690 = vmatpush1.bf16.msra.mxu0 0
      %2691 = vmatprep.subr.bf16.mxu0 0
      %2692 = vmatpush1.bf16.msra.mxu0 0
      %2693 = vmatprep.subr.bf16.mxu0 0
      %2694 = vmatpush1.bf16.msra.mxu0 0
      %2695 = vmatprep.subr.bf16.mxu0 0
      %2696 = vmatpush1.bf16.msra.mxu0 0
      %2697 = vmatprep.subr.bf16.mxu0 0
      %2698 = vmatpush1.bf16.msra.mxu0 0
      %2699 = vmatprep.subr.bf16.mxu0 0
      %2700 = vmatpush1.bf16.msra.mxu0 0
      %2701 = vmatprep.subr.bf16.mxu0 0
      %2702 = vmatpush1.bf16.msra.mxu0 0
      %2703 = vmatprep.subr.bf16.mxu0 0
      %2704 = vmatpush1.bf16.msra.mxu0 0
      %2705 = vmatprep.subr.bf16.mxu0 0
      %2706 = vmatpush1.bf16.msra.mxu0 0
      %2707 = vmatprep.subr.bf16.mxu0 0
      %2708 = vmatpush1.bf16.msra.mxu0 0
      %2709 = vmatprep.mubr.bf16.mxu0 0
      %2710 = vmatmul.mubr.bf16.gmra.mrb[0].mxu0 %v2672
      %v2711 = vpop.f32.mrb[0].mxu0
      %v2712 = vadd.f32 0.0, %v2711
      %v2713 = vpop.f32.mrb[0].mxu0
      %v2714 = vpop.f32.mrb[0].mxu0
      %v2715 = vadd.f32 0.0, %v2714
      %v2716 = vpop.f32.mrb[0].mxu0
      %2717 = vdwg.mxu0
      %v2718 = vpack.c.bf16 %v2715, %v2712
      %v2721 = vunpack.c.l.b16 %v2464
      %v2722 = vunpack.c.l.b16 %v2465
      %v2723 = vpack.c.b16 %v2722, %v2721
      %v2726 = vsel %vm489, %v2718, 0
      %2728 = vmatprep.subr.bf16.mxu0 0
      %2729 = vmatpush1.bf16.msra.mxu0 %v2723
      %2730 = vmatprep.subr.bf16.mxu0 0
      %2731 = vmatpush1.bf16.msra.mxu0 0
      %2732 = vmatprep.subr.bf16.mxu0 0
      %2733 = vmatpush1.bf16.msra.mxu0 0
      %2734 = vmatprep.subr.bf16.mxu0 0
      %2735 = vmatpush1.bf16.msra.mxu0 0
      %2736 = vmatprep.subr.bf16.mxu0 0
      %2737 = vmatpush1.bf16.msra.mxu0 0
      %2738 = vmatprep.subr.bf16.mxu0 0
      %2739 = vmatpush1.bf16.msra.mxu0 0
      %2740 = vmatprep.subr.bf16.mxu0 0
      %2741 = vmatpush1.bf16.msra.mxu0 0
      %2742 = vmatprep.subr.bf16.mxu0 0
      %2743 = vmatpush1.bf16.msra.mxu0 0
      %2744 = vmatprep.subr.bf16.mxu0 0
      %2745 = vmatpush1.bf16.msra.mxu0 0
      %2746 = vmatprep.subr.bf16.mxu0 0
      %2747 = vmatpush1.bf16.msra.mxu0 0
      %2748 = vmatprep.subr.bf16.mxu0 0
      %2749 = vmatpush1.bf16.msra.mxu0 0
      %2750 = vmatprep.subr.bf16.mxu0 0
      %2751 = vmatpush1.bf16.msra.mxu0 0
      %2752 = vmatprep.subr.bf16.mxu0 0
      %2753 = vmatpush1.bf16.msra.mxu0 0
      %2754 = vmatprep.subr.bf16.mxu0 0
      %2755 = vmatpush1.bf16.msra.mxu0 0
      %2756 = vmatprep.subr.bf16.mxu0 0
      %2757 = vmatpush1.bf16.msra.mxu0 0
      %2758 = vmatprep.subr.bf16.mxu0 0
      %2759 = vmatpush1.bf16.msra.mxu0 0
      %2760 = vmatprep.mubr.bf16.mxu0 0
      %2761 = vmatmul.mubr.bf16.gmra.mrb[0].mxu0 %v2726
      %v2762 = vpop.f32.mrb[0].mxu0
      %v2763 = vadd.f32 0.0, %v2762
      %v2764 = vpop.f32.mrb[0].mxu0
      %v2765 = vpop.f32.mrb[0].mxu0
      %v2766 = vadd.f32 0.0, %v2765
      %v2767 = vpop.f32.mrb[0].mxu0
      %2768 = vdwg.mxu0
      %v2771 = vunpack.c.l.b16 %v2462
      %v2772 = vunpack.c.l.b16 %v2463
      %v2773 = vpack.c.b16 %v2772, %v2771
      %v2776 = vsel %vm489, %v2589, 0
      %2778 = vmatprep.subr.bf16.mxu0 0
      %2779 = vmatpush1.bf16.msra.mxu0 %v2773
      %2780 = vmatprep.subr.bf16.mxu0 0
      %2781 = vmatpush1.bf16.msra.mxu0 0
      %2782 = vmatprep.subr.bf16.mxu0 0
      %2783 = vmatpush1.bf16.msra.mxu0 0
      %2784 = vmatprep.subr.bf16.mxu0 0
      %2785 = vmatpush1.bf16.msra.mxu0 0
      %2786 = vmatprep.subr.bf16.mxu0 0
      %2787 = vmatpush1.bf16.msra.mxu0 0
      %2788 = vmatprep.subr.bf16.mxu0 0
      %2789 = vmatpush1.bf16.msra.mxu0 0
      %2790 = vmatprep.subr.bf16.mxu0 0
      %2791 = vmatpush1.bf16.msra.mxu0 0
      %2792 = vmatprep.subr.bf16.mxu0 0
      %2793 = vmatpush1.bf16.msra.mxu0 0
      %2794 = vmatprep.subr.bf16.mxu0 0
      %2795 = vmatpush1.bf16.msra.mxu0 0
      %2796 = vmatprep.subr.bf16.mxu0 0
      %2797 = vmatpush1.bf16.msra.mxu0 0
      %2798 = vmatprep.subr.bf16.mxu0 0
      %2799 = vmatpush1.bf16.msra.mxu0 0
      %2800 = vmatprep.subr.bf16.mxu0 0
      %2801 = vmatpush1.bf16.msra.mxu0 0
      %2802 = vmatprep.subr.bf16.mxu0 0
      %2803 = vmatpush1.bf16.msra.mxu0 0
      %2804 = vmatprep.subr.bf16.mxu0 0
      %2805 = vmatpush1.bf16.msra.mxu0 0
      %2806 = vmatprep.subr.bf16.mxu0 0
      %2807 = vmatpush1.bf16.msra.mxu0 0
      %2808 = vmatprep.subr.bf16.mxu0 0
      %2809 = vmatpush1.bf16.msra.mxu0 0
      %2810 = vmatprep.mubr.bf16.mxu0 0
      %2811 = vmatmul.mubr.bf16.gmra.mrb[0].mxu0 %v2776
      %v2812 = vpop.f32.mrb[0].mxu0
      %v2813 = vadd.f32 %v2763, %v2812
      %v2814 = vpop.f32.mrb[0].mxu0
      %v2815 = vpop.f32.mrb[0].mxu0
      %v2816 = vadd.f32 %v2766, %v2815
      %v2817 = vpop.f32.mrb[0].mxu0
      %2818 = vdwg.mxu0
      %v2819 = vlaneseq
      %v2820 = vshrl.u32 %v2819, 7
      %v2821 = vsub.s32 0, %v2820
      %v2822 = vrot.slane %v2466, %v2821
      %v2823 = vadd.f32 %v2813, %v2822
      %v2824 = vadd.f32 %v2816, %v2822
      %v2825 = vadd.f32 %v1152, %v2823
      %v2826 = vadd.f32 %v1153, %v2824
      %v2827 = vld [vmem:[%s3 + $0xcb] sm:$0x1]
      %v2828 = vld [vmem:[%s3 + $0xd3] sm:$0x1]
      %v2829 = vsel %vm374, %v2825, 0.0
      %2830 = vadd.xlane.f32.xlu0 %v2829
      %v2831 = vpop.xlane.xlu0 %2830
      %v2832 = vsel %vm374, %v2826, 0.0
      %2833 = vadd.xlane.f32.xlu0 %v2832
      %v2834 = vpop.xlane.xlu0 %2833
      %v2835 = vmul.f32 %v2831, %v381
      %v2836 = vmul.f32 %v2834, %v381
      %v2837 = vsub.f32 %v2825, %v2835
      %v2838 = vsub.f32 %v2826, %v2836
      %v2839 = vmul.f32 %v2837, %v2837
      %v2840 = vmul.f32 %v2838, %v2838
      %v2841 = vsel %vm374, %v2839, 0.0
      %2842 = vadd.xlane.f32.xlu0 %v2841
      %v2843 = vpop.xlane.xlu0 %2842
      %v2844 = vsel %vm374, %v2840, 0.0
      %2845 = vadd.xlane.f32.xlu0 %v2844
      %v2846 = vpop.xlane.xlu0 %2845
      %v2847 = vmul.f32 %v2843, %v381
      %v2848 = vmul.f32 %v2846, %v381
      %v2849 = vadd.f32 %v2847, 1e-05
      %v2850 = vadd.f32 %v2848, 1e-05
      %v2851 = vrsqrt.pop %v2849
      %v2852 = vrsqrt.pop %v2850
      %v2853 = vmul.f32 %v2837, %v2851
      %v2854 = vmul.f32 %v2838, %v2852
      %v2855 = vlaneseq
      %v2856 = vshrl.u32 %v2855, 7
      %v2857 = vsub.s32 0, %v2856
      %v2858 = vrot.slane %v2827, %v2857
      %v2859 = vmul.f32 %v2853, %v2858
      %v2860 = vmul.f32 %v2854, %v2858
      %v2861 = vlaneseq
      %v2862 = vshrl.u32 %v2861, 7
      %v2863 = vsub.s32 0, %v2862
      %v2864 = vrot.slane %v2828, %v2863
      %v2865 = vadd.f32 %v2859, %v2864
      %v2866 = vadd.f32 %v2860, %v2864
      %v2867 = vadd.f32 %v2865, %v1154
      %v2868 = vadd.f32 %v2866, %v1155
      %v2869 = vld [vmem:[%s2 + $0x280] sm:$0xf]
      %v2870 = vld [vmem:[%s2 + $0x288] sm:$0xf]
      %v2871 = vld [vmem:[%s2 + $0x290] sm:$0xf]
      %v2872 = vld [vmem:[%s2 + $0x298] sm:$0xf]
      %v2873 = vld [vmem:[%s3 + $0xa8] sm:$0x1]
      %v2874 = vlaneseq
      %v2875 = vshrl.u32 %v2874, 7
      %v2876 = vsub.s32 0, %v2875
      %v2877 = vrot.slane %v2873, %v2876
      %v2882 = vunpack.c.l.b16 %v2869
      %v2883 = vunpack.c.l.b16 %v2870
      %v2884 = vunpack.c.l.b16 %v2871
      %v2885 = vunpack.c.l.b16 %v2872
      %v2886 = vpack.c.b16 %v2883, %v2882
      %v2887 = vpack.c.b16 %v2885, %v2884
      %2890 = vmatprep.subr.bf16.mxu0 0
      %2891 = vmatpush1.bf16.msra.mxu0 %v2886
      %2892 = vmatprep.subr.bf16.mxu0 0
      %2893 = vmatpush1.bf16.msra.mxu0 %v2887
      %2894 = vmatprep.subr.bf16.mxu0 0
      %2895 = vmatpush1.bf16.msra.mxu0 0
      %2896 = vmatprep.subr.bf16.mxu0 0
      %2897 = vmatpush1.bf16.msra.mxu0 0
      %2898 = vmatprep.subr.bf16.mxu0 0
      %2899 = vmatpush1.bf16.msra.mxu0 0
      %2900 = vmatprep.subr.bf16.mxu0 0
      %2901 = vmatpush1.bf16.msra.mxu0 0
      %2902 = vmatprep.subr.bf16.mxu0 0
      %2903 = vmatpush1.bf16.msra.mxu0 0
      %2904 = vmatprep.subr.bf16.mxu0 0
      %2905 = vmatpush1.bf16.msra.mxu0 0
      %2906 = vmatprep.subr.bf16.mxu0 0
      %2907 = vmatpush1.bf16.msra.mxu0 0
      %2908 = vmatprep.subr.bf16.mxu0 0
      %2909 = vmatpush1.bf16.msra.mxu0 0
      %2910 = vmatprep.subr.bf16.mxu0 0
      %2911 = vmatpush1.bf16.msra.mxu0 0
      %2912 = vmatprep.subr.bf16.mxu0 0
      %2913 = vmatpush1.bf16.msra.mxu0 0
      %2914 = vmatprep.subr.bf16.mxu0 0
      %2915 = vmatpush1.bf16.msra.mxu0 0
      %2916 = vmatprep.subr.bf16.mxu0 0
      %2917 = vmatpush1.bf16.msra.mxu0 0
      %2918 = vmatprep.subr.bf16.mxu0 0
      %2919 = vmatpush1.bf16.msra.mxu0 0
      %2920 = vmatprep.subr.bf16.mxu0 0
      %2921 = vmatpush1.bf16.msra.mxu0 0
      %2922 = vmatprep.mubr.bf16.mxu0 0
      %2923 = vmatmul.mubr.bf16.gmra.mrb[0].mxu0 %v2367
      %v2924 = vpop.f32.mrb[0].mxu0
      %v2925 = vadd.f32 %v2877, %v2924
      %v2926 = vpop.f32.mrb[0].mxu0
      %v2927 = vpop.f32.mrb[0].mxu0
      %v2928 = vpop.f32.mrb[0].mxu0
      %2929 = vdwg.mxu0
      %v2930 = vpack.c.bf16 %v2868, %v2867
      %2931 = vrot.lane.b32.xlu0 %v2886, 96
      %v2932 = vpop.permute.xlu0 %2931
      %2933 = vrot.lane.b32.xlu0 %v2887, 96
      %v2934 = vpop.permute.xlu0 %2933
      %2938 = vrot.lane.b32.xlu0 %v2877, 96
      %v2939 = vpop.permute.xlu0 %2938
      %v2942 = vsel %vm374, %v2930, 0
      %2944 = vmatprep.subr.bf16.mxu0 0
      %2945 = vmatpush1.bf16.msra.mxu0 %v2932
      %2946 = vmatprep.subr.bf16.mxu0 0
      %2947 = vmatpush1.bf16.msra.mxu0 %v2934
      %2948 = vmatprep.subr.bf16.mxu0 0
      %2949 = vmatpush1.bf16.msra.mxu0 0
      %2950 = vmatprep.subr.bf16.mxu0 0
      %2951 = vmatpush1.bf16.msra.mxu0 0
      %2952 = vmatprep.subr.bf16.mxu0 0
      %2953 = vmatpush1.bf16.msra.mxu0 0
      %2954 = vmatprep.subr.bf16.mxu0 0
      %2955 = vmatpush1.bf16.msra.mxu0 0
      %2956 = vmatprep.subr.bf16.mxu0 0
      %2957 = vmatpush1.bf16.msra.mxu0 0
      %2958 = vmatprep.subr.bf16.mxu0 0
      %2959 = vmatpush1.bf16.msra.mxu0 0
      %2960 = vmatprep.subr.bf16.mxu0 0
      %2961 = vmatpush1.bf16.msra.mxu0 0
      %2962 = vmatprep.subr.bf16.mxu0 0
      %2963 = vmatpush1.bf16.msra.mxu0 0
      %2964 = vmatprep.subr.bf16.mxu0 0
      %2965 = vmatpush1.bf16.msra.mxu0 0
      %2966 = vmatprep.subr.bf16.mxu0 0
      %2967 = vmatpush1.bf16.msra.mxu0 0
      %2968 = vmatprep.subr.bf16.mxu0 0
      %2969 = vmatpush1.bf16.msra.mxu0 0
      %2970 = vmatprep.subr.bf16.mxu0 0
      %2971 = vmatpush1.bf16.msra.mxu0 0
      %2972 = vmatprep.subr.bf16.mxu0 0
      %2973 = vmatpush1.bf16.msra.mxu0 0
      %2974 = vmatprep.subr.bf16.mxu0 0
      %2975 = vmatpush1.bf16.msra.mxu0 0
      %2976 = vmatprep.mubr.bf16.mxu0 0
      %2977 = vmatmul.mubr.bf16.gmra.mrb[0].mxu0 %v2942
      %v2978 = vpop.f32.mrb[0].mxu0
      %v2979 = vadd.f32 %v2939, %v2978
      %v2980 = vpop.f32.mrb[0].mxu0
      %v2981 = vpop.f32.mrb[0].mxu0
      %v2982 = vadd.f32 %v2939, %v2981
      %v2983 = vpop.f32.mrb[0].mxu0
      %2984 = vdwg.mxu0
      %v2985 = vpack.c.bf16 %v2866, %v2865
      %2986 = vrot.lane.b32.xlu0 %v2886, 64
      %v2987 = vpop.permute.xlu0 %2986
      %2988 = vrot.lane.b32.xlu0 %v2887, 64
      %v2989 = vpop.permute.xlu0 %2988
      %2992 = vrot.lane.b32.xlu0 %v2877, 64
      %v2993 = vpop.permute.xlu0 %2992
      %v2996 = vsel %vm374, %v2985, 0
      %2998 = vmatprep.subr.bf16.mxu0 0
      %2999 = vmatpush1.bf16.msra.mxu0 %v2987
      %3000 = vmatprep.subr.bf16.mxu0 0
      %3001 = vmatpush1.bf16.msra.mxu0 %v2989
      %3002 = vmatprep.subr.bf16.mxu0 0
      %3003 = vmatpush1.bf16.msra.mxu0 0
      %3004 = vmatprep.subr.bf16.mxu0 0
      %3005 = vmatpush1.bf16.msra.mxu0 0
      %3006 = vmatprep.subr.bf16.mxu0 0
      %3007 = vmatpush1.bf16.msra.mxu0 0
      %3008 = vmatprep.subr.bf16.mxu0 0
      %3009 = vmatpush1.bf16.msra.mxu0 0
      %3010 = vmatprep.subr.bf16.mxu0 0
      %3011 = vmatpush1.bf16.msra.mxu0 0
      %3012 = vmatprep.subr.bf16.mxu0 0
      %3013 = vmatpush1.bf16.msra.mxu0 0
      %3014 = vmatprep.subr.bf16.mxu0 0
      %3015 = vmatpush1.bf16.msra.mxu0 0
      %3016 = vmatprep.subr.bf16.mxu0 0
      %3017 = vmatpush1.bf16.msra.mxu0 0
      %3018 = vmatprep.subr.bf16.mxu0 0
      %3019 = vmatpush1.bf16.msra.mxu0 0
      %3020 = vmatprep.subr.bf16.mxu0 0
      %3021 = vmatpush1.bf16.msra.mxu0 0
      %3022 = vmatprep.subr.bf16.mxu0 0
      %3023 = vmatpush1.bf16.msra.mxu0 0
      %3024 = vmatprep.subr.bf16.mxu0 0
      %3025 = vmatpush1.bf16.msra.mxu0 0
      %3026 = vmatprep.subr.bf16.mxu0 0
      %3027 = vmatpush1.bf16.msra.mxu0 0
      %3028 = vmatprep.subr.bf16.mxu0 0
      %3029 = vmatpush1.bf16.msra.mxu0 0
      %3030 = vmatprep.mubr.bf16.mxu0 0
      %3031 = vmatmul.mubr.bf16.gmra.mrb[0].mxu0 %v2996
      %v3032 = vpop.f32.mrb[0].mxu0
      %v3033 = vadd.f32 %v2993, %v3032
      %v3034 = vpop.f32.mrb[0].mxu0
      %v3035 = vpop.f32.mrb[0].mxu0
      %v3036 = vadd.f32 %v2993, %v3035
      %v3037 = vpop.f32.mrb[0].mxu0
      %3038 = vdwg.mxu0
      %v3039 = vld [vmem:[%s2 + $0x2a0] sm:$0xf]
      %v3040 = vld [vmem:[%s2 + $0x2a8] sm:$0xf]
      %v3041 = vld [vmem:[%s2 + $0x2b0] sm:$0xf]
      %v3042 = vld [vmem:[%s2 + $0x2b8] sm:$0xf]
      %v3043 = vld [vmem:[%s3 + $0xb0] sm:$0x1]
      %v3044 = vpack.c.bf16 %v2925, %v2925
      %v3045 = vpack.c.bf16 %v2982, %v2979
      %v3047 = vsel %vm489, %v3044, 0
      %v3050 = vsel %vm489, %v3045, 0
      %3052 = vmatprep.subr.bf16.mxu0 0
      %3053 = vmatpush1.bf16.xpose.msra.mxu0 %v3050
      %3054 = vmatprep.subr.bf16.mxu0 0
      %3055 = vmatpush1.bf16.xpose.msra.mxu0 0
      %3056 = vmatprep.subr.bf16.mxu0 0
      %3057 = vmatpush1.bf16.xpose.msra.mxu0 0
      %3058 = vmatprep.subr.bf16.mxu0 0
      %3059 = vmatpush1.bf16.xpose.msra.mxu0 0
      %3060 = vmatprep.subr.bf16.mxu0 0
      %3061 = vmatpush1.bf16.xpose.msra.mxu0 0
      %3062 = vmatprep.subr.bf16.mxu0 0
      %3063 = vmatpush1.bf16.xpose.msra.mxu0 0
      %3064 = vmatprep.subr.bf16.mxu0 0
      %3065 = vmatpush1.bf16.xpose.msra.mxu0 0
      %3066 = vmatprep.subr.bf16.mxu0 0
      %3067 = vmatpush1.bf16.xpose.msra.mxu0 0
      %3068 = vmatprep.subr.bf16.mxu0 0
      %3069 = vmatpush1.bf16.xpose.msra.mxu0 0
      %3070 = vmatprep.subr.bf16.mxu0 0
      %3071 = vmatpush1.bf16.xpose.msra.mxu0 0
      %3072 = vmatprep.subr.bf16.mxu0 0
      %3073 = vmatpush1.bf16.xpose.msra.mxu0 0
      %3074 = vmatprep.subr.bf16.mxu0 0
      %3075 = vmatpush1.bf16.xpose.msra.mxu0 0
      %3076 = vmatprep.subr.bf16.mxu0 0
      %3077 = vmatpush1.bf16.xpose.msra.mxu0 0
      %3078 = vmatprep.subr.bf16.mxu0 0
      %3079 = vmatpush1.bf16.xpose.msra.mxu0 0
      %3080 = vmatprep.subr.bf16.mxu0 0
      %3081 = vmatpush1.bf16.xpose.msra.mxu0 0
      %3082 = vmatprep.subr.bf16.mxu0 0
      %3083 = vmatpush1.bf16.xpose.msra.mxu0 0
      %3084 = vmatprep.mubr.bf16.mxu0 0
      %3085 = vmatmul.mubr.bf16.gmra.mrb[0].mxu0 %v3047
      %v3086 = vpop.f32.mrb[0].mxu0
      %v3087 = vadd.f32 0.0, %v3086
      %v3088 = vpop.f32.mrb[0].mxu0
      %v3089 = vpop.f32.mrb[0].mxu0
      %v3090 = vpop.f32.mrb[0].mxu0
      %3091 = vdwg.mxu0
      %v3092 = vmul.f32 %v3087, 0.25
      %v3093 = vsel %vm1818, %v3092, -inf
      %3094 = vmax.xlane.f32.xlu0 %v3093
      %v3095 = vpop.xlane.xlu0 %3094
      %v3096 = vsub.f32 %v3092, %v3095
      %v3097 = vmul.f32 %v3096, 1.442695
      %v3098 = vpow.pop %v3097
      %v3099 = vsel %vm1818, %v3098, 0.0
      %3100 = vadd.xlane.f32.xlu0 %v3099
      %v3101 = vpop.xlane.xlu0 %3100
      %v3102 = vrcp.pop %v3101
      %v3103 = vmul.f32 %v3098, %v3102
      %v3104 = vpack.c.bf16 %v3103, %v3103
      %v3105 = vpack.c.bf16 %v3036, %v3033
      %v3107 = vsel %vm489, %v3104, 0
      %3109 = vmatprep.subr.bf16.mxu0 0
      %3110 = vmatpush1.bf16.msra.mxu0 %v3105
      %3111 = vmatprep.subr.bf16.mxu0 0
      %3112 = vmatpush1.bf16.msra.mxu0 0
      %3113 = vmatprep.subr.bf16.mxu0 0
      %3114 = vmatpush1.bf16.msra.mxu0 0
      %3115 = vmatprep.subr.bf16.mxu0 0
      %3116 = vmatpush1.bf16.msra.mxu0 0
      %3117 = vmatprep.subr.bf16.mxu0 0
      %3118 = vmatpush1.bf16.msra.mxu0 0
      %3119 = vmatprep.subr.bf16.mxu0 0
      %3120 = vmatpush1.bf16.msra.mxu0 0
      %3121 = vmatprep.subr.bf16.mxu0 0
      %3122 = vmatpush1.bf16.msra.mxu0 0
      %3123 = vmatprep.subr.bf16.mxu0 0
      %3124 = vmatpush1.bf16.msra.mxu0 0
      %3125 = vmatprep.subr.bf16.mxu0 0
      %3126 = vmatpush1.bf16.msra.mxu0 0
      %3127 = vmatprep.subr.bf16.mxu0 0
      %3128 = vmatpush1.bf16.msra.mxu0 0
      %3129 = vmatprep.subr.bf16.mxu0 0
      %3130 = vmatpush1.bf16.msra.mxu0 0
      %3131 = vmatprep.subr.bf16.mxu0 0
      %3132 = vmatpush1.bf16.msra.mxu0 0
      %3133 = vmatprep.subr.bf16.mxu0 0
      %3134 = vmatpush1.bf16.msra.mxu0 0
      %3135 = vmatprep.subr.bf16.mxu0 0
      %3136 = vmatpush1.bf16.msra.mxu0 0
      %3137 = vmatprep.subr.bf16.mxu0 0
      %3138 = vmatpush1.bf16.msra.mxu0 0
      %3139 = vmatprep.subr.bf16.mxu0 0
      %3140 = vmatpush1.bf16.msra.mxu0 0
      %3141 = vmatprep.mubr.bf16.mxu0 0
      %3142 = vmatmul.mubr.bf16.gmra.mrb[0].mxu0 %v3107
      %v3143 = vpop.f32.mrb[0].mxu0
      %v3144 = vadd.f32 0.0, %v3143
      %v3145 = vpop.f32.mrb[0].mxu0
      %v3146 = vpop.f32.mrb[0].mxu0
      %v3147 = vpop.f32.mrb[0].mxu0
      %3148 = vdwg.mxu0
      %v3149 = vpack.c.bf16 %v3144, %v3144
      %3151 = vrot.lane.b32.xlu0 %v3044, 112
      %v3152 = vpop.permute.xlu0 %3151
      %3154 = vrot.lane.b32.xlu0 %v3045, 112
      %v3155 = vpop.permute.xlu0 %3154
      %v3157 = vsel %vm489, %v3152, 0
      %v3160 = vsel %vm489, %v3155, 0
      %3162 = vmatprep.subr.bf16.mxu0 0
      %3163 = vmatpush1.bf16.xpose.msra.mxu0 %v3160
      %3164 = vmatprep.subr.bf16.mxu0 0
      %3165 = vmatpush1.bf16.xpose.msra.mxu0 0
      %3166 = vmatprep.subr.bf16.mxu0 0
      %3167 = vmatpush1.bf16.xpose.msra.mxu0 0
      %3168 = vmatprep.subr.bf16.mxu0 0
      %3169 = vmatpush1.bf16.xpose.msra.mxu0 0
      %3170 = vmatprep.subr.bf16.mxu0 0
      %3171 = vmatpush1.bf16.xpose.msra.mxu0 0
      %3172 = vmatprep.subr.bf16.mxu0 0
      %3173 = vmatpush1.bf16.xpose.msra.mxu0 0
      %3174 = vmatprep.subr.bf16.mxu0 0
      %3175 = vmatpush1.bf16.xpose.msra.mxu0 0
      %3176 = vmatprep.subr.bf16.mxu0 0
      %3177 = vmatpush1.bf16.xpose.msra.mxu0 0
      %3178 = vmatprep.subr.bf16.mxu0 0
      %3179 = vmatpush1.bf16.xpose.msra.mxu0 0
      %3180 = vmatprep.subr.bf16.mxu0 0
      %3181 = vmatpush1.bf16.xpose.msra.mxu0 0
      %3182 = vmatprep.subr.bf16.mxu0 0
      %3183 = vmatpush1.bf16.xpose.msra.mxu0 0
      %3184 = vmatprep.subr.bf16.mxu0 0
      %3185 = vmatpush1.bf16.xpose.msra.mxu0 0
      %3186 = vmatprep.subr.bf16.mxu0 0
      %3187 = vmatpush1.bf16.xpose.msra.mxu0 0
      %3188 = vmatprep.subr.bf16.mxu0 0
      %3189 = vmatpush1.bf16.xpose.msra.mxu0 0
      %3190 = vmatprep.subr.bf16.mxu0 0
      %3191 = vmatpush1.bf16.xpose.msra.mxu0 0
      %3192 = vmatprep.subr.bf16.mxu0 0
      %3193 = vmatpush1.bf16.xpose.msra.mxu0 0
      %3194 = vmatprep.mubr.bf16.mxu0 0
      %3195 = vmatmul.mubr.bf16.gmra.mrb[0].mxu0 %v3157
      %v3196 = vpop.f32.mrb[0].mxu0
      %v3197 = vadd.f32 0.0, %v3196
      %v3198 = vpop.f32.mrb[0].mxu0
      %v3199 = vpop.f32.mrb[0].mxu0
      %v3200 = vpop.f32.mrb[0].mxu0
      %3201 = vdwg.mxu0
      %v3202 = vmul.f32 %v3197, 0.25
      %v3203 = vsel %vm1818, %v3202, -inf
      %3204 = vmax.xlane.f32.xlu0 %v3203
      %v3205 = vpop.xlane.xlu0 %3204
      %v3206 = vsub.f32 %v3202, %v3205
      %v3207 = vmul.f32 %v3206, 1.442695
      %v3208 = vpow.pop %v3207
      %v3209 = vsel %vm1818, %v3208, 0.0
      %3210 = vadd.xlane.f32.xlu0 %v3209
      %v3211 = vpop.xlane.xlu0 %3210
      %v3212 = vrcp.pop %v3211
      %v3213 = vmul.f32 %v3208, %v3212
      %v3214 = vpack.c.bf16 %v3213, %v3213
      %3216 = vrot.lane.b32.xlu0 %v3105, 112
      %v3217 = vpop.permute.xlu0 %3216
      %v3220 = vsel %vm489, %v3214, 0
      %3222 = vmatprep.subr.bf16.mxu0 0
      %3223 = vmatpush1.bf16.msra.mxu0 %v3217
      %3224 = vmatprep.subr.bf16.mxu0 0
      %3225 = vmatpush1.bf16.msra.mxu0 0
      %3226 = vmatprep.subr.bf16.mxu0 0
      %3227 = vmatpush1.bf16.msra.mxu0 0
      %3228 = vmatprep.subr.bf16.mxu0 0
      %3229 = vmatpush1.bf16.msra.mxu0 0
      %3230 = vmatprep.subr.bf16.mxu0 0
      %3231 = vmatpush1.bf16.msra.mxu0 0
      %3232 = vmatprep.subr.bf16.mxu0 0
      %3233 = vmatpush1.bf16.msra.mxu0 0
      %3234 = vmatprep.subr.bf16.mxu0 0
      %3235 = vmatpush1.bf16.msra.mxu0 0
      %3236 = vmatprep.subr.bf16.mxu0 0
      %3237 = vmatpush1.bf16.msra.mxu0 0
      %3238 = vmatprep.subr.bf16.mxu0 0
      %3239 = vmatpush1.bf16.msra.mxu0 0
      %3240 = vmatprep.subr.bf16.mxu0 0
      %3241 = vmatpush1.bf16.msra.mxu0 0
      %3242 = vmatprep.subr.bf16.mxu0 0
      %3243 = vmatpush1.bf16.msra.mxu0 0
      %3244 = vmatprep.subr.bf16.mxu0 0
      %3245 = vmatpush1.bf16.msra.mxu0 0
      %3246 = vmatprep.subr.bf16.mxu0 0
      %3247 = vmatpush1.bf16.msra.mxu0 0
      %3248 = vmatprep.subr.bf16.mxu0 0
      %3249 = vmatpush1.bf16.msra.mxu0 0
      %3250 = vmatprep.subr.bf16.mxu0 0
      %3251 = vmatpush1.bf16.msra.mxu0 0
      %3252 = vmatprep.subr.bf16.mxu0 0
      %3253 = vmatpush1.bf16.msra.mxu0 0
      %3254 = vmatprep.mubr.bf16.mxu0 0
      %3255 = vmatmul.mubr.bf16.gmra.mrb[0].mxu0 %v3220
      %v3256 = vpop.f32.mrb[0].mxu0
      %v3257 = vadd.f32 0.0, %v3256
      %v3258 = vpop.f32.mrb[0].mxu0
      %v3259 = vpop.f32.mrb[0].mxu0
      %v3260 = vpop.f32.mrb[0].mxu0
      %3261 = vdwg.mxu0
      %v3262 = vpack.c.bf16 %v3257, %v3257
      %v3265 = vunpack.c.l.b16 %v3041
      %v3266 = vunpack.c.l.b16 %v3042
      %v3267 = vpack.c.b16 %v3266, %v3265
      %v3270 = vsel %vm489, %v3262, 0
      %3272 = vmatprep.subr.bf16.mxu0 0
      %3273 = vmatpush1.bf16.msra.mxu0 %v3267
      %3274 = vmatprep.subr.bf16.mxu0 0
      %3275 = vmatpush1.bf16.msra.mxu0 0
      %3276 = vmatprep.subr.bf16.mxu0 0
      %3277 = vmatpush1.bf16.msra.mxu0 0
      %3278 = vmatprep.subr.bf16.mxu0 0
      %3279 = vmatpush1.bf16.msra.mxu0 0
      %3280 = vmatprep.subr.bf16.mxu0 0
      %3281 = vmatpush1.bf16.msra.mxu0 0
      %3282 = vmatprep.subr.bf16.mxu0 0
      %3283 = vmatpush1.bf16.msra.mxu0 0
      %3284 = vmatprep.subr.bf16.mxu0 0
      %3285 = vmatpush1.bf16.msra.mxu0 0
      %3286 = vmatprep.subr.bf16.mxu0 0
      %3287 = vmatpush1.bf16.msra.mxu0 0
      %3288 = vmatprep.subr.bf16.mxu0 0
      %3289 = vmatpush1.bf16.msra.mxu0 0
      %3290 = vmatprep.subr.bf16.mxu0 0
      %3291 = vmatpush1.bf16.msra.mxu0 0
      %3292 = vmatprep.subr.bf16.mxu0 0
      %3293 = vmatpush1.bf16.msra.mxu0 0
      %3294 = vmatprep.subr.bf16.mxu0 0
      %3295 = vmatpush1.bf16.msra.mxu0 0
      %3296 = vmatprep.subr.bf16.mxu0 0
      %3297 = vmatpush1.bf16.msra.mxu0 0
      %3298 = vmatprep.subr.bf16.mxu0 0
      %3299 = vmatpush1.bf16.msra.mxu0 0
      %3300 = vmatprep.subr.bf16.mxu0 0
      %3301 = vmatpush1.bf16.msra.mxu0 0
      %3302 = vmatprep.subr.bf16.mxu0 0
      %3303 = vmatpush1.bf16.msra.mxu0 0
      %3304 = vmatprep.mubr.bf16.mxu0 0
      %3305 = vmatmul.mubr.bf16.gmra.mrb[0].mxu0 %v3270
      %v3306 = vpop.f32.mrb[0].mxu0
      %v3307 = vadd.f32 0.0, %v3306
      %v3308 = vpop.f32.mrb[0].mxu0
      %v3309 = vpop.f32.mrb[0].mxu0
      %v3310 = vpop.f32.mrb[0].mxu0
      %3311 = vdwg.mxu0
      %v3314 = vunpack.c.l.b16 %v3039
      %v3315 = vunpack.c.l.b16 %v3040
      %v3316 = vpack.c.b16 %v3315, %v3314
      %v3319 = vsel %vm489, %v3149, 0
      %3321 = vmatprep.subr.bf16.mxu0 0
      %3322 = vmatpush1.bf16.msra.mxu0 %v3316
      %3323 = vmatprep.subr.bf16.mxu0 0
      %3324 = vmatpush1.bf16.msra.mxu0 0
      %3325 = vmatprep.subr.bf16.mxu0 0
      %3326 = vmatpush1.bf16.msra.mxu0 0
      %3327 = vmatprep.subr.bf16.mxu0 0
      %3328 = vmatpush1.bf16.msra.mxu0 0
      %3329 = vmatprep.subr.bf16.mxu0 0
      %3330 = vmatpush1.bf16.msra.mxu0 0
      %3331 = vmatprep.subr.bf16.mxu0 0
      %3332 = vmatpush1.bf16.msra.mxu0 0
      %3333 = vmatprep.subr.bf16.mxu0 0
      %3334 = vmatpush1.bf16.msra.mxu0 0
      %3335 = vmatprep.subr.bf16.mxu0 0
      %3336 = vmatpush1.bf16.msra.mxu0 0
      %3337 = vmatprep.subr.bf16.mxu0 0
      %3338 = vmatpush1.bf16.msra.mxu0 0
      %3339 = vmatprep.subr.bf16.mxu0 0
      %3340 = vmatpush1.bf16.msra.mxu0 0
      %3341 = vmatprep.subr.bf16.mxu0 0
      %3342 = vmatpush1.bf16.msra.mxu0 0
      %3343 = vmatprep.subr.bf16.mxu0 0
      %3344 = vmatpush1.bf16.msra.mxu0 0
      %3345 = vmatprep.subr.bf16.mxu0 0
      %3346 = vmatpush1.bf16.msra.mxu0 0
      %3347 = vmatprep.subr.bf16.mxu0 0
      %3348 = vmatpush1.bf16.msra.mxu0 0
      %3349 = vmatprep.subr.bf16.mxu0 0
      %3350 = vmatpush1.bf16.msra.mxu0 0
      %3351 = vmatprep.subr.bf16.mxu0 0
      %3352 = vmatpush1.bf16.msra.mxu0 0
      %3353 = vmatprep.mubr.bf16.mxu0 0
      %3354 = vmatmul.mubr.bf16.gmra.mrb[0].mxu0 %v3319
      %v3355 = vpop.f32.mrb[0].mxu0
      %v3356 = vadd.f32 %v3307, %v3355
      %v3357 = vpop.f32.mrb[0].mxu0
      %v3358 = vpop.f32.mrb[0].mxu0
      %v3359 = vpop.f32.mrb[0].mxu0
      %3360 = vdwg.mxu0
      %v3361 = vlaneseq
      %v3362 = vshrl.u32 %v3361, 7
      %v3363 = vsub.s32 0, %v3362
      %v3364 = vrot.slane %v3043, %v3363
      %v3365 = vadd.f32 %v3356, %v3364
      %v3366 = vadd.f32 %v2291, %v3365
      %v3367 = vld [vmem:[%s3 + $0xcc] sm:$0x1]
      %v3368 = vld [vmem:[%s3 + $0xd4] sm:$0x1]
      %v3369 = vsel %vm1563, %v3366, 0.0
      %3370 = vadd.xlane.f32.xlu0 %v3369
      %v3371 = vpop.xlane.xlu0 %3370
      %v3372 = vmul.f32 %v3371, %v381
      %v3373 = vsub.f32 %v3366, %v3372
      %v3374 = vmul.f32 %v3373, %v3373
      %v3375 = vsel %vm1563, %v3374, 0.0
      %3376 = vadd.xlane.f32.xlu0 %v3375
      %v3377 = vpop.xlane.xlu0 %3376
      %v3378 = vmul.f32 %v3377, %v381
      %v3379 = vadd.f32 %v3378, 1e-05
      %v3380 = vrsqrt.pop %v3379
      %v3381 = vmul.f32 %v3373, %v3380
      %v3382 = vlaneseq
      %v3383 = vshrl.u32 %v3382, 7
      %v3384 = vsub.s32 0, %v3383
      %v3385 = vrot.slane %v3367, %v3384
      %v3386 = vmul.f32 %v3381, %v3385
      %v3387 = vlaneseq
      %v3388 = vshrl.u32 %v3387, 7
      %v3389 = vsub.s32 0, %v3388
      %v3390 = vrot.slane %v3368, %v3389
      %v3391 = vadd.f32 %v3386, %v3390
      %v3392 = vld [vmem:[%s2 + $0x320] sm:$0xf]
      %v3393 = vld [vmem:[%s2 + $0x328] sm:$0xf]
      %v3394 = vld [vmem:[%s2 + $0x330] sm:$0xf]
      %v3395 = vld [vmem:[%s2 + $0x338] sm:$0xf]
      %v3400 = vunpack.c.l.b16 %v3392
      %v3401 = vunpack.c.l.b16 %v3393
      %v3402 = vunpack.c.l.b16 %v3394
      %v3403 = vunpack.c.l.b16 %v3395
      %v3404 = vpack.c.b16 %v3401, %v3400
      %v3405 = vpack.c.b16 %v3403, %v3402
      %v3407 = vsel %vm374, %v3404, 0
      %v3410 = vsel %vm374, %v3405, 0
      %3412 = vmatprep.subr.bf16.mxu0 0
      %3413 = vmatpush1.bf16.xpose.msra.mxu0 %v2996
      %3414 = vmatprep.subr.bf16.mxu0 0
      %3415 = vmatpush1.bf16.xpose.msra.mxu0 0
      %3416 = vmatprep.subr.bf16.mxu0 0
      %3417 = vmatpush1.bf16.xpose.msra.mxu0 0
      %3418 = vmatprep.subr.bf16.mxu0 0
      %3419 = vmatpush1.bf16.xpose.msra.mxu0 0
      %3420 = vmatprep.subr.bf16.mxu0 0
      %3421 = vmatpush1.bf16.xpose.msra.mxu0 0
      %3422 = vmatprep.subr.bf16.mxu0 0
      %3423 = vmatpush1.bf16.xpose.msra.mxu0 0
      %3424 = vmatprep.subr.bf16.mxu0 0
      %3425 = vmatpush1.bf16.xpose.msra.mxu0 0
      %3426 = vmatprep.subr.bf16.mxu0 0
      %3427 = vmatpush1.bf16.xpose.msra.mxu0 0
      %3428 = vmatprep.subr.bf16.mxu0 0
      %3429 = vmatpush1.bf16.xpose.msra.mxu0 0
      %3430 = vmatprep.subr.bf16.mxu0 0
      %3431 = vmatpush1.bf16.xpose.msra.mxu0 0
      %3432 = vmatprep.subr.bf16.mxu0 0
      %3433 = vmatpush1.bf16.xpose.msra.mxu0 0
      %3434 = vmatprep.subr.bf16.mxu0 0
      %3435 = vmatpush1.bf16.xpose.msra.mxu0 0
      %3436 = vmatprep.subr.bf16.mxu0 0
      %3437 = vmatpush1.bf16.xpose.msra.mxu0 0
      %3438 = vmatprep.subr.bf16.mxu0 0
      %3439 = vmatpush1.bf16.xpose.msra.mxu0 0
      %3440 = vmatprep.subr.bf16.mxu0 0
      %3441 = vmatpush1.bf16.xpose.msra.mxu0 0
      %3442 = vmatprep.subr.bf16.mxu0 0
      %3443 = vmatpush1.bf16.xpose.msra.mxu0 0
      %3444 = vmatprep.mubr.bf16.mxu0 0
      %3445 = vmatmul.mubr.bf16.gmra.mrb[0].mxu0 %v3407
      %v3446 = vpop.f32.mrb[0].mxu0
      %v3447 = vadd.f32 0.0, %v3446
      %v3448 = vpop.f32.mrb[0].mxu0
      %v3449 = vpop.f32.mrb[0].mxu0
      %v3450 = vadd.f32 0.0, %v3449
      %v3451 = vpop.f32.mrb[0].mxu0
      %3452 = vmatprep.mubr.bf16.mxu0 0
      %3453 = vmatmul.mubr.bf16.gmra.mrb[0].mxu0 %v3410
      %v3454 = vpop.f32.mrb[0].mxu0
      %v3455 = vadd.f32 0.0, %v3454
      %v3456 = vpop.f32.mrb[0].mxu0
      %v3457 = vpop.f32.mrb[0].mxu0
      %v3458 = vadd.f32 0.0, %v3457
      %v3459 = vpop.f32.mrb[0].mxu0
      %3460 = vdwg.mxu0
      %v3461 = vld [vmem:[%s2 + $0x350] sm:$0xf]
      %v3462 = vld [vmem:[%s2 + $0x358] sm:$0xf]
      %v3463 = vpack.c.bf16 %v3447, %v3447
      %v3464 = vld [vmem:[%s2 + $0x360] sm:$0xf]
      %v3465 = vld [vmem:[%s2 + $0x368] sm:$0xf]
      %v3466 = vpack.c.bf16 %v3450, %v3450
      %v3469 = vunpack.c.l.b16 %v3464
      %v3470 = vunpack.c.l.b16 %v3465
      %v3471 = vpack.c.b16 %v3470, %v3469
      %v3474 = vsel %vm489, %v3466, 0
      %3476 = vmatprep.subr.bf16.mxu0 0
      %3477 = vmatpush1.bf16.msra.mxu0 %v3471
      %3478 = vmatprep.subr.bf16.mxu0 0
      %3479 = vmatpush1.bf16.msra.mxu0 0
      %3480 = vmatprep.subr.bf16.mxu0 0
      %3481 = vmatpush1.bf16.msra.mxu0 0
      %3482 = vmatprep.subr.bf16.mxu0 0
      %3483 = vmatpush1.bf16.msra.mxu0 0
      %3484 = vmatprep.subr.bf16.mxu0 0
      %3485 = vmatpush1.bf16.msra.mxu0 0
      %3486 = vmatprep.subr.bf16.mxu0 0
      %3487 = vmatpush1.bf16.msra.mxu0 0
      %3488 = vmatprep.subr.bf16.mxu0 0
      %3489 = vmatpush1.bf16.msra.mxu0 0
      %3490 = vmatprep.subr.bf16.mxu0 0
      %3491 = vmatpush1.bf16.msra.mxu0 0
      %3492 = vmatprep.subr.bf16.mxu0 0
      %3493 = vmatpush1.bf16.msra.mxu0 0
      %3494 = vmatprep.subr.bf16.mxu0 0
      %3495 = vmatpush1.bf16.msra.mxu0 0
      %3496 = vmatprep.subr.bf16.mxu0 0
      %3497 = vmatpush1.bf16.msra.mxu0 0
      %3498 = vmatprep.subr.bf16.mxu0 0
      %3499 = vmatpush1.bf16.msra.mxu0 0
      %3500 = vmatprep.subr.bf16.mxu0 0
      %3501 = vmatpush1.bf16.msra.mxu0 0
      %3502 = vmatprep.subr.bf16.mxu0 0
      %3503 = vmatpush1.bf16.msra.mxu0 0
      %3504 = vmatprep.subr.bf16.mxu0 0
      %3505 = vmatpush1.bf16.msra.mxu0 0
      %3506 = vmatprep.subr.bf16.mxu0 0
      %3507 = vmatpush1.bf16.msra.mxu0 0
      %3508 = vmatprep.mubr.bf16.mxu0 0
      %3509 = vmatmul.mubr.bf16.gmra.mrb[0].mxu0 %v3474
      %v3510 = vpop.f32.mrb[0].mxu0
      %v3511 = vadd.f32 0.0, %v3510
      %v3512 = vpop.f32.mrb[0].mxu0
      %v3513 = vpop.f32.mrb[0].mxu0
      %v3514 = vpop.f32.mrb[0].mxu0
      %3515 = vdwg.mxu0
      %v3518 = vunpack.c.l.b16 %v3461
      %v3519 = vunpack.c.l.b16 %v3462
      %v3520 = vpack.c.b16 %v3519, %v3518
      %v3523 = vsel %vm489, %v3463, 0
      %3525 = vmatprep.subr.bf16.mxu0 0
      %3526 = vmatpush1.bf16.msra.mxu0 %v3520
      %3527 = vmatprep.subr.bf16.mxu0 0
      %3528 = vmatpush1.bf16.msra.mxu0 0
      %3529 = vmatprep.subr.bf16.mxu0 0
      %3530 = vmatpush1.bf16.msra.mxu0 0
      %3531 = vmatprep.subr.bf16.mxu0 0
      %3532 = vmatpush1.bf16.msra.mxu0 0
      %3533 = vmatprep.subr.bf16.mxu0 0
      %3534 = vmatpush1.bf16.msra.mxu0 0
      %3535 = vmatprep.subr.bf16.mxu0 0
      %3536 = vmatpush1.bf16.msra.mxu0 0
      %3537 = vmatprep.subr.bf16.mxu0 0
      %3538 = vmatpush1.bf16.msra.mxu0 0
      %3539 = vmatprep.subr.bf16.mxu0 0
      %3540 = vmatpush1.bf16.msra.mxu0 0
      %3541 = vmatprep.subr.bf16.mxu0 0
      %3542 = vmatpush1.bf16.msra.mxu0 0
      %3543 = vmatprep.subr.bf16.mxu0 0
      %3544 = vmatpush1.bf16.msra.mxu0 0
      %3545 = vmatprep.subr.bf16.mxu0 0
      %3546 = vmatpush1.bf16.msra.mxu0 0
      %3547 = vmatprep.subr.bf16.mxu0 0
      %3548 = vmatpush1.bf16.msra.mxu0 0
      %3549 = vmatprep.subr.bf16.mxu0 0
      %3550 = vmatpush1.bf16.msra.mxu0 0
      %3551 = vmatprep.subr.bf16.mxu0 0
      %3552 = vmatpush1.bf16.msra.mxu0 0
      %3553 = vmatprep.subr.bf16.mxu0 0
      %3554 = vmatpush1.bf16.msra.mxu0 0
      %3555 = vmatprep.subr.bf16.mxu0 0
      %3556 = vmatpush1.bf16.msra.mxu0 0
      %3557 = vmatprep.mubr.bf16.mxu0 0
      %3558 = vmatmul.mubr.bf16.gmra.mrb[0].mxu0 %v3523
      %v3559 = vpop.f32.mrb[0].mxu0
      %v3560 = vadd.f32 %v3511, %v3559
      %v3561 = vpop.f32.mrb[0].mxu0
      %v3562 = vpop.f32.mrb[0].mxu0
      %v3563 = vpop.f32.mrb[0].mxu0
      %3564 = vdwg.mxu0
      %v3565 = vld [vmem:[%s2 + $0x370] sm:$0xf]
      %v3566 = vld [vmem:[%s2 + $0x378] sm:$0xf]
      %v3567 = vpack.c.bf16 %v3455, %v3455
      %v3570 = vunpack.c.l.b16 %v3565
      %v3571 = vunpack.c.l.b16 %v3566
      %v3572 = vpack.c.b16 %v3571, %v3570
      %v3575 = vsel %vm489, %v3567, 0
      %3577 = vmatprep.subr.bf16.mxu0 0
      %3578 = vmatpush1.bf16.msra.mxu0 %v3572
      %3579 = vmatprep.subr.bf16.mxu0 0
      %3580 = vmatpush1.bf16.msra.mxu0 0
      %3581 = vmatprep.subr.bf16.mxu0 0
      %3582 = vmatpush1.bf16.msra.mxu0 0
      %3583 = vmatprep.subr.bf16.mxu0 0
      %3584 = vmatpush1.bf16.msra.mxu0 0
      %3585 = vmatprep.subr.bf16.mxu0 0
      %3586 = vmatpush1.bf16.msra.mxu0 0
      %3587 = vmatprep.subr.bf16.mxu0 0
      %3588 = vmatpush1.bf16.msra.mxu0 0
      %3589 = vmatprep.subr.bf16.mxu0 0
      %3590 = vmatpush1.bf16.msra.mxu0 0
      %3591 = vmatprep.subr.bf16.mxu0 0
      %3592 = vmatpush1.bf16.msra.mxu0 0
      %3593 = vmatprep.subr.bf16.mxu0 0
      %3594 = vmatpush1.bf16.msra.mxu0 0
      %3595 = vmatprep.subr.bf16.mxu0 0
      %3596 = vmatpush1.bf16.msra.mxu0 0
      %3597 = vmatprep.subr.bf16.mxu0 0
      %3598 = vmatpush1.bf16.msra.mxu0 0
      %3599 = vmatprep.subr.bf16.mxu0 0
      %3600 = vmatpush1.bf16.msra.mxu0 0
      %3601 = vmatprep.subr.bf16.mxu0 0
      %3602 = vmatpush1.bf16.msra.mxu0 0
      %3603 = vmatprep.subr.bf16.mxu0 0
      %3604 = vmatpush1.bf16.msra.mxu0 0
      %3605 = vmatprep.subr.bf16.mxu0 0
      %3606 = vmatpush1.bf16.msra.mxu0 0
      %3607 = vmatprep.subr.bf16.mxu0 0
      %3608 = vmatpush1.bf16.msra.mxu0 0
      %3609 = vmatprep.mubr.bf16.mxu0 0
      %3610 = vmatmul.mubr.bf16.gmra.mrb[0].mxu0 %v3575
      %v3611 = vpop.f32.mrb[0].mxu0
      %v3612 = vadd.f32 0.0, %v3611
      %v3613 = vpop.f32.mrb[0].mxu0
      %v3614 = vpop.f32.mrb[0].mxu0
      %v3615 = vpop.f32.mrb[0].mxu0
      %3616 = vdwg.mxu0
      %v3617 = vadd.f32 %v3560, %v3612
      %v3618 = vld [vmem:[%s2 + $0x380] sm:$0xf]
      %v3619 = vld [vmem:[%s2 + $0x388] sm:$0xf]
      %v3620 = vpack.c.bf16 %v3458, %v3458
      %v3623 = vunpack.c.l.b16 %v3618
      %v3624 = vunpack.c.l.b16 %v3619
      %v3625 = vpack.c.b16 %v3624, %v3623
      %v3628 = vsel %vm489, %v3620, 0
      %3630 = vmatprep.subr.bf16.mxu0 0
      %3631 = vmatpush1.bf16.msra.mxu0 %v3625
      %3632 = vmatprep.subr.bf16.mxu0 0
      %3633 = vmatpush1.bf16.msra.mxu0 0
      %3634 = vmatprep.subr.bf16.mxu0 0
      %3635 = vmatpush1.bf16.msra.mxu0 0
      %3636 = vmatprep.subr.bf16.mxu0 0
      %3637 = vmatpush1.bf16.msra.mxu0 0
      %3638 = vmatprep.subr.bf16.mxu0 0
      %3639 = vmatpush1.bf16.msra.mxu0 0
      %3640 = vmatprep.subr.bf16.mxu0 0
      %3641 = vmatpush1.bf16.msra.mxu0 0
      %3642 = vmatprep.subr.bf16.mxu0 0
      %3643 = vmatpush1.bf16.msra.mxu0 0
      %3644 = vmatprep.subr.bf16.mxu0 0
      %3645 = vmatpush1.bf16.msra.mxu0 0
      %3646 = vmatprep.subr.bf16.mxu0 0
      %3647 = vmatpush1.bf16.msra.mxu0 0
      %3648 = vmatprep.subr.bf16.mxu0 0
      %3649 = vmatpush1.bf16.msra.mxu0 0
      %3650 = vmatprep.subr.bf16.mxu0 0
      %3651 = vmatpush1.bf16.msra.mxu0 0
      %3652 = vmatprep.subr.bf16.mxu0 0
      %3653 = vmatpush1.bf16.msra.mxu0 0
      %3654 = vmatprep.subr.bf16.mxu0 0
      %3655 = vmatpush1.bf16.msra.mxu0 0
      %3656 = vmatprep.subr.bf16.mxu0 0
      %3657 = vmatpush1.bf16.msra.mxu0 0
      %3658 = vmatprep.subr.bf16.mxu0 0
      %3659 = vmatpush1.bf16.msra.mxu0 0
      %3660 = vmatprep.subr.bf16.mxu0 0
      %3661 = vmatpush1.bf16.msra.mxu0 0
      %3662 = vmatprep.mubr.bf16.mxu0 0
      %3663 = vmatmul.mubr.bf16.gmra.mrb[0].mxu0 %v3628
      %v3664 = vpop.f32.mrb[0].mxu0
      %v3665 = vadd.f32 0.0, %v3664
      %v3666 = vpop.f32.mrb[0].mxu0
      %v3667 = vpop.f32.mrb[0].mxu0
      %v3668 = vpop.f32.mrb[0].mxu0
      %3669 = vdwg.mxu0
      %v3670 = vadd.f32 %v3617, %v3665
      %v3671 = vld [vmem:[%s3 + $0xd8] sm:$0xff]
      %3673 = vset.pattern.permute.xlu0 0
      %3674 = vperm.xlu0 %3673, %v3671
      %v3675 = vpop.permute.xlu0 %3674
      %v3677 = vadd.f32 %v3670, %v3675
      %v3678 = vmul.f32 %v3677, %v3677
      %v3679 = vmul.f32 %v3677, %v3678
      %v3680 = vmul.f32 %v3679, 0.044715
      %v3681 = vadd.f32 %v3677, %v3680
      %v3682 = vmul.f32 %v3681, 0.7978846
      %v3683 = vtanh.pop %v3682
      %v3684 = vadd.f32 %v3683, 1.0
      %v3685 = vmul.f32 %v3684, 0.5
      %v3686 = vmul.f32 %v3677, %v3685
      %v3687 = vld [vmem:[%s2 + $0x340] sm:$0xf]
      %v3688 = vld [vmem:[%s2 + $0x348] sm:$0xf]
      %v3689 = vpack.c.bf16 %v3686, %v3686
      %v3692 = vunpack.c.l.b16 %v3687
      %v3693 = vunpack.c.l.b16 %v3688
      %v3694 = vpack.c.b16 %v3693, %v3692
      %vm3695 = vcmask 64512
      %v3697 = vsel %vm3695, %v3694, 0
      %v3700 = vsel %vm1298, %v3689, 0
      %3702 = vmatprep.subr.bf16.mxu0 0
      %3703 = vmatpush1.bf16.msra.mxu0 %v3700
      %3704 = vmatprep.subr.bf16.mxu0 0
      %3705 = vmatpush1.bf16.msra.mxu0 0
      %3706 = vmatprep.subr.bf16.mxu0 0
      %3707 = vmatpush1.bf16.msra.mxu0 0
      %3708 = vmatprep.subr.bf16.mxu0 0
      %3709 = vmatpush1.bf16.msra.mxu0 0
      %3710 = vmatprep.subr.bf16.mxu0 0
      %3711 = vmatpush1.bf16.msra.mxu0 0
      %3712 = vmatprep.subr.bf16.mxu0 0
      %3713 = vmatpush1.bf16.msra.mxu0 0
      %3714 = vmatprep.subr.bf16.mxu0 0
      %3715 = vmatpush1.bf16.msra.mxu0 0
      %3716 = vmatprep.subr.bf16.mxu0 0
      %3717 = vmatpush1.bf16.msra.mxu0 0
      %3718 = vmatprep.subr.bf16.mxu0 0
      %3719 = vmatpush1.bf16.msra.mxu0 0
      %3720 = vmatprep.subr.bf16.mxu0 0
      %3721 = vmatpush1.bf16.msra.mxu0 0
      %3722 = vmatprep.subr.bf16.mxu0 0
      %3723 = vmatpush1.bf16.msra.mxu0 0
      %3724 = vmatprep.subr.bf16.mxu0 0
      %3725 = vmatpush1.bf16.msra.mxu0 0
      %3726 = vmatprep.subr.bf16.mxu0 0
      %3727 = vmatpush1.bf16.msra.mxu0 0
      %3728 = vmatprep.subr.bf16.mxu0 0
      %3729 = vmatpush1.bf16.msra.mxu0 0
      %3730 = vmatprep.subr.bf16.mxu0 0
      %3731 = vmatpush1.bf16.msra.mxu0 0
      %3732 = vmatprep.subr.bf16.mxu0 0
      %3733 = vmatpush1.bf16.msra.mxu0 0
      %3734 = vmatprep.mubr.bf16.mxu0 0
      %3735 = vmatmul.mubr.bf16.gmra.mrb[0].mxu0 %v3697
      %v3736 = vpop.f32.mrb[0].mxu0
      %v3737 = vadd.f32 0.0, %v3736
      %v3738 = vpop.f32.mrb[0].mxu0
      %v3739 = vpop.f32.mrb[0].mxu0
      %v3740 = vadd.f32 0.0, %v3739
      %v3741 = vpop.f32.mrb[0].mxu0
      %3742 = vdwg.mxu0
      %v3743 = vld [vmem:[%s2 + $0x390] sm:$0xff]
      %v3744 = vld [vmem:[%s2 + $0x398] sm:$0xff]
      %v3745 = vld [vmem:[%s2 + $0x3a0] sm:$0xff]
      %v3746 = vld [vmem:[%s2 + $0x3a8] sm:$0xff]
      %v3747 = vld [vmem:[%s2 + $0x3b0] sm:$0xff]
      %v3748 = vld [vmem:[%s2 + $0x3b8] sm:$0xff]
      %v3749 = vld [vmem:[%s2 + $0x3c0] sm:$0xff]
      %v3750 = vld [vmem:[%s2 + $0x3c8] sm:$0xff]
      %v3751 = vpack.c.bf16 %v3737, %v3737
      %v3752 = vld [vmem:[%s2 + $0x3d0] sm:$0xff]
      %v3753 = vld [vmem:[%s2 + $0x3d8] sm:$0xff]
      %v3754 = vld [vmem:[%s2 + $0x3e0] sm:$0xff]
      %v3755 = vld [vmem:[%s2 + $0x3e8] sm:$0xff]
      %v3756 = vld [vmem:[%s2 + $0x3f0] sm:$0xff]
      %v3757 = vld [vmem:[%s2 + $0x3f8] sm:$0xff]
      %v3758 = vld [vmem:[%s2 + $0x400] sm:$0xff]
      %v3759 = vld [vmem:[%s2 + $0x408] sm:$0xff]
      %v3761 = vrot.slane %v3751, 2
      %v3770 = vunpack.c.l.b16 %v3752
      %v3771 = vunpack.c.h.b16 %v3752
      %v3772 = vunpack.c.l.b16 %v3753
      %v3773 = vunpack.c.h.b16 %v3753
      %v3774 = vunpack.c.l.b16 %v3754
      %v3775 = vunpack.c.h.b16 %v3754
      %v3776 = vunpack.c.l.b16 %v3755
      %v3777 = vunpack.c.h.b16 %v3755
      %v3778 = vunpack.c.l.b16 %v3756
      %v3779 = vunpack.c.h.b16 %v3756
      %v3780 = vunpack.c.l.b16 %v3757
      %v3781 = vunpack.c.h.b16 %v3757
      %v3782 = vunpack.c.l.b16 %v3758
      %v3783 = vunpack.c.h.b16 %v3758
      %v3784 = vunpack.c.l.b16 %v3759
      %v3785 = vunpack.c.h.b16 %v3759
      %v3786 = vpack.c.b16 %v3772, %v3770
      %v3787 = vpack.c.b16 %v3773, %v3771
      %v3788 = vpack.c.b16 %v3776, %v3774
      %v3789 = vpack.c.b16 %v3777, %v3775
      %v3790 = vpack.c.b16 %v3780, %v3778
      %v3791 = vpack.c.b16 %v3781, %v3779
      %v3792 = vpack.c.b16 %v3784, %v3782
      %v3793 = vpack.c.b16 %v3785, %v3783
      %v3803 = vsel %vm323, %v3761, 0
      %3805 = vmatprep.subr.bf16.mxu0 %v3787
      %3806 = vmatpush1.bf16.msra.mxu0 %v3786
      %3807 = vmatprep.subr.bf16.mxu0 %v3789
      %3808 = vmatpush1.bf16.msra.mxu0 %v3788
      %3809 = vmatprep.subr.bf16.mxu0 %v3791
      %3810 = vmatpush1.bf16.msra.mxu0 %v3790
      %3811 = vmatprep.subr.bf16.mxu0 %v3793
      %3812 = vmatpush1.bf16.msra.mxu0 %v3792
      %3813 = vmatprep.subr.bf16.mxu0 0
      %3814 = vmatpush1.bf16.msra.mxu0 0
      %3815 = vmatprep.subr.bf16.mxu0 0
      %3816 = vmatpush1.bf16.msra.mxu0 0
      %3817 = vmatprep.subr.bf16.mxu0 0
      %3818 = vmatpush1.bf16.msra.mxu0 0
      %3819 = vmatprep.subr.bf16.mxu0 0
      %3820 = vmatpush1.bf16.msra.mxu0 0
      %3821 = vmatprep.subr.bf16.mxu0 0
      %3822 = vmatpush1.bf16.msra.mxu0 0
      %3823 = vmatprep.subr.bf16.mxu0 0
      %3824 = vmatpush1.bf16.msra.mxu0 0
      %3825 = vmatprep.subr.bf16.mxu0 0
      %3826 = vmatpush1.bf16.msra.mxu0 0
      %3827 = vmatprep.subr.bf16.mxu0 0
      %3828 = vmatpush1.bf16.msra.mxu0 0
      %3829 = vmatprep.subr.bf16.mxu0 0
      %3830 = vmatpush1.bf16.msra.mxu0 0
      %3831 = vmatprep.subr.bf16.mxu0 0
      %3832 = vmatpush1.bf16.msra.mxu0 0
      %3833 = vmatprep.subr.bf16.mxu0 0
      %3834 = vmatpush1.bf16.msra.mxu0 0
      %3835 = vmatprep.subr.bf16.mxu0 0
      %3836 = vmatpush1.bf16.msra.mxu0 0
      %3837 = vmatprep.mubr.bf16.mxu0 0
      %3838 = vmatmul.mubr.bf16.gmra.mrb[0].mxu0 %v3803
      %v3839 = vpop.f32.mrb[0].mxu0
      %v3840 = vadd.f32 0.0, %v3839
      %v3841 = vpop.f32.mrb[0].mxu0
      %v3842 = vadd.f32 0.0, %v3841
      %v3843 = vpop.f32.mrb[0].mxu0
      %v3844 = vpop.f32.mrb[0].mxu0
      %3845 = vdwg.mxu0
      %v3854 = vunpack.c.l.b16 %v3743
      %v3855 = vunpack.c.h.b16 %v3743
      %v3856 = vunpack.c.l.b16 %v3744
      %v3857 = vunpack.c.h.b16 %v3744
      %v3858 = vunpack.c.l.b16 %v3745
      %v3859 = vunpack.c.h.b16 %v3745
      %v3860 = vunpack.c.l.b16 %v3746
      %v3861 = vunpack.c.h.b16 %v3746
      %v3862 = vunpack.c.l.b16 %v3747
      %v3863 = vunpack.c.h.b16 %v3747
      %v3864 = vunpack.c.l.b16 %v3748
      %v3865 = vunpack.c.h.b16 %v3748
      %v3866 = vunpack.c.l.b16 %v3749
      %v3867 = vunpack.c.h.b16 %v3749
      %v3868 = vunpack.c.l.b16 %v3750
      %v3869 = vunpack.c.h.b16 %v3750
      %v3870 = vpack.c.b16 %v3856, %v3854
      %v3871 = vpack.c.b16 %v3857, %v3855
      %v3872 = vpack.c.b16 %v3860, %v3858
      %v3873 = vpack.c.b16 %v3861, %v3859
      %v3874 = vpack.c.b16 %v3864, %v3862
      %v3875 = vpack.c.b16 %v3865, %v3863
      %v3876 = vpack.c.b16 %v3868, %v3866
      %v3877 = vpack.c.b16 %v3869, %v3867
      %v3887 = vsel %vm323, %v3751, 0
      %3889 = vmatprep.subr.bf16.mxu0 %v3871
      %3890 = vmatpush1.bf16.msra.mxu0 %v3870
      %3891 = vmatprep.subr.bf16.mxu0 %v3873
      %3892 = vmatpush1.bf16.msra.mxu0 %v3872
      %3893 = vmatprep.subr.bf16.mxu0 %v3875
      %3894 = vmatpush1.bf16.msra.mxu0 %v3874
      %3895 = vmatprep.subr.bf16.mxu0 %v3877
      %3896 = vmatpush1.bf16.msra.mxu0 %v3876
      %3897 = vmatprep.subr.bf16.mxu0 0
      %3898 = vmatpush1.bf16.msra.mxu0 0
      %3899 = vmatprep.subr.bf16.mxu0 0
      %3900 = vmatpush1.bf16.msra.mxu0 0
      %3901 = vmatprep.subr.bf16.mxu0 0
      %3902 = vmatpush1.bf16.msra.mxu0 0
      %3903 = vmatprep.subr.bf16.mxu0 0
      %3904 = vmatpush1.bf16.msra.mxu0 0
      %3905 = vmatprep.subr.bf16.mxu0 0
      %3906 = vmatpush1.bf16.msra.mxu0 0
      %3907 = vmatprep.subr.bf16.mxu0 0
      %3908 = vmatpush1.bf16.msra.mxu0 0
      %3909 = vmatprep.subr.bf16.mxu0 0
      %3910 = vmatpush1.bf16.msra.mxu0 0
      %3911 = vmatprep.subr.bf16.mxu0 0
      %3912 = vmatpush1.bf16.msra.mxu0 0
      %3913 = vmatprep.subr.bf16.mxu0 0
      %3914 = vmatpush1.bf16.msra.mxu0 0
      %3915 = vmatprep.subr.bf16.mxu0 0
      %3916 = vmatpush1.bf16.msra.mxu0 0
      %3917 = vmatprep.subr.bf16.mxu0 0
      %3918 = vmatpush1.bf16.msra.mxu0 0
      %3919 = vmatprep.subr.bf16.mxu0 0
      %3920 = vmatpush1.bf16.msra.mxu0 0
      %3921 = vmatprep.mubr.bf16.mxu0 0
      %3922 = vmatmul.mubr.bf16.gmra.mrb[0].mxu0 %v3887
      %v3923 = vpop.f32.mrb[0].mxu0
      %v3924 = vadd.f32 %v3840, %v3923
      %v3925 = vpop.f32.mrb[0].mxu0
      %v3926 = vadd.f32 %v3842, %v3925
      %v3927 = vpop.f32.mrb[0].mxu0
      %v3928 = vpop.f32.mrb[0].mxu0
      %3929 = vdwg.mxu0
      %v3930 = vld [vmem:[%s2 + $0x410] sm:$0xff]
      %v3931 = vld [vmem:[%s2 + $0x418] sm:$0xff]
      %v3932 = vld [vmem:[%s2 + $0x420] sm:$0xff]
      %v3933 = vld [vmem:[%s2 + $0x428] sm:$0xff]
      %v3934 = vld [vmem:[%s2 + $0x430] sm:$0xff]
      %v3935 = vld [vmem:[%s2 + $0x438] sm:$0xff]
      %v3936 = vld [vmem:[%s2 + $0x440] sm:$0xff]
      %v3937 = vld [vmem:[%s2 + $0x448] sm:$0xff]
      %v3938 = vpack.c.bf16 %v3740, %v3740
      %v3947 = vunpack.c.l.b16 %v3930
      %v3948 = vunpack.c.h.b16 %v3930
      %v3949 = vunpack.c.l.b16 %v3931
      %v3950 = vunpack.c.h.b16 %v3931
      %v3951 = vunpack.c.l.b16 %v3932
      %v3952 = vunpack.c.h.b16 %v3932
      %v3953 = vunpack.c.l.b16 %v3933
      %v3954 = vunpack.c.h.b16 %v3933
      %v3955 = vunpack.c.l.b16 %v3934
      %v3956 = vunpack.c.h.b16 %v3934
      %v3957 = vunpack.c.l.b16 %v3935
      %v3958 = vunpack.c.h.b16 %v3935
      %v3959 = vunpack.c.l.b16 %v3936
      %v3960 = vunpack.c.h.b16 %v3936
      %v3961 = vunpack.c.l.b16 %v3937
      %v3962 = vunpack.c.h.b16 %v3937
      %v3963 = vpack.c.b16 %v3949, %v3947
      %v3964 = vpack.c.b16 %v3950, %v3948
      %v3965 = vpack.c.b16 %v3953, %v3951
      %v3966 = vpack.c.b16 %v3954, %v3952
      %v3967 = vpack.c.b16 %v3957, %v3955
      %v3968 = vpack.c.b16 %v3958, %v3956
      %v3969 = vpack.c.b16 %v3961, %v3959
      %v3970 = vpack.c.b16 %v3962, %v3960
      %v3980 = vsel %vm323, %v3938, 0
      %3982 = vmatprep.subr.bf16.mxu0 %v3964
      %3983 = vmatpush1.bf16.msra.mxu0 %v3963
      %3984 = vmatprep.subr.bf16.mxu0 %v3966
      %3985 = vmatpush1.bf16.msra.mxu0 %v3965
      %3986 = vmatprep.subr.bf16.mxu0 %v3968
      %3987 = vmatpush1.bf16.msra.mxu0 %v3967
      %3988 = vmatprep.subr.bf16.mxu0 %v3970
      %3989 = vmatpush1.bf16.msra.mxu0 %v3969
      %3990 = vmatprep.subr.bf16.mxu0 0
      %3991 = vmatpush1.bf16.msra.mxu0 0
      %3992 = vmatprep.subr.bf16.mxu0 0
      %3993 = vmatpush1.bf16.msra.mxu0 0
      %3994 = vmatprep.subr.bf16.mxu0 0
      %3995 = vmatpush1.bf16.msra.mxu0 0
      %3996 = vmatprep.subr.bf16.mxu0 0
      %3997 = vmatpush1.bf16.msra.mxu0 0
      %3998 = vmatprep.subr.bf16.mxu0 0
      %3999 = vmatpush1.bf16.msra.mxu0 0
      %4000 = vmatprep.subr.bf16.mxu0 0
      %4001 = vmatpush1.bf16.msra.mxu0 0
      %4002 = vmatprep.subr.bf16.mxu0 0
      %4003 = vmatpush1.bf16.msra.mxu0 0
      %4004 = vmatprep.subr.bf16.mxu0 0
      %4005 = vmatpush1.bf16.msra.mxu0 0
      %4006 = vmatprep.subr.bf16.mxu0 0
      %4007 = vmatpush1.bf16.msra.mxu0 0
      %4008 = vmatprep.subr.bf16.mxu0 0
      %4009 = vmatpush1.bf16.msra.mxu0 0
      %4010 = vmatprep.subr.bf16.mxu0 0
      %4011 = vmatpush1.bf16.msra.mxu0 0
      %4012 = vmatprep.subr.bf16.mxu0 0
      %4013 = vmatpush1.bf16.msra.mxu0 0
      %4014 = vmatprep.mubr.bf16.mxu0 0
      %4015 = vmatmul.mubr.bf16.gmra.mrb[0].mxu0 %v3980
      %v4016 = vpop.f32.mrb[0].mxu0
      %v4017 = vadd.f32 0.0, %v4016
      %v4018 = vpop.f32.mrb[0].mxu0
      %v4019 = vadd.f32 0.0, %v4018
      %v4020 = vpop.f32.mrb[0].mxu0
      %v4021 = vpop.f32.mrb[0].mxu0
      %4022 = vdwg.mxu0
      %v4023 = vadd.f32 %v3924, %v4017
      %v4024 = vadd.f32 %v3926, %v4019
      %v4025 = vld [vmem:[%s2 + $0x450] sm:$0xff]
      %v4026 = vld [vmem:[%s2 + $0x458] sm:$0xff]
      %v4027 = vld [vmem:[%s2 + $0x460] sm:$0xff]
      %v4028 = vld [vmem:[%s2 + $0x468] sm:$0xff]
      %v4029 = vld [vmem:[%s2 + $0x470] sm:$0xff]
      %v4030 = vld [vmem:[%s2 + $0x478] sm:$0xff]
      %v4031 = vld [vmem:[%s2 + $0x480] sm:$0xff]
      %v4032 = vld [vmem:[%s2 + $0x488] sm:$0xff]
      %v4034 = vrot.slane %v3938, 2
      %v4043 = vunpack.c.l.b16 %v4025
      %v4044 = vunpack.c.h.b16 %v4025
      %v4045 = vunpack.c.l.b16 %v4026
      %v4046 = vunpack.c.h.b16 %v4026
      %v4047 = vunpack.c.l.b16 %v4027
      %v4048 = vunpack.c.h.b16 %v4027
      %v4049 = vunpack.c.l.b16 %v4028
      %v4050 = vunpack.c.h.b16 %v4028
      %v4051 = vunpack.c.l.b16 %v4029
      %v4052 = vunpack.c.h.b16 %v4029
      %v4053 = vunpack.c.l.b16 %v4030
      %v4054 = vunpack.c.h.b16 %v4030
      %v4055 = vunpack.c.l.b16 %v4031
      %v4056 = vunpack.c.h.b16 %v4031
      %v4057 = vunpack.c.l.b16 %v4032
      %v4058 = vunpack.c.h.b16 %v4032
      %v4059 = vpack.c.b16 %v4045, %v4043
      %v4060 = vpack.c.b16 %v4046, %v4044
      %v4061 = vpack.c.b16 %v4049, %v4047
      %v4062 = vpack.c.b16 %v4050, %v4048
      %v4063 = vpack.c.b16 %v4053, %v4051
      %v4064 = vpack.c.b16 %v4054, %v4052
      %v4065 = vpack.c.b16 %v4057, %v4055
      %v4066 = vpack.c.b16 %v4058, %v4056
      %v4076 = vsel %vm323, %v4034, 0
      %4078 = vmatprep.subr.bf16.mxu0 %v4060
      %4079 = vmatpush1.bf16.msra.mxu0 %v4059
      %4080 = vmatprep.subr.bf16.mxu0 %v4062
      %4081 = vmatpush1.bf16.msra.mxu0 %v4061
      %4082 = vmatprep.subr.bf16.mxu0 %v4064
      %4083 = vmatpush1.bf16.msra.mxu0 %v4063
      %4084 = vmatprep.subr.bf16.mxu0 %v4066
      %4085 = vmatpush1.bf16.msra.mxu0 %v4065
      %4086 = vmatprep.subr.bf16.mxu0 0
      %4087 = vmatpush1.bf16.msra.mxu0 0
      %4088 = vmatprep.subr.bf16.mxu0 0
      %4089 = vmatpush1.bf16.msra.mxu0 0
      %4090 = vmatprep.subr.bf16.mxu0 0
      %4091 = vmatpush1.bf16.msra.mxu0 0
      %4092 = vmatprep.subr.bf16.mxu0 0
      %4093 = vmatpush1.bf16.msra.mxu0 0
      %4094 = vmatprep.subr.bf16.mxu0 0
      %4095 = vmatpush1.bf16.msra.mxu0 0
      %4096 = vmatprep.subr.bf16.mxu0 0
      %4097 = vmatpush1.bf16.msra.mxu0 0
      %4098 = vmatprep.subr.bf16.mxu0 0
      %4099 = vmatpush1.bf16.msra.mxu0 0
      %4100 = vmatprep.subr.bf16.mxu0 0
      %4101 = vmatpush1.bf16.msra.mxu0 0
      %4102 = vmatprep.subr.bf16.mxu0 0
      %4103 = vmatpush1.bf16.msra.mxu0 0
      %4104 = vmatprep.subr.bf16.mxu0 0
      %4105 = vmatpush1.bf16.msra.mxu0 0
      %4106 = vmatprep.subr.bf16.mxu0 0
      %4107 = vmatpush1.bf16.msra.mxu0 0
      %4108 = vmatprep.subr.bf16.mxu0 0
      %4109 = vmatpush1.bf16.msra.mxu0 0
      %4110 = vmatprep.mubr.bf16.mxu0 0
      %4111 = vmatmul.mubr.bf16.gmra.mrb[0].mxu0 %v4076
      %v4112 = vpop.f32.mrb[0].mxu0
      %v4113 = vadd.f32 0.0, %v4112
      %v4114 = vpop.f32.mrb[0].mxu0
      %v4115 = vadd.f32 0.0, %v4114
      %v4116 = vpop.f32.mrb[0].mxu0
      %v4117 = vpop.f32.mrb[0].mxu0
      %4118 = vdwg.mxu0
      %v4119 = vadd.f32 %v4023, %v4113
      %v4120 = vadd.f32 %v4024, %v4115
      %v4121 = vld [vmem:[%s3 + $0xe0] sm:$0xf]
      %4123 = vset.pattern.permute.xlu0 0
      %4124 = vperm.xlu0 %4123, %v4121
      %v4125 = vpop.permute.xlu0 %4124
      %v4127 = vadd.f32 %v4119, %v4125
      %v4128 = vadd.f32 %v4120, %v4125
      %v4129 = vmul.f32 %v4127, %v4127
      %v4130 = vmul.f32 %v4128, %v4128
      %v4131 = vmul.f32 %v4127, %v4129
      %v4132 = vmul.f32 %v4128, %v4130
      %v4133 = vmul.f32 %v4131, 0.044715
      %v4134 = vmul.f32 %v4132, 0.044715
      %v4135 = vadd.f32 %v4127, %v4133
      %v4136 = vadd.f32 %v4128, %v4134
      %v4137 = vmul.f32 %v4135, 0.7978846
      %v4138 = vmul.f32 %v4136, 0.7978846
      %v4139 = vtanh.pop %v4137
      %v4140 = vtanh.pop %v4138
      %v4141 = vadd.f32 %v4139, 1.0
      %v4142 = vadd.f32 %v4140, 1.0
      %v4143 = vmul.f32 %v4141, 0.5
      %v4144 = vmul.f32 %v4142, 0.5
      %v4145 = vmul.f32 %v4127, %v4143
      %v4146 = vmul.f32 %v4128, %v4144
      %v4147 = vld [vmem:[%s2 + $0x490] sm:$0xf]
      %v4148 = vld [vmem:[%s2 + $0x498] sm:$0xf]
      %v4149 = vld [vmem:[%s2 + $0x4a0] sm:$0xf]
      %v4150 = vld [vmem:[%s2 + $0x4a8] sm:$0xf]
      %v4151 = vpack.c.bf16 %v3391, %v3391
      %v4152 = vld [vmem:[%s3 + $0xe8] sm:$0x1]
      %v4153 = vlaneseq
      %v4154 = vshrl.u32 %v4153, 7
      %v4155 = vsub.s32 0, %v4154
      %v4156 = vrot.slane %v4152, %v4155
      %v4158 = vshrl.u32 %v4151, 16
      %v4160 = vshll.u32 %v4151, 16
      %v4162 = vrot.slane %v4160, 1
      %v4163 = vor.u32 %v4158, %v4162
      %v4168 = vunpack.c.l.b16 %v4147
      %v4169 = vunpack.c.l.b16 %v4148
      %v4170 = vunpack.c.l.b16 %v4149
      %v4171 = vunpack.c.l.b16 %v4150
      %v4172 = vpack.c.b16 %v4169, %v4168
      %v4173 = vpack.c.b16 %v4171, %v4170
      %v4177 = vsel %vm374, %v4163, 0
      %4179 = vmatprep.subr.bf16.mxu0 0
      %4180 = vmatpush1.bf16.msra.mxu0 %v4172
      %4181 = vmatprep.subr.bf16.mxu0 0
      %4182 = vmatpush1.bf16.msra.mxu0 %v4173
      %4183 = vmatprep.subr.bf16.mxu0 0
      %4184 = vmatpush1.bf16.msra.mxu0 0
      %4185 = vmatprep.subr.bf16.mxu0 0
      %4186 = vmatpush1.bf16.msra.mxu0 0
      %4187 = vmatprep.subr.bf16.mxu0 0
      %4188 = vmatpush1.bf16.msra.mxu0 0
      %4189 = vmatprep.subr.bf16.mxu0 0
      %4190 = vmatpush1.bf16.msra.mxu0 0
      %4191 = vmatprep.subr.bf16.mxu0 0
      %4192 = vmatpush1.bf16.msra.mxu0 0
      %4193 = vmatprep.subr.bf16.mxu0 0
      %4194 = vmatpush1.bf16.msra.mxu0 0
      %4195 = vmatprep.subr.bf16.mxu0 0
      %4196 = vmatpush1.bf16.msra.mxu0 0
      %4197 = vmatprep.subr.bf16.mxu0 0
      %4198 = vmatpush1.bf16.msra.mxu0 0
      %4199 = vmatprep.subr.bf16.mxu0 0
      %4200 = vmatpush1.bf16.msra.mxu0 0
      %4201 = vmatprep.subr.bf16.mxu0 0
      %4202 = vmatpush1.bf16.msra.mxu0 0
      %4203 = vmatprep.subr.bf16.mxu0 0
      %4204 = vmatpush1.bf16.msra.mxu0 0
      %4205 = vmatprep.subr.bf16.mxu0 0
      %4206 = vmatpush1.bf16.msra.mxu0 0
      %4207 = vmatprep.subr.bf16.mxu0 0
      %4208 = vmatpush1.bf16.msra.mxu0 0
      %4209 = vmatprep.subr.bf16.mxu0 0
      %4210 = vmatpush1.bf16.msra.mxu0 0
      %4211 = vmatprep.mubr.bf16.mxu0 0
      %4212 = vmatmul.mubr.bf16.gmra.mrb[0].mxu0 %v4177
      %v4213 = vpop.f32.mrb[0].mxu0
      %v4214 = vadd.f32 %v4156, %v4213
      %v4215 = vpop.f32.mrb[0].mxu0
      %v4216 = vpop.f32.mrb[0].mxu0
      %v4217 = vpop.f32.mrb[0].mxu0
      %4218 = vdwg.mxu0
      %v4219 = vmax.f32 %v4214, 0.0
      %v4220 = vld [vmem:[%s2 + $0x4b0] sm:$0xf]
      %v4221 = vld [vmem:[%s2 + $0x4b8] sm:$0xf]
      %v4222 = vld [vmem:[%s2 + $0x4c0] sm:$0xf]
      %v4223 = vld [vmem:[%s2 + $0x4c8] sm:$0xf]
      %v4224 = vpack.c.bf16 %v4219, %v4219
      %v4225 = vld [vmem:[%s3 + $0xf0] sm:$0x1]
      %v4226 = vlaneseq
      %v4227 = vshrl.u32 %v4226, 7
      %v4228 = vsub.s32 0, %v4227
      %v4229 = vrot.slane %v4225, %v4228
      %v4234 = vunpack.c.l.b16 %v4220
      %v4235 = vunpack.c.l.b16 %v4221
      %v4236 = vunpack.c.l.b16 %v4222
      %v4237 = vunpack.c.l.b16 %v4223
      %v4238 = vpack.c.b16 %v4235, %v4234
      %v4239 = vpack.c.b16 %v4237, %v4236
      %v4243 = vsel %vm374, %v4224, 0
      %4245 = vmatprep.subr.bf16.mxu0 0
      %4246 = vmatpush1.bf16.msra.mxu0 %v4238
      %4247 = vmatprep.subr.bf16.mxu0 0
      %4248 = vmatpush1.bf16.msra.mxu0 %v4239
      %4249 = vmatprep.subr.bf16.mxu0 0
      %4250 = vmatpush1.bf16.msra.mxu0 0
      %4251 = vmatprep.subr.bf16.mxu0 0
      %4252 = vmatpush1.bf16.msra.mxu0 0
      %4253 = vmatprep.subr.bf16.mxu0 0
      %4254 = vmatpush1.bf16.msra.mxu0 0
      %4255 = vmatprep.subr.bf16.mxu0 0
      %4256 = vmatpush1.bf16.msra.mxu0 0
      %4257 = vmatprep.subr.bf16.mxu0 0
      %4258 = vmatpush1.bf16.msra.mxu0 0
      %4259 = vmatprep.subr.bf16.mxu0 0
      %4260 = vmatpush1.bf16.msra.mxu0 0
      %4261 = vmatprep.subr.bf16.mxu0 0
      %4262 = vmatpush1.bf16.msra.mxu0 0
      %4263 = vmatprep.subr.bf16.mxu0 0
      %4264 = vmatpush1.bf16.msra.mxu0 0
      %4265 = vmatprep.subr.bf16.mxu0 0
      %4266 = vmatpush1.bf16.msra.mxu0 0
      %4267 = vmatprep.subr.bf16.mxu0 0
      %4268 = vmatpush1.bf16.msra.mxu0 0
      %4269 = vmatprep.subr.bf16.mxu0 0
      %4270 = vmatpush1.bf16.msra.mxu0 0
      %4271 = vmatprep.subr.bf16.mxu0 0
      %4272 = vmatpush1.bf16.msra.mxu0 0
      %4273 = vmatprep.subr.bf16.mxu0 0
      %4274 = vmatpush1.bf16.msra.mxu0 0
      %4275 = vmatprep.subr.bf16.mxu0 0
      %4276 = vmatpush1.bf16.msra.mxu0 0
      %4277 = vmatprep.mubr.bf16.mxu0 0
      %4278 = vmatmul.mubr.bf16.gmra.mrb[0].mxu0 %v4243
      %v4279 = vpop.f32.mrb[0].mxu0
      %v4280 = vadd.f32 %v4229, %v4279
      %v4281 = vpop.f32.mrb[0].mxu0
      %v4282 = vpop.f32.mrb[0].mxu0
      %v4283 = vpop.f32.mrb[0].mxu0
      %4284 = vdwg.mxu0
      %v4285 = vmax.f32 %v4280, 0.0
      %v4286 = vld [vmem:[%s2 + $0x4d0] sm:$0xf]
      %v4287 = vld [vmem:[%s2 + $0x4d8] sm:$0xf]
      %v4288 = vld [vmem:[%s2 + $0x4e0] sm:$0xf]
      %v4289 = vld [vmem:[%s2 + $0x4e8] sm:$0xf]
      %v4290 = vpack.c.bf16 %v4285, %v4285
      %v4291 = vld [vmem:[%s3 + $0xf8] sm:$0x1]
      %v4292 = vlaneseq
      %v4293 = vshrl.u32 %v4292, 7
      %v4294 = vsub.s32 0, %v4293
      %v4295 = vrot.slane %v4291, %v4294
      %v4300 = vunpack.c.l.b16 %v4286
      %v4301 = vunpack.c.l.b16 %v4287
      %v4302 = vunpack.c.l.b16 %v4288
      %v4303 = vunpack.c.l.b16 %v4289
      %v4304 = vpack.c.b16 %v4301, %v4300
      %v4305 = vpack.c.b16 %v4303, %v4302
      %v4309 = vsel %vm374, %v4290, 0
      %4311 = vmatprep.subr.bf16.mxu0 0
      %4312 = vmatpush1.bf16.msra.mxu0 %v4304
      %4313 = vmatprep.subr.bf16.mxu0 0
      %4314 = vmatpush1.bf16.msra.mxu0 %v4305
      %4315 = vmatprep.subr.bf16.mxu0 0
      %4316 = vmatpush1.bf16.msra.mxu0 0
      %4317 = vmatprep.subr.bf16.mxu0 0
      %4318 = vmatpush1.bf16.msra.mxu0 0
      %4319 = vmatprep.subr.bf16.mxu0 0
      %4320 = vmatpush1.bf16.msra.mxu0 0
      %4321 = vmatprep.subr.bf16.mxu0 0
      %4322 = vmatpush1.bf16.msra.mxu0 0
      %4323 = vmatprep.subr.bf16.mxu0 0
      %4324 = vmatpush1.bf16.msra.mxu0 0
      %4325 = vmatprep.subr.bf16.mxu0 0
      %4326 = vmatpush1.bf16.msra.mxu0 0
      %4327 = vmatprep.subr.bf16.mxu0 0
      %4328 = vmatpush1.bf16.msra.mxu0 0
      %4329 = vmatprep.subr.bf16.mxu0 0
      %4330 = vmatpush1.bf16.msra.mxu0 0
      %4331 = vmatprep.subr.bf16.mxu0 0
      %4332 = vmatpush1.bf16.msra.mxu0 0
      %4333 = vmatprep.subr.bf16.mxu0 0
      %4334 = vmatpush1.bf16.msra.mxu0 0
      %4335 = vmatprep.subr.bf16.mxu0 0
      %4336 = vmatpush1.bf16.msra.mxu0 0
      %4337 = vmatprep.subr.bf16.mxu0 0
      %4338 = vmatpush1.bf16.msra.mxu0 0
      %4339 = vmatprep.subr.bf16.mxu0 0
      %4340 = vmatpush1.bf16.msra.mxu0 0
      %4341 = vmatprep.subr.bf16.mxu0 0
      %4342 = vmatpush1.bf16.msra.mxu0 0
      %4343 = vmatprep.mubr.bf16.mxu0 0
      %4344 = vmatmul.mubr.bf16.gmra.mrb[0].mxu0 %v4309
      %v4345 = vpop.f32.mrb[0].mxu0
      %v4346 = vadd.f32 %v4295, %v4345
      %v4347 = vpop.f32.mrb[0].mxu0
      %v4348 = vpop.f32.mrb[0].mxu0
      %v4349 = vpop.f32.mrb[0].mxu0
      %4350 = vdwg.mxu0
      %v4351 = vpack.c.bf16 %v4346, %v4346
      %v4352 = vpack.c.bf16 %v4145, %v4145
      %v4353 = vpack.c.bf16 %v4146, %v4146
      %vm4354 = vcmask 31744
      %v4356 = vsel %vm4354, %v4351, 0
      %vm4358 = vcmask 1041408
      %v4360 = vsel %vm4358, %v4352, 0
      %v4363 = vsel %vm4358, %v4353, 0
      %4365 = vmatprep.subr.bf16.mxu0 %v4363
      %4366 = vmatpush1.bf16.msra.mxu0 %v4360
      %4367 = vmatprep.subr.bf16.mxu0 0
      %4368 = vmatpush1.bf16.msra.mxu0 0
      %4369 = vmatprep.subr.bf16.mxu0 0
      %4370 = vmatpush1.bf16.msra.mxu0 0
      %4371 = vmatprep.subr.bf16.mxu0 0
      %4372 = vmatpush1.bf16.msra.mxu0 0
      %4373 = vmatprep.subr.bf16.mxu0 0
      %4374 = vmatpush1.bf16.msra.mxu0 0
      %4375 = vmatprep.subr.bf16.mxu0 0
      %4376 = vmatpush1.bf16.msra.mxu0 0
      %4377 = vmatprep.subr.bf16.mxu0 0
      %4378 = vmatpush1.bf16.msra.mxu0 0
      %4379 = vmatprep.subr.bf16.mxu0 0
      %4380 = vmatpush1.bf16.msra.mxu0 0
      %4381 = vmatprep.subr.bf16.mxu0 0
      %4382 = vmatpush1.bf16.msra.mxu0 0
      %4383 = vmatprep.subr.bf16.mxu0 0
      %4384 = vmatpush1.bf16.msra.mxu0 0
      %4385 = vmatprep.subr.bf16.mxu0 0
      %4386 = vmatpush1.bf16.msra.mxu0 0
      %4387 = vmatprep.subr.bf16.mxu0 0
      %4388 = vmatpush1.bf16.msra.mxu0 0
      %4389 = vmatprep.subr.bf16.mxu0 0
      %4390 = vmatpush1.bf16.msra.mxu0 0
      %4391 = vmatprep.subr.bf16.mxu0 0
      %4392 = vmatpush1.bf16.msra.mxu0 0
      %4393 = vmatprep.subr.bf16.mxu0 0
      %4394 = vmatpush1.bf16.msra.mxu0 0
      %4395 = vmatprep.subr.bf16.mxu0 0
      %4396 = vmatpush1.bf16.msra.mxu0 0
      %4397 = vmatprep.mubr.bf16.mxu0 0
      %4398 = vmatmul.mubr.bf16.gmra.mrb[0].mxu0 %v4356
      %v4399 = vpop.f32.mrb[0].mxu0
      %v4400 = vadd.f32 0.0, %v4399
      %v4401 = vpop.f32.mrb[0].mxu0
      %v4402 = vadd.f32 0.0, %v4401
      %v4403 = vpop.f32.mrb[0].mxu0
      %v4404 = vpop.f32.mrb[0].mxu0
      %4405 = vdwg.mxu0
      %v4406 = vld [vmem:[%s2 + $0x4f0] sm:$0xf]
      %v4407 = vld [vmem:[%s2 + $0x4f8] sm:$0xf]
      %v4408 = vld [vmem:[%s2 + $0x500] sm:$0xf]
      %v4409 = vld [vmem:[%s2 + $0x508] sm:$0xf]
      %v4410 = vld [vmem:[%s3 + $0x100] sm:$0x1]
      %v4415 = vunpack.c.l.b16 %v4406
      %v4416 = vunpack.c.l.b16 %v4407
      %v4417 = vunpack.c.l.b16 %v4408
      %v4418 = vunpack.c.l.b16 %v4409
      %v4419 = vpack.c.b16 %v4416, %v4415
      %v4420 = vpack.c.b16 %v4418, %v4417
      %v4423 = vsel %vm374, %v4151, 0
      %4425 = vmatprep.subr.bf16.mxu0 0
      %4426 = vmatpush1.bf16.msra.mxu0 %v4419
      %4427 = vmatprep.subr.bf16.mxu0 0
      %4428 = vmatpush1.bf16.msra.mxu0 %v4420
      %4429 = vmatprep.subr.bf16.mxu0 0
      %4430 = vmatpush1.bf16.msra.mxu0 0
      %4431 = vmatprep.subr.bf16.mxu0 0
      %4432 = vmatpush1.bf16.msra.mxu0 0
      %4433 = vmatprep.subr.bf16.mxu0 0
      %4434 = vmatpush1.bf16.msra.mxu0 0
      %4435 = vmatprep.subr.bf16.mxu0 0
      %4436 = vmatpush1.bf16.msra.mxu0 0
      %4437 = vmatprep.subr.bf16.mxu0 0
      %4438 = vmatpush1.bf16.msra.mxu0 0
      %4439 = vmatprep.subr.bf16.mxu0 0
      %4440 = vmatpush1.bf16.msra.mxu0 0
      %4441 = vmatprep.subr.bf16.mxu0 0
      %4442 = vmatpush1.bf16.msra.mxu0 0
      %4443 = vmatprep.subr.bf16.mxu0 0
      %4444 = vmatpush1.bf16.msra.mxu0 0
      %4445 = vmatprep.subr.bf16.mxu0 0
      %4446 = vmatpush1.bf16.msra.mxu0 0
      %4447 = vmatprep.subr.bf16.mxu0 0
      %4448 = vmatpush1.bf16.msra.mxu0 0
      %4449 = vmatprep.subr.bf16.mxu0 0
      %4450 = vmatpush1.bf16.msra.mxu0 0
      %4451 = vmatprep.subr.bf16.mxu0 0
      %4452 = vmatpush1.bf16.msra.mxu0 0
      %4453 = vmatprep.subr.bf16.mxu0 0
      %4454 = vmatpush1.bf16.msra.mxu0 0
      %4455 = vmatprep.subr.bf16.mxu0 0
      %4456 = vmatpush1.bf16.msra.mxu0 0
      %4457 = vmatprep.mubr.bf16.mxu0 0
      %4458 = vmatmul.mubr.bf16.gmra.mrb[0].mxu0 %v4423
      %v4459 = vpop.f32.mrb[0].mxu0
      %v4460 = vadd.f32 %v4410, %v4459
      %v4461 = vpop.f32.mrb[0].mxu0
      %v4462 = vpop.f32.mrb[0].mxu0
      %v4463 = vpop.f32.mrb[0].mxu0
      %4464 = vdwg.mxu0
      %v4465 = vmax.f32 %v4460, 0.0
      %v4466 = vld [vmem:[%s2 + $0x510] sm:$0xff]
      %v4467 = vld [vmem:[%s2 + $0x518] sm:$0xff]
      %v4468 = vld [vmem:[%s2 + $0x520] sm:$0xff]
      %v4469 = vld [vmem:[%s2 + $0x528] sm:$0xff]
      %v4470 = vpack.c.bf16 %v4465, %v4465
      %v4471 = vld [vmem:[%s2 + $0x530] sm:$0x11]
      %v4472 = vunpack.c.l.bf16 %v4471
      %v4473 = vunpack.c.h.bf16 %v4471
      %v4478 = vunpack.c.l.b16 %v4466
      %v4479 = vunpack.c.h.b16 %v4466
      %v4480 = vunpack.c.l.b16 %v4467
      %v4481 = vunpack.c.h.b16 %v4467
      %v4482 = vunpack.c.l.b16 %v4468
      %v4483 = vunpack.c.h.b16 %v4468
      %v4484 = vunpack.c.l.b16 %v4469
      %v4485 = vunpack.c.h.b16 %v4469
      %v4486 = vpack.c.b16 %v4480, %v4478
      %v4487 = vpack.c.b16 %v4481, %v4479
      %v4488 = vpack.c.b16 %v4484, %v4482
      %v4489 = vpack.c.b16 %v4485, %v4483
      %v4495 = vsel %vm374, %v4470, 0
      %4497 = vmatprep.subr.bf16.mxu0 %v4487
      %4498 = vmatpush1.bf16.msra.mxu0 %v4486
      %4499 = vmatprep.subr.bf16.mxu0 %v4489
      %4500 = vmatpush1.bf16.msra.mxu0 %v4488
      %4501 = vmatprep.subr.bf16.mxu0 0
      %4502 = vmatpush1.bf16.msra.mxu0 0
      %4503 = vmatprep.subr.bf16.mxu0 0
      %4504 = vmatpush1.bf16.msra.mxu0 0
      %4505 = vmatprep.subr.bf16.mxu0 0
      %4506 = vmatpush1.bf16.msra.mxu0 0
      %4507 = vmatprep.subr.bf16.mxu0 0
      %4508 = vmatpush1.bf16.msra.mxu0 0
      %4509 = vmatprep.subr.bf16.mxu0 0
      %4510 = vmatpush1.bf16.msra.mxu0 0
      %4511 = vmatprep.subr.bf16.mxu0 0
      %4512 = vmatpush1.bf16.msra.mxu0 0
      %4513 = vmatprep.subr.bf16.mxu0 0
      %4514 = vmatpush1.bf16.msra.mxu0 0
      %4515 = vmatprep.subr.bf16.mxu0 0
      %4516 = vmatpush1.bf16.msra.mxu0 0
      %4517 = vmatprep.subr.bf16.mxu0 0
      %4518 = vmatpush1.bf16.msra.mxu0 0
      %4519 = vmatprep.subr.bf16.mxu0 0
      %4520 = vmatpush1.bf16.msra.mxu0 0
      %4521 = vmatprep.subr.bf16.mxu0 0
      %4522 = vmatpush1.bf16.msra.mxu0 0
      %4523 = vmatprep.subr.bf16.mxu0 0
      %4524 = vmatpush1.bf16.msra.mxu0 0
      %4525 = vmatprep.subr.bf16.mxu0 0
      %4526 = vmatpush1.bf16.msra.mxu0 0
      %4527 = vmatprep.subr.bf16.mxu0 0
      %4528 = vmatpush1.bf16.msra.mxu0 0
      %4529 = vmatprep.mubr.bf16.mxu0 0
      %4530 = vmatmul.mubr.bf16.gmra.mrb[0].mxu0 %v4495
      %v4531 = vpop.f32.mrb[0].mxu0
      %v4532 = vadd.f32 %v4472, %v4531
      %v4533 = vpop.f32.mrb[0].mxu0
      %v4534 = vadd.f32 %v4473, %v4533
      %v4535 = vpop.f32.mrb[0].mxu0
      %v4536 = vpop.f32.mrb[0].mxu0
      %4537 = vdwg.mxu0
      %4538 = vst [vmem:[%s214] sm:$0xf] %v4400
      %4539 = vst [vmem:[%s214 + $0x8] sm:$0xf] %v4402
      %v4542 = vcombine.low %v4532, %v4534
      %v4544 = vunpack.c.l.s4 1966171168
      %v4545 = vunpack.c.0.s8 %v4544
      %v4546 = vlaneseq
      %v4547 = vshrl.u32 %v4546, 7
      %v4548 = vsub.s32 %v4545, %v4547
      %v4549 = vrot.slane %v4542, %v4548
      %v4551 = vunpack.c.l.s4 1966171168
      %v4552 = vunpack.c.0.s8 %v4551
      %v4553 = vlaneseq
      %v4554 = vshrl.u32 %v4553, 7
      %v4555 = vsub.s32 %v4552, %v4554
      %v4556 = vrot.slane %v4549, %v4555
      %v4558 = vlaneseq
      %vm4559 = vcmp.ge.s32.totalorder %v4558, 0
      %vm4560 = vcmp.lt.s32.totalorder %v4558, 256
      %vm4561 = vmand %vm4559, %vm4560
      %s4562 = scalar_lea.vmem %s214, 4
      %4563 = vst.msk [vmem:[%s4562] ss:$8 sm:$0x3] %vm4561, %v4556
      %4564 = vst.msk [vmem:[%s4562] ss:$8 sm:$0x0] %vm4561, %v4556
      %p4565 = scmp.lt.s32.totalorder %s15, 1
      %s4566 = scalar_select %p4565, %s15, 1
      %s4567 = smul.addr %s4566, 2
      %s4568 = smul.addr %s4567, 8
      %s4569 = scalar_lea.vmem %s4, %s4568
      // Predicated region
      $region37: #{sam_with_bbox_forward.1} parent=35 // pred_check
        %p4570 = pneg %p127
      $region38: #{sam_with_bbox_forward.1} parent=35 // pred_check_branch
        %4572 = sbr.rel (%p4570) target = $region40
      $region39: #{sam_with_bbox_forward.1} parent=35 // pred_region
        _
      $region40: #{sam_with_bbox_forward.1} parent=35 // pred_fallthru
        _
    $region36: #{sam_with_bbox_forward.1} parent=5 // pred_fallthru
      _
    %p4573 = scmp.le.s32.totalorder 2, %s10
    // Predicated region
    $region41: #{sam_with_bbox_forward.1} parent=5 // pred_check
      %p4574 = pneg %p4573
    $region42: #{sam_with_bbox_forward.1} parent=5 // pred_check_branch
      %4576 = sbr.rel (%p4574) target = $region44
    $region43: #{sam_with_bbox_forward.1} parent=5 // pred_region
      %s4577 = ssub.s32 %s10, 2
      // Predicated region
      $region45: #{sam_with_bbox_forward.1} parent=43 // pred_check
        %p4578 = pneg %p133
      $region46: #{sam_with_bbox_forward.1} parent=43 // pred_check_branch
        %4580 = sbr.rel (%p4578) target = $region48
      $region47: #{sam_with_bbox_forward.1} parent=43 // pred_region
        %p4581 = scmp.lt.s32.totalorder %s16, 1
        %s4582 = scalar_select %p4581, %s16, 1
        %s4583 = smul.addr %s4582, 2
        %s4584 = smul.addr %s4583, 8
        %s4585 = scalar_lea.vmem %s4, %s4584
      $region48: #{sam_with_bbox_forward.1} parent=43 // pred_fallthru
        _
    $region44: #{sam_with_bbox_forward.1} parent=5 // pred_fallthru
      _
  $region6: #{sam_with_bbox_forward.1} parent=0 // loop_footer
    %s14 = sadd.s32 1, %s10
  $region7: #{sam_with_bbox_forward.1} parent=0 // loop_footer_branch
    %9 = sbr.rel target = $region3
  $region8: #{sam_with_bbox_forward.1} parent=0 // loop_exit
    _

</llo_original>
